<compile_context>
chip_gen: v7x
topology: tpu7x:2x2x1
jax: 0.10.0
libtpu: 0.0.40
codegen_flags: <defaults>
</compile_context>

<pallas_src>
import functools
import math

import jax
import jax.numpy as jnp
from jax.experimental import pallas as pl
from jax.experimental.pallas import tpu as pltpu


# ------------------------------ kernel helpers ------------------------------

def _layernorm(x, g, b, eps=1e-5):
    # f32 statistics (keep VPU math in f32 on all generations).
    mean = jnp.mean(x, axis=-1, keepdims=True)
    cent = x - mean
    var = jnp.mean(cent * cent, axis=-1, keepdims=True)
    return cent * jax.lax.rsqrt(var + eps) * g + b


# ------------------------------- fused kernel -------------------------------

def _fused_transformer_kernel(
        ids_ref, tgt_ref, emb_ref, pos_ref,
        ln1g_ref, ln1b_ref, wqkv_ref, bqkv_ref, wo_ref, bo_ref,
        ln2g_ref, ln2b_ref, w1_ref, b1_ref, w2_ref, b2_ref,
        lnfg_ref, lnfb_ref, outw_ref, outb_ref,
        loss_ref,
        ctx_ref,
        *, qlen, bsz, num_heads, tgt_len, emb_scale):
    f32 = jnp.float32
    bf16 = jnp.bfloat16
    n_token, d_model = emb_ref.shape
    num_layers = wqkv_ref.shape[0]
    H = num_heads
    dh = d_model // H
    n_rows = qlen * bsz                    # activations are batch-major rows
    att_scale = 1.0 / math.sqrt(dh)

    # --- AdaptiveEmbedding (div_val=1): bf16 one-hot @ bf16 table, f32 acc ---
    # TODO(synk): at real vocab sizes replace with a scalar-prefetched
    # pl.Element(1) row-gather (O(N*d) DMA instead of O(N*V*d) FLOPs).
    ids = ids_ref[...]                                         # (n_rows, 1) i32
    vocab_iota = jax.lax.broadcasted_iota(jnp.int32, (n_rows, n_token), 1)
    onehot = (vocab_iota == ids).astype(bf16)
    h = jnp.dot(onehot, emb_ref[...], preferred_element_type=f32) * emb_scale
    # dropout: eval mode -> identity. Positional add broadcast over batch.
    h = (h.reshape(bsz, qlen, d_model) + pos_ref[...]).reshape(n_rows, d_model)

    # --- additive causal mask, shared across layers / heads / batches ---
    qi = jax.lax.broadcasted_iota(jnp.int32, (qlen, qlen), 0)
    ki = jax.lax.broadcasted_iota(jnp.int32, (qlen, qlen), 1)
    causal = jnp.where(ki > qi, f32(-1e30), f32(0.0))
    # TODO(synk): exact TransformerEncoder internals (shared_memory_attention,
    # use_topk, relational memory slots) are not in the provided source; a
    # standard pre-LN causal encoder is used instead.

    # --- pre-LN encoder stack, unrolled with weights resident in VMEM ---
    for l in range(num_layers):
        hn = _layernorm(h, ln1g_ref[l], ln1b_ref[l])
        qkv = jnp.dot(hn.astype(bf16), wqkv_ref[l],
                      preferred_element_type=f32) + bqkv_ref[l]  # (n_rows, 3d)
        qkv_bf = qkv.astype(bf16)                                # hoisted cast

        for b in range(bsz):
            rows = qkv_bf[b * qlen:(b + 1) * qlen, :]            # (qlen, 3d)
            q = rows[:, :d_model].reshape(qlen, H, dh)
            k = rows[:, d_model:2 * d_model].reshape(qlen, H, dh)
            v = rows[:, 2 * d_model:].reshape(qlen, H, dh)
            # Head-batched q @ k^T (no explicit transpose, no per-head slices).
            s = jnp.einsum('qhd,khd->hqk', q, k,
                           preferred_element_type=f32) * att_scale
            s = s + causal                                       # (H, q, k)
            m = jnp.max(s, axis=-1, keepdims=True)
            p = jnp.exp(s - m)
            denom = jnp.sum(p, axis=-1, keepdims=True)
            p = p * pl.reciprocal(denom, approx=True)            # EUP divide
            ctx_b = jnp.einsum('hqk,khd->qhd', p.astype(bf16), v,
                               preferred_element_type=f32)       # (q, H, dh)
            # Merged-head layout written straight into VMEM scratch
            # (aligned 8-row slice, full lane width; no concatenates).
            ctx_ref[b * qlen:(b + 1) * qlen, :] = ctx_b.reshape(qlen, d_model)

        h = h + jnp.dot(ctx_ref[...].astype(bf16), wo_ref[l],
                        preferred_element_type=f32) + bo_ref[l]

        hn = _layernorm(h, ln2g_ref[l], ln2b_ref[l])
        ff = jnp.dot(hn.astype(bf16), w1_ref[l],
                     preferred_element_type=f32) + b1_ref[l]
        ff = jnp.maximum(ff, 0.0)
        h = h + jnp.dot(ff.astype(bf16), w2_ref[l],
                        preferred_element_type=f32) + b2_ref[l]

    h = _layernorm(h, lnfg_ref[...], lnfb_ref[...])

    # --- last tgt_len positions of each batch (batch-major layout) ---
    if tgt_len == qlen:
        pred = h
    else:
        pred = jnp.concatenate(
            [h[b * qlen + (qlen - tgt_len):(b + 1) * qlen, :]
             for b in range(bsz)], axis=0)

    # --- ProjectedAdaptiveLogSoftmax (div_val=1, no cutoffs): per-token NLL --
    # TODO(synk): at large vocab this must stream vocab tiles on a grid axis
    # with an online logsumexp (m, l) accumulator instead of a whole-V block.
    logits = jnp.dot(pred.astype(bf16), outw_ref[...],
                     preferred_element_type=f32) + outb_ref[...]
    m = jnp.max(logits, axis=-1, keepdims=True)
    lse = m + jnp.log(jnp.sum(jnp.exp(logits - m), axis=-1, keepdims=True))
    tcol = jax.lax.broadcasted_iota(jnp.int32, logits.shape, 1)
    tgt_logit = jnp.sum(logits * (tcol == tgt_ref[...]).astype(f32),
                        axis=-1, keepdims=True)
    # Lane-dense output: (bsz, tgt_len); wrapper transposes to (tgt_len, bsz).
    loss_ref[...] = (lse - tgt_logit).reshape(bsz, tgt_len)


# ------------------------------ parameters ---------------------------------

def init_params(key, *, n_token, d_model, num_layers, num_heads, ffn_dim):
    del num_heads  # head split is a view of the same weights
    ks = jax.random.split(key, 6)
    std = 0.02
    L = num_layers
    return {
        "emb": jax.random.normal(ks[0], (n_token, d_model), jnp.float32) * std,
        "out_w": jax.random.normal(ks[1], (d_model, n_token), jnp.float32) * std,
        "out_b": jnp.zeros((n_token,), jnp.float32),
        "lnf_g": jnp.ones((d_model,), jnp.float32),
        "lnf_b": jnp.zeros((d_model,), jnp.float32),
        "ln1_g": jnp.ones((L, d_model), jnp.float32),
        "ln1_b": jnp.zeros((L, d_model), jnp.float32),
        "wqkv": jax.random.normal(ks[2], (L, d_model, 3 * d_model), jnp.float32) * std,
        "bqkv": jnp.zeros((L, 3 * d_model), jnp.float32),
        "wo": jax.random.normal(ks[3], (L, d_model, d_model), jnp.float32) * std,
        "bo": jnp.zeros((L, d_model), jnp.float32),
        "ln2_g": jnp.ones((L, d_model), jnp.float32),
        "ln2_b": jnp.zeros((L, d_model), jnp.float32),
        "w1": jax.random.normal(ks[4], (L, d_model, ffn_dim), jnp.float32) * std,
        "b1": jnp.zeros((L, ffn_dim), jnp.float32),
        "w2": jax.random.normal(ks[5], (L, ffn_dim, d_model), jnp.float32) * std,
        "b2": jnp.zeros((L, d_model), jnp.float32),
    }


# ------------------------------- forward -----------------------------------

def _full_spec(shape):
    ndim = len(shape)
    return pl.BlockSpec(tuple(shape), lambda i, _n=ndim: (0,) * _n)


def transformer_forward(params, data, target, *, num_heads, clamp_len=-1):
    qlen, bsz = data.shape
    tgt_len = target.shape[0]
    n_token, d_model = params["emb"].shape
    L = params["wqkv"].shape[0]
    ffn_dim = params["w1"].shape[-1]
    N = qlen * bsz
    Nt = tgt_len * bsz
    bf16 = jnp.bfloat16

    # Batch-major flatten of the tiny integer id tensors (XLA glue).
    ids_bm = data.T.reshape(N, 1).astype(jnp.int32)       # row = b*qlen + q
    tgt_bm = target.T.reshape(Nt, 1).astype(jnp.int32)    # row = b*tgt_len + t

    # Sinusoidal positional embedding (descending positions), (qlen, d) once;
    # the per-batch broadcast happens inside the kernel (bsz× less DMA).
    pos_seq = jnp.arange(qlen - 1, -1, -1.0, dtype=jnp.float32)
    if clamp_len > 0:
        pos_seq = jnp.minimum(pos_seq, float(clamp_len))
    inv_freq = 1.0 / (10000.0 ** (jnp.arange(0.0, d_model, 2.0) / d_model))
    sinusoid = jnp.outer(pos_seq, inv_freq)
    pos_emb = jnp.concatenate([jnp.sin(sinusoid), jnp.cos(sinusoid)],
                              axis=-1).astype(jnp.float32)      # (qlen, d)

    # bf16 copies of the big matmul weights + embedding table (half the
    # HBM->VMEM DMA bytes, MXU-native inputs); layernorm params / biases f32.
    args = [
        ids_bm, tgt_bm,
        params["emb"].astype(bf16),
        pos_emb,
        params["ln1_g"].reshape(L, 1, d_model),
        params["ln1_b"].reshape(L, 1, d_model),
        params["wqkv"].astype(bf16),
        params["bqkv"].reshape(L, 1, 3 * d_model),
        params["wo"].astype(bf16),
        params["bo"].reshape(L, 1, d_model),
        params["ln2_g"].reshape(L, 1, d_model),
        params["ln2_b"].reshape(L, 1, d_model),
        params["w1"].astype(bf16),
        params["b1"].reshape(L, 1, ffn_dim),
        params["w2"].astype(bf16),
        params["b2"].reshape(L, 1, d_model),
        params["lnf_g"].reshape(1, d_model),
        params["lnf_b"].reshape(1, d_model),
        params["out_w"].astype(bf16),
        params["out_b"].reshape(1, n_token),
    ]

    kernel = functools.partial(
        _fused_transformer_kernel, qlen=qlen, bsz=bsz, num_heads=num_heads,
        tgt_len=tgt_len, emb_scale=float(math.sqrt(d_model)))

    loss_bm = pl.pallas_call(
        kernel,
        grid=(1,),
        out_shape=jax.ShapeDtypeStruct((bsz, tgt_len), jnp.float32),
        in_specs=[_full_spec(a.shape) for a in args],
        out_specs=pl.BlockSpec((bsz, tgt_len), lambda i: (0, 0)),
        scratch_shapes=[pltpu.VMEM((N, d_model), jnp.float32)],
        compiler_params=pltpu.CompilerParams(
            dimension_semantics=("arbitrary",)),
    )(*args)

    # Kernel output is batch-major (b, t); reference returns (tgt_len, bsz).
    return loss_bm.T


# --------------------------------- main -------------------------------------

if __name__ == "__main__":
    QLEN, BSZ = 8, 2
    NTOKENS = 64
    D_MODEL = 32        # d_embed == d_model == d_proj (div_val=1 path)
    NUM_LAYERS = 2
    NUM_HEADS = 4
    FFN_DIM = 64

    key = jax.random.PRNGKey(0)
    k_data, k_tgt, k_params = jax.random.split(key, 3)
    data = jax.random.randint(k_data, (QLEN, BSZ), 0, NTOKENS, dtype=jnp.int32)
    target = jax.random.randint(k_tgt, (QLEN, BSZ), 0, NTOKENS, dtype=jnp.int32)
    params = init_params(k_params, n_token=NTOKENS, d_model=D_MODEL,
                         num_layers=NUM_LAYERS, num_heads=NUM_HEADS,
                         ffn_dim=FFN_DIM)

    fwd = jax.jit(functools.partial(transformer_forward, num_heads=NUM_HEADS))
    loss = jax.block_until_ready(fwd(params, data, target))
    assert loss.shape == (QLEN, BSZ), loss.shape
    assert bool(jnp.all(jnp.isfinite(loss)))
    print("KERNEL_OK")
</pallas_src>

<mosaic_0001>
module attributes {stable_mosaic.version = 11 : i64} {
  func.func @_fused_transformer_kernel(%arg0: i32, %arg1: memref<16x1xi32, #tpu.memory_space<vmem>>, %arg2: memref<16x1xi32, #tpu.memory_space<vmem>>, %arg3: memref<64x32xbf16, #tpu.memory_space<vmem>>, %arg4: memref<8x32xf32, #tpu.memory_space<vmem>>, %arg5: memref<2x1x32xf32, #tpu.memory_space<vmem>>, %arg6: memref<2x1x32xf32, #tpu.memory_space<vmem>>, %arg7: memref<2x32x96xbf16, #tpu.memory_space<vmem>>, %arg8: memref<2x1x96xf32, #tpu.memory_space<vmem>>, %arg9: memref<2x32x32xbf16, #tpu.memory_space<vmem>>, %arg10: memref<2x1x32xf32, #tpu.memory_space<vmem>>, %arg11: memref<2x1x32xf32, #tpu.memory_space<vmem>>, %arg12: memref<2x1x32xf32, #tpu.memory_space<vmem>>, %arg13: memref<2x32x64xbf16, #tpu.memory_space<vmem>>, %arg14: memref<2x1x64xf32, #tpu.memory_space<vmem>>, %arg15: memref<2x64x32xbf16, #tpu.memory_space<vmem>>, %arg16: memref<2x1x32xf32, #tpu.memory_space<vmem>>, %arg17: memref<1x32xf32, #tpu.memory_space<vmem>>, %arg18: memref<1x32xf32, #tpu.memory_space<vmem>>, %arg19: memref<32x64xbf16, #tpu.memory_space<vmem>>, %arg20: memref<1x64xf32, #tpu.memory_space<vmem>>, %arg21: memref<2x8xf32, #tpu.memory_space<vmem>>, %arg22: memref<16x32xf32, #tpu.memory_space<vmem>>) attributes {dimension_semantics = [#tpu.dimension_semantics<arbitrary>], iteration_bounds = array<i64: 1>, scalar_prefetch = 0 : i64, scratch_operands = 1 : i64, tpu.core_type = #tpu.core_type<tc>, window_params = [{pipeline_mode = #tpu.pipeline_mode<synchronous>, transform_indices = @transform_0, window_bounds = array<i64: 16, 1>}, {pipeline_mode = #tpu.pipeline_mode<synchronous>, transform_indices = @transform_1, window_bounds = array<i64: 16, 1>}, {pipeline_mode = #tpu.pipeline_mode<synchronous>, transform_indices = @transform_2, window_bounds = array<i64: 64, 32>}, {pipeline_mode = #tpu.pipeline_mode<synchronous>, transform_indices = @transform_3, window_bounds = array<i64: 8, 32>}, {pipeline_mode = #tpu.pipeline_mode<synchronous>, transform_indices = @transform_4, window_bounds = array<i64: 2, 1, 32>}, {pipeline_mode = #tpu.pipeline_mode<synchronous>, transform_indices = @transform_5, window_bounds = array<i64: 2, 1, 32>}, {pipeline_mode = #tpu.pipeline_mode<synchronous>, transform_indices = @transform_6, window_bounds = array<i64: 2, 32, 96>}, {pipeline_mode = #tpu.pipeline_mode<synchronous>, transform_indices = @transform_7, window_bounds = array<i64: 2, 1, 96>}, {pipeline_mode = #tpu.pipeline_mode<synchronous>, transform_indices = @transform_8, window_bounds = array<i64: 2, 32, 32>}, {pipeline_mode = #tpu.pipeline_mode<synchronous>, transform_indices = @transform_9, window_bounds = array<i64: 2, 1, 32>}, {pipeline_mode = #tpu.pipeline_mode<synchronous>, transform_indices = @transform_10, window_bounds = array<i64: 2, 1, 32>}, {pipeline_mode = #tpu.pipeline_mode<synchronous>, transform_indices = @transform_11, window_bounds = array<i64: 2, 1, 32>}, {pipeline_mode = #tpu.pipeline_mode<synchronous>, transform_indices = @transform_12, window_bounds = array<i64: 2, 32, 64>}, {pipeline_mode = #tpu.pipeline_mode<synchronous>, transform_indices = @transform_13, window_bounds = array<i64: 2, 1, 64>}, {pipeline_mode = #tpu.pipeline_mode<synchronous>, transform_indices = @transform_14, window_bounds = array<i64: 2, 64, 32>}, {pipeline_mode = #tpu.pipeline_mode<synchronous>, transform_indices = @transform_15, window_bounds = array<i64: 2, 1, 32>}, {pipeline_mode = #tpu.pipeline_mode<synchronous>, transform_indices = @transform_16, window_bounds = array<i64: 1, 32>}, {pipeline_mode = #tpu.pipeline_mode<synchronous>, transform_indices = @transform_17, window_bounds = array<i64: 1, 32>}, {pipeline_mode = #tpu.pipeline_mode<synchronous>, transform_indices = @transform_18, window_bounds = array<i64: 32, 64>}, {pipeline_mode = #tpu.pipeline_mode<synchronous>, transform_indices = @transform_19, window_bounds = array<i64: 1, 64>}, {pipeline_mode = #tpu.pipeline_mode<synchronous>, transform_indices = @transform_20, window_bounds = array<i64: 2, 8>}]} {
    %c0 = arith.constant 0 : index
    %c0_0 = arith.constant 0 : index
    %0 = vector.load %arg1[%c0, %c0_0] : memref<16x1xi32, #tpu.memory_space<vmem>>, vector<16x1xi32>
    %1 = tpu.iota {dimensions = array<i32: 1>} : vector<16x64xi32>
    %2 = vector.broadcast %0 : vector<16x1xi32> to vector<16x64xi32>
    %3 = arith.cmpi eq, %1, %2 : vector<16x64xi32>
    %4 = arith.extui %3 : vector<16x64xi1> to vector<16x64xi32>
    %5 = arith.sitofp %4 : vector<16x64xi32> to vector<16x64xf32>
    %6 = arith.truncf %5 : vector<16x64xf32> to vector<16x64xbf16>
    %c0_1 = arith.constant 0 : index
    %c0_2 = arith.constant 0 : index
    %7 = vector.load %arg3[%c0_1, %c0_2] : memref<64x32xbf16, #tpu.memory_space<vmem>>, vector<64x32xbf16>
    %cst = arith.constant dense<0.000000e+00> : vector<16x32xf32>
    %8 = tpu.matmul %6, %7, %cst {dimension_numbers = #tpu.dot_dimension_numbers<[1], [0], [0], [1], [0, 0, 1, 1], [], []>} : vector<16x64xbf16>, vector<64x32xbf16>, vector<16x32xf32> -> vector<16x32xf32>
    %cst_3 = arith.constant 5.65685415 : f32
    %9 = vector.broadcast %cst_3 : f32 to vector<16x32xf32>
    %10 = arith.mulf %8, %9 : vector<16x32xf32>
    %11 = vector.shape_cast %10 : vector<16x32xf32> to vector<2x8x32xf32>
    %c0_4 = arith.constant 0 : index
    %c0_5 = arith.constant 0 : index
    %12 = vector.load %arg4[%c0_4, %c0_5] : memref<8x32xf32, #tpu.memory_space<vmem>>, vector<8x32xf32>
    %13 = vector.shape_cast %12 : vector<8x32xf32> to vector<1x8x32xf32>
    %14 = vector.broadcast %13 : vector<1x8x32xf32> to vector<2x8x32xf32>
    %15 = arith.addf %11, %14 : vector<2x8x32xf32>
    %16 = vector.shape_cast %15 : vector<2x8x32xf32> to vector<16x32xf32>
    %17 = tpu.iota {dimensions = array<i32: 0>} : vector<8x8xi32>
    %18 = tpu.iota {dimensions = array<i32: 1>} : vector<8x8xi32>
    %19 = arith.cmpi sgt, %18, %17 : vector<8x8xi32>
    %cst_6 = arith.constant -1.000000e+30 : f32
    %cst_7 = arith.constant 0.000000e+00 : f32
    %20 = vector.broadcast %cst_6 : f32 to vector<8x8xf32>
    %21 = vector.broadcast %cst_7 : f32 to vector<8x8xf32>
    %22 = arith.select %19, %20, %21 : vector<8x8xi1>, vector<8x8xf32>
    %c0_8 = arith.constant 0 : index
    %c0_9 = arith.constant 0 : index
    %c0_10 = arith.constant 0 : index
    %23 = vector.load %arg5[%c0_8, %c0_9, %c0_10] : memref<2x1x32xf32, #tpu.memory_space<vmem>>, vector<1x1x32xf32>
    %24 = vector.shape_cast %23 : vector<1x1x32xf32> to vector<1x32xf32>
    %c0_11 = arith.constant 0 : index
    %c0_12 = arith.constant 0 : index
    %c0_13 = arith.constant 0 : index
    %25 = vector.load %arg6[%c0_11, %c0_12, %c0_13] : memref<2x1x32xf32, #tpu.memory_space<vmem>>, vector<1x1x32xf32>
    %26 = vector.shape_cast %25 : vector<1x1x32xf32> to vector<1x32xf32>
    %cst_14 = arith.constant dense<0.000000e+00> : vector<16xf32>
    %27 = vector.multi_reduction <add>, %16, %cst_14 [1] : vector<16x32xf32> to vector<16xf32>
    %28 = vector.shape_cast %27 : vector<16xf32> to vector<16x1xf32>
    %cst_15 = arith.constant 3.200000e+01 : f32
    %29 = vector.broadcast %cst_15 : f32 to vector<16x1xf32>
    %30 = arith.divf %28, %29 : vector<16x1xf32>
    %31 = vector.broadcast %30 : vector<16x1xf32> to vector<16x32xf32>
    %32 = arith.subf %16, %31 : vector<16x32xf32>
    %33 = arith.mulf %32, %32 : vector<16x32xf32>
    %cst_16 = arith.constant dense<0.000000e+00> : vector<16xf32>
    %34 = vector.multi_reduction <add>, %33, %cst_16 [1] : vector<16x32xf32> to vector<16xf32>
    %35 = vector.shape_cast %34 : vector<16xf32> to vector<16x1xf32>
    %cst_17 = arith.constant 3.200000e+01 : f32
    %36 = vector.broadcast %cst_17 : f32 to vector<16x1xf32>
    %37 = arith.divf %35, %36 : vector<16x1xf32>
    %cst_18 = arith.constant 9.99999974E-6 : f32
    %38 = vector.broadcast %cst_18 : f32 to vector<16x1xf32>
    %39 = arith.addf %37, %38 : vector<16x1xf32>
    %40 = math.rsqrt %39 : vector<16x1xf32>
    %41 = vector.broadcast %40 : vector<16x1xf32> to vector<16x32xf32>
    %42 = arith.mulf %32, %41 : vector<16x32xf32>
    %43 = vector.broadcast %24 : vector<1x32xf32> to vector<16x32xf32>
    %44 = arith.mulf %42, %43 : vector<16x32xf32>
    %45 = vector.broadcast %26 : vector<1x32xf32> to vector<16x32xf32>
    %46 = arith.addf %44, %45 : vector<16x32xf32>
    %47 = arith.truncf %46 : vector<16x32xf32> to vector<16x32xbf16>
    %c0_19 = arith.constant 0 : index
    %c0_20 = arith.constant 0 : index
    %c0_21 = arith.constant 0 : index
    %48 = vector.load %arg7[%c0_19, %c0_20, %c0_21] : memref<2x32x96xbf16, #tpu.memory_space<vmem>>, vector<1x32x96xbf16>
    %49 = vector.shape_cast %48 : vector<1x32x96xbf16> to vector<32x96xbf16>
    %cst_22 = arith.constant dense<0.000000e+00> : vector<16x96xf32>
    %50 = tpu.matmul %47, %49, %cst_22 {dimension_numbers = #tpu.dot_dimension_numbers<[1], [0], [0], [1], [0, 0, 1, 1], [], []>} : vector<16x32xbf16>, vector<32x96xbf16>, vector<16x96xf32> -> vector<16x96xf32>
    %c0_23 = arith.constant 0 : index
    %c0_24 = arith.constant 0 : index
    %c0_25 = arith.constant 0 : index
    %51 = vector.load %arg8[%c0_23, %c0_24, %c0_25] : memref<2x1x96xf32, #tpu.memory_space<vmem>>, vector<1x1x96xf32>
    %52 = vector.shape_cast %51 : vector<1x1x96xf32> to vector<1x96xf32>
    %53 = vector.broadcast %52 : vector<1x96xf32> to vector<16x96xf32>
    %54 = arith.addf %50, %53 : vector<16x96xf32>
    %55 = arith.truncf %54 : vector<16x96xf32> to vector<16x96xbf16>
    %56 = vector.extract_strided_slice %55 {offsets = [0, 0], sizes = [8, 96], strides = [1, 1]} : vector<16x96xbf16> to vector<8x96xbf16>
    %57 = vector.extract_strided_slice %56 {offsets = [0, 0], sizes = [8, 32], strides = [1, 1]} : vector<8x96xbf16> to vector<8x32xbf16>
    %58 = vector.shape_cast %57 : vector<8x32xbf16> to vector<8x4x8xbf16>
    %59 = vector.extract_strided_slice %56 {offsets = [0, 32], sizes = [8, 32], strides = [1, 1]} : vector<8x96xbf16> to vector<8x32xbf16>
    %60 = vector.shape_cast %59 : vector<8x32xbf16> to vector<8x4x8xbf16>
    %61 = vector.extract_strided_slice %56 {offsets = [0, 64], sizes = [8, 32], strides = [1, 1]} : vector<8x96xbf16> to vector<8x32xbf16>
    %62 = vector.shape_cast %61 : vector<8x32xbf16> to vector<8x4x8xbf16>
    "tpu.trace_start"() <{level = 10 : i32, message = "qhd,khd->hqk"}> : () -> ()
    %cst_26 = arith.constant dense<0.000000e+00> : vector<4x8x8xf32>
    %63 = tpu.matmul %58, %60, %cst_26 {dimension_numbers = #tpu.dot_dimension_numbers<[2], [2], [0], [0], [0, 1, 0, 0, 1, 0], [1], [1]>} : vector<8x4x8xbf16>, vector<8x4x8xbf16>, vector<4x8x8xf32> -> vector<4x8x8xf32>
    "tpu.trace_stop"() : () -> ()
    %cst_27 = arith.constant 0.353553385 : f32
    %64 = vector.broadcast %cst_27 : f32 to vector<4x8x8xf32>
    %65 = arith.mulf %63, %64 : vector<4x8x8xf32>
    %66 = vector.shape_cast %22 : vector<8x8xf32> to vector<1x8x8xf32>
    %67 = vector.broadcast %66 : vector<1x8x8xf32> to vector<4x8x8xf32>
    %68 = arith.addf %65, %67 : vector<4x8x8xf32>
    %cst_28 = arith.constant dense<0xFF800000> : vector<4x8xf32>
    %69 = vector.multi_reduction <maximumf>, %68, %cst_28 [2] : vector<4x8x8xf32> to vector<4x8xf32>
    %70 = vector.shape_cast %69 : vector<4x8xf32> to vector<4x8x1xf32>
    %71 = vector.broadcast %70 : vector<4x8x1xf32> to vector<4x8x8xf32>
    %72 = arith.subf %68, %71 : vector<4x8x8xf32>
    %73 = math.exp %72 : vector<4x8x8xf32>
    %cst_29 = arith.constant dense<0.000000e+00> : vector<4x8xf32>
    %74 = vector.multi_reduction <add>, %73, %cst_29 [2] : vector<4x8x8xf32> to vector<4x8xf32>
    %75 = vector.shape_cast %74 : vector<4x8xf32> to vector<4x8x1xf32>
    %76 = tpu.reciprocal %75 {approx = true} : vector<4x8x1xf32> -> vector<4x8x1xf32>
    %77 = vector.broadcast %76 : vector<4x8x1xf32> to vector<4x8x8xf32>
    %78 = arith.mulf %73, %77 : vector<4x8x8xf32>
    %79 = arith.truncf %78 : vector<4x8x8xf32> to vector<4x8x8xbf16>
    "tpu.trace_start"() <{level = 10 : i32, message = "hqk,khd->qhd"}> : () -> ()
    %cst_30 = arith.constant dense<0.000000e+00> : vector<4x8x8xf32>
    %80 = tpu.matmul %62, %79, %cst_30 {dimension_numbers = #tpu.dot_dimension_numbers<[0], [2], [2], [1], [0, 1, 0, 2, 1, 1], [1], [0]>} : vector<8x4x8xbf16>, vector<4x8x8xbf16>, vector<4x8x8xf32> -> vector<4x8x8xf32>
    %81 = tpu.transpose %80, [2, 0, 1] : vector<4x8x8xf32> -> vector<8x4x8xf32>
    "tpu.trace_stop"() : () -> ()
    %82 = vector.shape_cast %81 : vector<8x4x8xf32> to vector<8x32xf32>
    %c0_31 = arith.constant 0 : index
    %c0_32 = arith.constant 0 : index
    %83 = vector.load %arg22[%c0_31, %c0_32] : memref<16x32xf32, #tpu.memory_space<vmem>>, vector<8x32xf32>
    tpu.vector_store %arg22[%c0_31, %c0_32], %82 {strides = array<i32>} : memref<16x32xf32, #tpu.memory_space<vmem>>, vector<8x32xf32>,
    %84 = vector.extract_strided_slice %55 {offsets = [8, 0], sizes = [8, 96], strides = [1, 1]} : vector<16x96xbf16> to vector<8x96xbf16>
    %85 = vector.extract_strided_slice %84 {offsets = [0, 0], sizes = [8, 32], strides = [1, 1]} : vector<8x96xbf16> to vector<8x32xbf16>
    %86 = vector.shape_cast %85 : vector<8x32xbf16> to vector<8x4x8xbf16>
    %87 = vector.extract_strided_slice %84 {offsets = [0, 32], sizes = [8, 32], strides = [1, 1]} : vector<8x96xbf16> to vector<8x32xbf16>
    %88 = vector.shape_cast %87 : vector<8x32xbf16> to vector<8x4x8xbf16>
    %89 = vector.extract_strided_slice %84 {offsets = [0, 64], sizes = [8, 32], strides = [1, 1]} : vector<8x96xbf16> to vector<8x32xbf16>
    %90 = vector.shape_cast %89 : vector<8x32xbf16> to vector<8x4x8xbf16>
    "tpu.trace_start"() <{level = 10 : i32, message = "qhd,khd->hqk"}> : () -> ()
    %cst_33 = arith.constant dense<0.000000e+00> : vector<4x8x8xf32>
    %91 = tpu.matmul %86, %88, %cst_33 {dimension_numbers = #tpu.dot_dimension_numbers<[2], [2], [0], [0], [0, 1, 0, 0, 1, 0], [1], [1]>} : vector<8x4x8xbf16>, vector<8x4x8xbf16>, vector<4x8x8xf32> -> vector<4x8x8xf32>
    "tpu.trace_stop"() : () -> ()
    %cst_34 = arith.constant 0.353553385 : f32
    %92 = vector.broadcast %cst_34 : f32 to vector<4x8x8xf32>
    %93 = arith.mulf %91, %92 : vector<4x8x8xf32>
    %94 = vector.shape_cast %22 : vector<8x8xf32> to vector<1x8x8xf32>
    %95 = vector.broadcast %94 : vector<1x8x8xf32> to vector<4x8x8xf32>
    %96 = arith.addf %93, %95 : vector<4x8x8xf32>
    %cst_35 = arith.constant dense<0xFF800000> : vector<4x8xf32>
    %97 = vector.multi_reduction <maximumf>, %96, %cst_35 [2] : vector<4x8x8xf32> to vector<4x8xf32>
    %98 = vector.shape_cast %97 : vector<4x8xf32> to vector<4x8x1xf32>
    %99 = vector.broadcast %98 : vector<4x8x1xf32> to vector<4x8x8xf32>
    %100 = arith.subf %96, %99 : vector<4x8x8xf32>
    %101 = math.exp %100 : vector<4x8x8xf32>
    %cst_36 = arith.constant dense<0.000000e+00> : vector<4x8xf32>
    %102 = vector.multi_reduction <add>, %101, %cst_36 [2] : vector<4x8x8xf32> to vector<4x8xf32>
    %103 = vector.shape_cast %102 : vector<4x8xf32> to vector<4x8x1xf32>
    %104 = tpu.reciprocal %103 {approx = true} : vector<4x8x1xf32> -> vector<4x8x1xf32>
    %105 = vector.broadcast %104 : vector<4x8x1xf32> to vector<4x8x8xf32>
    %106 = arith.mulf %101, %105 : vector<4x8x8xf32>
    %107 = arith.truncf %106 : vector<4x8x8xf32> to vector<4x8x8xbf16>
    "tpu.trace_start"() <{level = 10 : i32, message = "hqk,khd->qhd"}> : () -> ()
    %cst_37 = arith.constant dense<0.000000e+00> : vector<4x8x8xf32>
    %108 = tpu.matmul %90, %107, %cst_37 {dimension_numbers = #tpu.dot_dimension_numbers<[0], [2], [2], [1], [0, 1, 0, 2, 1, 1], [1], [0]>} : vector<8x4x8xbf16>, vector<4x8x8xbf16>, vector<4x8x8xf32> -> vector<4x8x8xf32>
    %109 = tpu.transpose %108, [2, 0, 1] : vector<4x8x8xf32> -> vector<8x4x8xf32>
    "tpu.trace_stop"() : () -> ()
    %110 = vector.shape_cast %109 : vector<8x4x8xf32> to vector<8x32xf32>
    %c8 = arith.constant 8 : index
    %c0_38 = arith.constant 0 : index
    %111 = vector.load %arg22[%c8, %c0_38] : memref<16x32xf32, #tpu.memory_space<vmem>>, vector<8x32xf32>
    tpu.vector_store %arg22[%c8, %c0_38], %110 {strides = array<i32>} : memref<16x32xf32, #tpu.memory_space<vmem>>, vector<8x32xf32>,
    %c0_39 = arith.constant 0 : index
    %c0_40 = arith.constant 0 : index
    %112 = vector.load %arg22[%c0_39, %c0_40] : memref<16x32xf32, #tpu.memory_space<vmem>>, vector<16x32xf32>
    %113 = arith.truncf %112 : vector<16x32xf32> to vector<16x32xbf16>
    %c0_41 = arith.constant 0 : index
    %c0_42 = arith.constant 0 : index
    %c0_43 = arith.constant 0 : index
    %114 = vector.load %arg9[%c0_41, %c0_42, %c0_43] : memref<2x32x32xbf16, #tpu.memory_space<vmem>>, vector<1x32x32xbf16>
    %115 = vector.shape_cast %114 : vector<1x32x32xbf16> to vector<32x32xbf16>
    %cst_44 = arith.constant dense<0.000000e+00> : vector<16x32xf32>
    %116 = tpu.matmul %113, %115, %cst_44 {dimension_numbers = #tpu.dot_dimension_numbers<[1], [0], [0], [1], [0, 0, 1, 1], [], []>} : vector<16x32xbf16>, vector<32x32xbf16>, vector<16x32xf32> -> vector<16x32xf32>
    %117 = arith.addf %16, %116 : vector<16x32xf32>
    %c0_45 = arith.constant 0 : index
    %c0_46 = arith.constant 0 : index
    %c0_47 = arith.constant 0 : index
    %118 = vector.load %arg10[%c0_45, %c0_46, %c0_47] : memref<2x1x32xf32, #tpu.memory_space<vmem>>, vector<1x1x32xf32>
    %119 = vector.shape_cast %118 : vector<1x1x32xf32> to vector<1x32xf32>
    %120 = vector.broadcast %119 : vector<1x32xf32> to vector<16x32xf32>
    %121 = arith.addf %117, %120 : vector<16x32xf32>
    %c0_48 = arith.constant 0 : index
    %c0_49 = arith.constant 0 : index
    %c0_50 = arith.constant 0 : index
    %122 = vector.load %arg11[%c0_48, %c0_49, %c0_50] : memref<2x1x32xf32, #tpu.memory_space<vmem>>, vector<1x1x32xf32>
    %123 = vector.shape_cast %122 : vector<1x1x32xf32> to vector<1x32xf32>
    %c0_51 = arith.constant 0 : index
    %c0_52 = arith.constant 0 : index
    %c0_53 = arith.constant 0 : index
    %124 = vector.load %arg12[%c0_51, %c0_52, %c0_53] : memref<2x1x32xf32, #tpu.memory_space<vmem>>, vector<1x1x32xf32>
    %125 = vector.shape_cast %124 : vector<1x1x32xf32> to vector<1x32xf32>
    %cst_54 = arith.constant dense<0.000000e+00> : vector<16xf32>
    %126 = vector.multi_reduction <add>, %121, %cst_54 [1] : vector<16x32xf32> to vector<16xf32>
    %127 = vector.shape_cast %126 : vector<16xf32> to vector<16x1xf32>
    %cst_55 = arith.constant 3.200000e+01 : f32
    %128 = vector.broadcast %cst_55 : f32 to vector<16x1xf32>
    %129 = arith.divf %127, %128 : vector<16x1xf32>
    %130 = vector.broadcast %129 : vector<16x1xf32> to vector<16x32xf32>
    %131 = arith.subf %121, %130 : vector<16x32xf32>
    %132 = arith.mulf %131, %131 : vector<16x32xf32>
    %cst_56 = arith.constant dense<0.000000e+00> : vector<16xf32>
    %133 = vector.multi_reduction <add>, %132, %cst_56 [1] : vector<16x32xf32> to vector<16xf32>
    %134 = vector.shape_cast %133 : vector<16xf32> to vector<16x1xf32>
    %cst_57 = arith.constant 3.200000e+01 : f32
    %135 = vector.broadcast %cst_57 : f32 to vector<16x1xf32>
    %136 = arith.divf %134, %135 : vector<16x1xf32>
    %cst_58 = arith.constant 9.99999974E-6 : f32
    %137 = vector.broadcast %cst_58 : f32 to vector<16x1xf32>
    %138 = arith.addf %136, %137 : vector<16x1xf32>
    %139 = math.rsqrt %138 : vector<16x1xf32>
    %140 = vector.broadcast %139 : vector<16x1xf32> to vector<16x32xf32>
    %141 = arith.mulf %131, %140 : vector<16x32xf32>
    %142 = vector.broadcast %123 : vector<1x32xf32> to vector<16x32xf32>
    %143 = arith.mulf %141, %142 : vector<16x32xf32>
    %144 = vector.broadcast %125 : vector<1x32xf32> to vector<16x32xf32>
    %145 = arith.addf %143, %144 : vector<16x32xf32>
    %146 = arith.truncf %145 : vector<16x32xf32> to vector<16x32xbf16>
    %c0_59 = arith.constant 0 : index
    %c0_60 = arith.constant 0 : index
    %c0_61 = arith.constant 0 : index
    %147 = vector.load %arg13[%c0_59, %c0_60, %c0_61] : memref<2x32x64xbf16, #tpu.memory_space<vmem>>, vector<1x32x64xbf16>
    %148 = vector.shape_cast %147 : vector<1x32x64xbf16> to vector<32x64xbf16>
    %cst_62 = arith.constant dense<0.000000e+00> : vector<16x64xf32>
    %149 = tpu.matmul %146, %148, %cst_62 {dimension_numbers = #tpu.dot_dimension_numbers<[1], [0], [0], [1], [0, 0, 1, 1], [], []>} : vector<16x32xbf16>, vector<32x64xbf16>, vector<16x64xf32> -> vector<16x64xf32>
    %c0_63 = arith.constant 0 : index
    %c0_64 = arith.constant 0 : index
    %c0_65 = arith.constant 0 : index
    %150 = vector.load %arg14[%c0_63, %c0_64, %c0_65] : memref<2x1x64xf32, #tpu.memory_space<vmem>>, vector<1x1x64xf32>
    %151 = vector.shape_cast %150 : vector<1x1x64xf32> to vector<1x64xf32>
    %152 = vector.broadcast %151 : vector<1x64xf32> to vector<16x64xf32>
    %153 = arith.addf %149, %152 : vector<16x64xf32>
    %cst_66 = arith.constant 0.000000e+00 : f32
    %154 = vector.broadcast %cst_66 : f32 to vector<16x64xf32>
    %155 = arith.maximumf %153, %154 : vector<16x64xf32>
    %156 = arith.truncf %155 : vector<16x64xf32> to vector<16x64xbf16>
    %c0_67 = arith.constant 0 : index
    %c0_68 = arith.constant 0 : index
    %c0_69 = arith.constant 0 : index
    %157 = vector.load %arg15[%c0_67, %c0_68, %c0_69] : memref<2x64x32xbf16, #tpu.memory_space<vmem>>, vector<1x64x32xbf16>
    %158 = vector.shape_cast %157 : vector<1x64x32xbf16> to vector<64x32xbf16>
    %cst_70 = arith.constant dense<0.000000e+00> : vector<16x32xf32>
    %159 = tpu.matmul %156, %158, %cst_70 {dimension_numbers = #tpu.dot_dimension_numbers<[1], [0], [0], [1], [0, 0, 1, 1], [], []>} : vector<16x64xbf16>, vector<64x32xbf16>, vector<16x32xf32> -> vector<16x32xf32>
    %160 = arith.addf %121, %159 : vector<16x32xf32>
    %c0_71 = arith.constant 0 : index
    %c0_72 = arith.constant 0 : index
    %c0_73 = arith.constant 0 : index
    %161 = vector.load %arg16[%c0_71, %c0_72, %c0_73] : memref<2x1x32xf32, #tpu.memory_space<vmem>>, vector<1x1x32xf32>
    %162 = vector.shape_cast %161 : vector<1x1x32xf32> to vector<1x32xf32>
    %163 = vector.broadcast %162 : vector<1x32xf32> to vector<16x32xf32>
    %164 = arith.addf %160, %163 : vector<16x32xf32>
    %c1 = arith.constant 1 : index
    %c0_74 = arith.constant 0 : index
    %c0_75 = arith.constant 0 : index
    %165 = vector.load %arg5[%c1, %c0_74, %c0_75] : memref<2x1x32xf32, #tpu.memory_space<vmem>>, vector<1x1x32xf32>
    %166 = vector.shape_cast %165 : vector<1x1x32xf32> to vector<1x32xf32>
    %c1_76 = arith.constant 1 : index
    %c0_77 = arith.constant 0 : index
    %c0_78 = arith.constant 0 : index
    %167 = vector.load %arg6[%c1_76, %c0_77, %c0_78] : memref<2x1x32xf32, #tpu.memory_space<vmem>>, vector<1x1x32xf32>
    %168 = vector.shape_cast %167 : vector<1x1x32xf32> to vector<1x32xf32>
    %cst_79 = arith.constant dense<0.000000e+00> : vector<16xf32>
    %169 = vector.multi_reduction <add>, %164, %cst_79 [1] : vector<16x32xf32> to vector<16xf32>
    %170 = vector.shape_cast %169 : vector<16xf32> to vector<16x1xf32>
    %cst_80 = arith.constant 3.200000e+01 : f32
    %171 = vector.broadcast %cst_80 : f32 to vector<16x1xf32>
    %172 = arith.divf %170, %171 : vector<16x1xf32>
    %173 = vector.broadcast %172 : vector<16x1xf32> to vector<16x32xf32>
    %174 = arith.subf %164, %173 : vector<16x32xf32>
    %175 = arith.mulf %174, %174 : vector<16x32xf32>
    %cst_81 = arith.constant dense<0.000000e+00> : vector<16xf32>
    %176 = vector.multi_reduction <add>, %175, %cst_81 [1] : vector<16x32xf32> to vector<16xf32>
    %177 = vector.shape_cast %176 : vector<16xf32> to vector<16x1xf32>
    %cst_82 = arith.constant 3.200000e+01 : f32
    %178 = vector.broadcast %cst_82 : f32 to vector<16x1xf32>
    %179 = arith.divf %177, %178 : vector<16x1xf32>
    %cst_83 = arith.constant 9.99999974E-6 : f32
    %180 = vector.broadcast %cst_83 : f32 to vector<16x1xf32>
    %181 = arith.addf %179, %180 : vector<16x1xf32>
    %182 = math.rsqrt %181 : vector<16x1xf32>
    %183 = vector.broadcast %182 : vector<16x1xf32> to vector<16x32xf32>
    %184 = arith.mulf %174, %183 : vector<16x32xf32>
    %185 = vector.broadcast %166 : vector<1x32xf32> to vector<16x32xf32>
    %186 = arith.mulf %184, %185 : vector<16x32xf32>
    %187 = vector.broadcast %168 : vector<1x32xf32> to vector<16x32xf32>
    %188 = arith.addf %186, %187 : vector<16x32xf32>
    %189 = arith.truncf %188 : vector<16x32xf32> to vector<16x32xbf16>
    %c1_84 = arith.constant 1 : index
    %c0_85 = arith.constant 0 : index
    %c0_86 = arith.constant 0 : index
    %190 = vector.load %arg7[%c1_84, %c0_85, %c0_86] : memref<2x32x96xbf16, #tpu.memory_space<vmem>>, vector<1x32x96xbf16>
    %191 = vector.shape_cast %190 : vector<1x32x96xbf16> to vector<32x96xbf16>
    %cst_87 = arith.constant dense<0.000000e+00> : vector<16x96xf32>
    %192 = tpu.matmul %189, %191, %cst_87 {dimension_numbers = #tpu.dot_dimension_numbers<[1], [0], [0], [1], [0, 0, 1, 1], [], []>} : vector<16x32xbf16>, vector<32x96xbf16>, vector<16x96xf32> -> vector<16x96xf32>
    %c1_88 = arith.constant 1 : index
    %c0_89 = arith.constant 0 : index
    %c0_90 = arith.constant 0 : index
    %193 = vector.load %arg8[%c1_88, %c0_89, %c0_90] : memref<2x1x96xf32, #tpu.memory_space<vmem>>, vector<1x1x96xf32>
    %194 = vector.shape_cast %193 : vector<1x1x96xf32> to vector<1x96xf32>
    %195 = vector.broadcast %194 : vector<1x96xf32> to vector<16x96xf32>
    %196 = arith.addf %192, %195 : vector<16x96xf32>
    %197 = arith.truncf %196 : vector<16x96xf32> to vector<16x96xbf16>
    %198 = vector.extract_strided_slice %197 {offsets = [0, 0], sizes = [8, 96], strides = [1, 1]} : vector<16x96xbf16> to vector<8x96xbf16>
    %199 = vector.extract_strided_slice %198 {offsets = [0, 0], sizes = [8, 32], strides = [1, 1]} : vector<8x96xbf16> to vector<8x32xbf16>
    %200 = vector.shape_cast %199 : vector<8x32xbf16> to vector<8x4x8xbf16>
    %201 = vector.extract_strided_slice %198 {offsets = [0, 32], sizes = [8, 32], strides = [1, 1]} : vector<8x96xbf16> to vector<8x32xbf16>
    %202 = vector.shape_cast %201 : vector<8x32xbf16> to vector<8x4x8xbf16>
    %203 = vector.extract_strided_slice %198 {offsets = [0, 64], sizes = [8, 32], strides = [1, 1]} : vector<8x96xbf16> to vector<8x32xbf16>
    %204 = vector.shape_cast %203 : vector<8x32xbf16> to vector<8x4x8xbf16>
    "tpu.trace_start"() <{level = 10 : i32, message = "qhd,khd->hqk"}> : () -> ()
    %cst_91 = arith.constant dense<0.000000e+00> : vector<4x8x8xf32>
    %205 = tpu.matmul %200, %202, %cst_91 {dimension_numbers = #tpu.dot_dimension_numbers<[2], [2], [0], [0], [0, 1, 0, 0, 1, 0], [1], [1]>} : vector<8x4x8xbf16>, vector<8x4x8xbf16>, vector<4x8x8xf32> -> vector<4x8x8xf32>
    "tpu.trace_stop"() : () -> ()
    %cst_92 = arith.constant 0.353553385 : f32
    %206 = vector.broadcast %cst_92 : f32 to vector<4x8x8xf32>
    %207 = arith.mulf %205, %206 : vector<4x8x8xf32>
    %208 = vector.shape_cast %22 : vector<8x8xf32> to vector<1x8x8xf32>
    %209 = vector.broadcast %208 : vector<1x8x8xf32> to vector<4x8x8xf32>
    %210 = arith.addf %207, %209 : vector<4x8x8xf32>
    %cst_93 = arith.constant dense<0xFF800000> : vector<4x8xf32>
    %211 = vector.multi_reduction <maximumf>, %210, %cst_93 [2] : vector<4x8x8xf32> to vector<4x8xf32>
    %212 = vector.shape_cast %211 : vector<4x8xf32> to vector<4x8x1xf32>
    %213 = vector.broadcast %212 : vector<4x8x1xf32> to vector<4x8x8xf32>
    %214 = arith.subf %210, %213 : vector<4x8x8xf32>
    %215 = math.exp %214 : vector<4x8x8xf32>
    %cst_94 = arith.constant dense<0.000000e+00> : vector<4x8xf32>
    %216 = vector.multi_reduction <add>, %215, %cst_94 [2] : vector<4x8x8xf32> to vector<4x8xf32>
    %217 = vector.shape_cast %216 : vector<4x8xf32> to vector<4x8x1xf32>
    %218 = tpu.reciprocal %217 {approx = true} : vector<4x8x1xf32> -> vector<4x8x1xf32>
    %219 = vector.broadcast %218 : vector<4x8x1xf32> to vector<4x8x8xf32>
    %220 = arith.mulf %215, %219 : vector<4x8x8xf32>
    %221 = arith.truncf %220 : vector<4x8x8xf32> to vector<4x8x8xbf16>
    "tpu.trace_start"() <{level = 10 : i32, message = "hqk,khd->qhd"}> : () -> ()
    %cst_95 = arith.constant dense<0.000000e+00> : vector<4x8x8xf32>
    %222 = tpu.matmul %204, %221, %cst_95 {dimension_numbers = #tpu.dot_dimension_numbers<[0], [2], [2], [1], [0, 1, 0, 2, 1, 1], [1], [0]>} : vector<8x4x8xbf16>, vector<4x8x8xbf16>, vector<4x8x8xf32> -> vector<4x8x8xf32>
    %223 = tpu.transpose %222, [2, 0, 1] : vector<4x8x8xf32> -> vector<8x4x8xf32>
    "tpu.trace_stop"() : () -> ()
    %224 = vector.shape_cast %223 : vector<8x4x8xf32> to vector<8x32xf32>
    %c0_96 = arith.constant 0 : index
    %c0_97 = arith.constant 0 : index
    %225 = vector.load %arg22[%c0_96, %c0_97] : memref<16x32xf32, #tpu.memory_space<vmem>>, vector<8x32xf32>
    tpu.vector_store %arg22[%c0_96, %c0_97], %224 {strides = array<i32>} : memref<16x32xf32, #tpu.memory_space<vmem>>, vector<8x32xf32>,
    %226 = vector.extract_strided_slice %197 {offsets = [8, 0], sizes = [8, 96], strides = [1, 1]} : vector<16x96xbf16> to vector<8x96xbf16>
    %227 = vector.extract_strided_slice %226 {offsets = [0, 0], sizes = [8, 32], strides = [1, 1]} : vector<8x96xbf16> to vector<8x32xbf16>
    %228 = vector.shape_cast %227 : vector<8x32xbf16> to vector<8x4x8xbf16>
    %229 = vector.extract_strided_slice %226 {offsets = [0, 32], sizes = [8, 32], strides = [1, 1]} : vector<8x96xbf16> to vector<8x32xbf16>
    %230 = vector.shape_cast %229 : vector<8x32xbf16> to vector<8x4x8xbf16>
    %231 = vector.extract_strided_slice %226 {offsets = [0, 64], sizes = [8, 32], strides = [1, 1]} : vector<8x96xbf16> to vector<8x32xbf16>
    %232 = vector.shape_cast %231 : vector<8x32xbf16> to vector<8x4x8xbf16>
    "tpu.trace_start"() <{level = 10 : i32, message = "qhd,khd->hqk"}> : () -> ()
    %cst_98 = arith.constant dense<0.000000e+00> : vector<4x8x8xf32>
    %233 = tpu.matmul %228, %230, %cst_98 {dimension_numbers = #tpu.dot_dimension_numbers<[2], [2], [0], [0], [0, 1, 0, 0, 1, 0], [1], [1]>} : vector<8x4x8xbf16>, vector<8x4x8xbf16>, vector<4x8x8xf32> -> vector<4x8x8xf32>
    "tpu.trace_stop"() : () -> ()
    %cst_99 = arith.constant 0.353553385 : f32
    %234 = vector.broadcast %cst_99 : f32 to vector<4x8x8xf32>
    %235 = arith.mulf %233, %234 : vector<4x8x8xf32>
    %236 = vector.shape_cast %22 : vector<8x8xf32> to vector<1x8x8xf32>
    %237 = vector.broadcast %236 : vector<1x8x8xf32> to vector<4x8x8xf32>
    %238 = arith.addf %235, %237 : vector<4x8x8xf32>
    %cst_100 = arith.constant dense<0xFF800000> : vector<4x8xf32>
    %239 = vector.multi_reduction <maximumf>, %238, %cst_100 [2] : vector<4x8x8xf32> to vector<4x8xf32>
    %240 = vector.shape_cast %239 : vector<4x8xf32> to vector<4x8x1xf32>
    %241 = vector.broadcast %240 : vector<4x8x1xf32> to vector<4x8x8xf32>
    %242 = arith.subf %238, %241 : vector<4x8x8xf32>
    %243 = math.exp %242 : vector<4x8x8xf32>
    %cst_101 = arith.constant dense<0.000000e+00> : vector<4x8xf32>
    %244 = vector.multi_reduction <add>, %243, %cst_101 [2] : vector<4x8x8xf32> to vector<4x8xf32>
    %245 = vector.shape_cast %244 : vector<4x8xf32> to vector<4x8x1xf32>
    %246 = tpu.reciprocal %245 {approx = true} : vector<4x8x1xf32> -> vector<4x8x1xf32>
    %247 = vector.broadcast %246 : vector<4x8x1xf32> to vector<4x8x8xf32>
    %248 = arith.mulf %243, %247 : vector<4x8x8xf32>
    %249 = arith.truncf %248 : vector<4x8x8xf32> to vector<4x8x8xbf16>
    "tpu.trace_start"() <{level = 10 : i32, message = "hqk,khd->qhd"}> : () -> ()
    %cst_102 = arith.constant dense<0.000000e+00> : vector<4x8x8xf32>
    %250 = tpu.matmul %232, %249, %cst_102 {dimension_numbers = #tpu.dot_dimension_numbers<[0], [2], [2], [1], [0, 1, 0, 2, 1, 1], [1], [0]>} : vector<8x4x8xbf16>, vector<4x8x8xbf16>, vector<4x8x8xf32> -> vector<4x8x8xf32>
    %251 = tpu.transpose %250, [2, 0, 1] : vector<4x8x8xf32> -> vector<8x4x8xf32>
    "tpu.trace_stop"() : () -> ()
    %252 = vector.shape_cast %251 : vector<8x4x8xf32> to vector<8x32xf32>
    %c8_103 = arith.constant 8 : index
    %c0_104 = arith.constant 0 : index
    %253 = vector.load %arg22[%c8_103, %c0_104] : memref<16x32xf32, #tpu.memory_space<vmem>>, vector<8x32xf32>
    tpu.vector_store %arg22[%c8_103, %c0_104], %252 {strides = array<i32>} : memref<16x32xf32, #tpu.memory_space<vmem>>, vector<8x32xf32>,
    %c0_105 = arith.constant 0 : index
    %c0_106 = arith.constant 0 : index
    %254 = vector.load %arg22[%c0_105, %c0_106] : memref<16x32xf32, #tpu.memory_space<vmem>>, vector<16x32xf32>
    %255 = arith.truncf %254 : vector<16x32xf32> to vector<16x32xbf16>
    %c1_107 = arith.constant 1 : index
    %c0_108 = arith.constant 0 : index
    %c0_109 = arith.constant 0 : index
    %256 = vector.load %arg9[%c1_107, %c0_108, %c0_109] : memref<2x32x32xbf16, #tpu.memory_space<vmem>>, vector<1x32x32xbf16>
    %257 = vector.shape_cast %256 : vector<1x32x32xbf16> to vector<32x32xbf16>
    %cst_110 = arith.constant dense<0.000000e+00> : vector<16x32xf32>
    %258 = tpu.matmul %255, %257, %cst_110 {dimension_numbers = #tpu.dot_dimension_numbers<[1], [0], [0], [1], [0, 0, 1, 1], [], []>} : vector<16x32xbf16>, vector<32x32xbf16>, vector<16x32xf32> -> vector<16x32xf32>
    %259 = arith.addf %164, %258 : vector<16x32xf32>
    %c1_111 = arith.constant 1 : index
    %c0_112 = arith.constant 0 : index
    %c0_113 = arith.constant 0 : index
    %260 = vector.load %arg10[%c1_111, %c0_112, %c0_113] : memref<2x1x32xf32, #tpu.memory_space<vmem>>, vector<1x1x32xf32>
    %261 = vector.shape_cast %260 : vector<1x1x32xf32> to vector<1x32xf32>
    %262 = vector.broadcast %261 : vector<1x32xf32> to vector<16x32xf32>
    %263 = arith.addf %259, %262 : vector<16x32xf32>
    %c1_114 = arith.constant 1 : index
    %c0_115 = arith.constant 0 : index
    %c0_116 = arith.constant 0 : index
    %264 = vector.load %arg11[%c1_114, %c0_115, %c0_116] : memref<2x1x32xf32, #tpu.memory_space<vmem>>, vector<1x1x32xf32>
    %265 = vector.shape_cast %264 : vector<1x1x32xf32> to vector<1x32xf32>
    %c1_117 = arith.constant 1 : index
    %c0_118 = arith.constant 0 : index
    %c0_119 = arith.constant 0 : index
    %266 = vector.load %arg12[%c1_117, %c0_118, %c0_119] : memref<2x1x32xf32, #tpu.memory_space<vmem>>, vector<1x1x32xf32>
    %267 = vector.shape_cast %266 : vector<1x1x32xf32> to vector<1x32xf32>
    %cst_120 = arith.constant dense<0.000000e+00> : vector<16xf32>
    %268 = vector.multi_reduction <add>, %263, %cst_120 [1] : vector<16x32xf32> to vector<16xf32>
    %269 = vector.shape_cast %268 : vector<16xf32> to vector<16x1xf32>
    %cst_121 = arith.constant 3.200000e+01 : f32
    %270 = vector.broadcast %cst_121 : f32 to vector<16x1xf32>
    %271 = arith.divf %269, %270 : vector<16x1xf32>
    %272 = vector.broadcast %271 : vector<16x1xf32> to vector<16x32xf32>
    %273 = arith.subf %263, %272 : vector<16x32xf32>
    %274 = arith.mulf %273, %273 : vector<16x32xf32>
    %cst_122 = arith.constant dense<0.000000e+00> : vector<16xf32>
    %275 = vector.multi_reduction <add>, %274, %cst_122 [1] : vector<16x32xf32> to vector<16xf32>
    %276 = vector.shape_cast %275 : vector<16xf32> to vector<16x1xf32>
    %cst_123 = arith.constant 3.200000e+01 : f32
    %277 = vector.broadcast %cst_123 : f32 to vector<16x1xf32>
    %278 = arith.divf %276, %277 : vector<16x1xf32>
    %cst_124 = arith.constant 9.99999974E-6 : f32
    %279 = vector.broadcast %cst_124 : f32 to vector<16x1xf32>
    %280 = arith.addf %278, %279 : vector<16x1xf32>
    %281 = math.rsqrt %280 : vector<16x1xf32>
    %282 = vector.broadcast %281 : vector<16x1xf32> to vector<16x32xf32>
    %283 = arith.mulf %273, %282 : vector<16x32xf32>
    %284 = vector.broadcast %265 : vector<1x32xf32> to vector<16x32xf32>
    %285 = arith.mulf %283, %284 : vector<16x32xf32>
    %286 = vector.broadcast %267 : vector<1x32xf32> to vector<16x32xf32>
    %287 = arith.addf %285, %286 : vector<16x32xf32>
    %288 = arith.truncf %287 : vector<16x32xf32> to vector<16x32xbf16>
    %c1_125 = arith.constant 1 : index
    %c0_126 = arith.constant 0 : index
    %c0_127 = arith.constant 0 : index
    %289 = vector.load %arg13[%c1_125, %c0_126, %c0_127] : memref<2x32x64xbf16, #tpu.memory_space<vmem>>, vector<1x32x64xbf16>
    %290 = vector.shape_cast %289 : vector<1x32x64xbf16> to vector<32x64xbf16>
    %cst_128 = arith.constant dense<0.000000e+00> : vector<16x64xf32>
    %291 = tpu.matmul %288, %290, %cst_128 {dimension_numbers = #tpu.dot_dimension_numbers<[1], [0], [0], [1], [0, 0, 1, 1], [], []>} : vector<16x32xbf16>, vector<32x64xbf16>, vector<16x64xf32> -> vector<16x64xf32>
    %c1_129 = arith.constant 1 : index
    %c0_130 = arith.constant 0 : index
    %c0_131 = arith.constant 0 : index
    %292 = vector.load %arg14[%c1_129, %c0_130, %c0_131] : memref<2x1x64xf32, #tpu.memory_space<vmem>>, vector<1x1x64xf32>
    %293 = vector.shape_cast %292 : vector<1x1x64xf32> to vector<1x64xf32>
    %294 = vector.broadcast %293 : vector<1x64xf32> to vector<16x64xf32>
    %295 = arith.addf %291, %294 : vector<16x64xf32>
    %cst_132 = arith.constant 0.000000e+00 : f32
    %296 = vector.broadcast %cst_132 : f32 to vector<16x64xf32>
    %297 = arith.maximumf %295, %296 : vector<16x64xf32>
    %298 = arith.truncf %297 : vector<16x64xf32> to vector<16x64xbf16>
    %c1_133 = arith.constant 1 : index
    %c0_134 = arith.constant 0 : index
    %c0_135 = arith.constant 0 : index
    %299 = vector.load %arg15[%c1_133, %c0_134, %c0_135] : memref<2x64x32xbf16, #tpu.memory_space<vmem>>, vector<1x64x32xbf16>
    %300 = vector.shape_cast %299 : vector<1x64x32xbf16> to vector<64x32xbf16>
    %cst_136 = arith.constant dense<0.000000e+00> : vector<16x32xf32>
    %301 = tpu.matmul %298, %300, %cst_136 {dimension_numbers = #tpu.dot_dimension_numbers<[1], [0], [0], [1], [0, 0, 1, 1], [], []>} : vector<16x64xbf16>, vector<64x32xbf16>, vector<16x32xf32> -> vector<16x32xf32>
    %302 = arith.addf %263, %301 : vector<16x32xf32>
    %c1_137 = arith.constant 1 : index
    %c0_138 = arith.constant 0 : index
    %c0_139 = arith.constant 0 : index
    %303 = vector.load %arg16[%c1_137, %c0_138, %c0_139] : memref<2x1x32xf32, #tpu.memory_space<vmem>>, vector<1x1x32xf32>
    %304 = vector.shape_cast %303 : vector<1x1x32xf32> to vector<1x32xf32>
    %305 = vector.broadcast %304 : vector<1x32xf32> to vector<16x32xf32>
    %306 = arith.addf %302, %305 : vector<16x32xf32>
    %c0_140 = arith.constant 0 : index
    %c0_141 = arith.constant 0 : index
    %307 = vector.load %arg17[%c0_140, %c0_141] : memref<1x32xf32, #tpu.memory_space<vmem>>, vector<1x32xf32>
    %c0_142 = arith.constant 0 : index
    %c0_143 = arith.constant 0 : index
    %308 = vector.load %arg18[%c0_142, %c0_143] : memref<1x32xf32, #tpu.memory_space<vmem>>, vector<1x32xf32>
    %cst_144 = arith.constant dense<0.000000e+00> : vector<16xf32>
    %309 = vector.multi_reduction <add>, %306, %cst_144 [1] : vector<16x32xf32> to vector<16xf32>
    %310 = vector.shape_cast %309 : vector<16xf32> to vector<16x1xf32>
    %cst_145 = arith.constant 3.200000e+01 : f32
    %311 = vector.broadcast %cst_145 : f32 to vector<16x1xf32>
    %312 = arith.divf %310, %311 : vector<16x1xf32>
    %313 = vector.broadcast %312 : vector<16x1xf32> to vector<16x32xf32>
    %314 = arith.subf %306, %313 : vector<16x32xf32>
    %315 = arith.mulf %314, %314 : vector<16x32xf32>
    %cst_146 = arith.constant dense<0.000000e+00> : vector<16xf32>
    %316 = vector.multi_reduction <add>, %315, %cst_146 [1] : vector<16x32xf32> to vector<16xf32>
    %317 = vector.shape_cast %316 : vector<16xf32> to vector<16x1xf32>
    %cst_147 = arith.constant 3.200000e+01 : f32
    %318 = vector.broadcast %cst_147 : f32 to vector<16x1xf32>
    %319 = arith.divf %317, %318 : vector<16x1xf32>
    %cst_148 = arith.constant 9.99999974E-6 : f32
    %320 = vector.broadcast %cst_148 : f32 to vector<16x1xf32>
    %321 = arith.addf %319, %320 : vector<16x1xf32>
    %322 = math.rsqrt %321 : vector<16x1xf32>
    %323 = vector.broadcast %322 : vector<16x1xf32> to vector<16x32xf32>
    %324 = arith.mulf %314, %323 : vector<16x32xf32>
    %325 = vector.broadcast %307 : vector<1x32xf32> to vector<16x32xf32>
    %326 = arith.mulf %324, %325 : vector<16x32xf32>
    %327 = vector.broadcast %308 : vector<1x32xf32> to vector<16x32xf32>
    %328 = arith.addf %326, %327 : vector<16x32xf32>
    %329 = arith.truncf %328 : vector<16x32xf32> to vector<16x32xbf16>
    %c0_149 = arith.constant 0 : index
    %c0_150 = arith.constant 0 : index
    %330 = vector.load %arg19[%c0_149, %c0_150] : memref<32x64xbf16, #tpu.memory_space<vmem>>, vector<32x64xbf16>
    %cst_151 = arith.constant dense<0.000000e+00> : vector<16x64xf32>
    %331 = tpu.matmul %329, %330, %cst_151 {dimension_numbers = #tpu.dot_dimension_numbers<[1], [0], [0], [1], [0, 0, 1, 1], [], []>} : vector<16x32xbf16>, vector<32x64xbf16>, vector<16x64xf32> -> vector<16x64xf32>
    %c0_152 = arith.constant 0 : index
    %c0_153 = arith.constant 0 : index
    %332 = vector.load %arg20[%c0_152, %c0_153] : memref<1x64xf32, #tpu.memory_space<vmem>>, vector<1x64xf32>
    %333 = vector.broadcast %332 : vector<1x64xf32> to vector<16x64xf32>
    %334 = arith.addf %331, %333 : vector<16x64xf32>
    %cst_154 = arith.constant dense<0xFF800000> : vector<16xf32>
    %335 = vector.multi_reduction <maximumf>, %334, %cst_154 [1] : vector<16x64xf32> to vector<16xf32>
    %336 = vector.shape_cast %335 : vector<16xf32> to vector<16x1xf32>
    %337 = vector.broadcast %336 : vector<16x1xf32> to vector<16x64xf32>
    %338 = arith.subf %334, %337 : vector<16x64xf32>
    %339 = math.exp %338 : vector<16x64xf32>
    %cst_155 = arith.constant dense<0.000000e+00> : vector<16xf32>
    %340 = vector.multi_reduction <add>, %339, %cst_155 [1] : vector<16x64xf32> to vector<16xf32>
    %341 = vector.shape_cast %340 : vector<16xf32> to vector<16x1xf32>
    %342 = math.log %341 : vector<16x1xf32>
    %343 = arith.addf %336, %342 : vector<16x1xf32>
    %344 = tpu.iota {dimensions = array<i32: 1>} : vector<16x64xi32>
    %c0_156 = arith.constant 0 : index
    %c0_157 = arith.constant 0 : index
    %345 = vector.load %arg2[%c0_156, %c0_157] : memref<16x1xi32, #tpu.memory_space<vmem>>, vector<16x1xi32>
    %346 = vector.broadcast %345 : vector<16x1xi32> to vector<16x64xi32>
    %347 = arith.cmpi eq, %344, %346 : vector<16x64xi32>
    %348 = arith.extui %347 : vector<16x64xi1> to vector<16x64xi32>
    %349 = arith.sitofp %348 : vector<16x64xi32> to vector<16x64xf32>
    %350 = arith.mulf %334, %349 : vector<16x64xf32>
    %cst_158 = arith.constant dense<0.000000e+00> : vector<16xf32>
    %351 = vector.multi_reduction <add>, %350, %cst_158 [1] : vector<16x64xf32> to vector<16xf32>
    %352 = vector.shape_cast %351 : vector<16xf32> to vector<16x1xf32>
    %353 = arith.subf %343, %352 : vector<16x1xf32>
    %354 = vector.shape_cast %353 : vector<16x1xf32> to vector<2x8xf32>
    %c0_159 = arith.constant 0 : index
    %c0_160 = arith.constant 0 : index
    %355 = vector.load %arg21[%c0_159, %c0_160] : memref<2x8xf32, #tpu.memory_space<vmem>>, vector<2x8xf32>
    tpu.vector_store %arg21[%c0_159, %c0_160], %354 {strides = array<i32>} : memref<2x8xf32, #tpu.memory_space<vmem>>, vector<2x8xf32>,
    return
  }
  func.func @transform_0(%arg0: i32) -> (i32, i32) {
    %c0_i32 = arith.constant 0 : i32
    %c0_i32_0 = arith.constant 0 : i32
    %c0_i32_1 = arith.constant 0 : i32
    return %c0_i32, %c0_i32_0 : i32, i32
  }
  func.func @transform_1(%arg0: i32) -> (i32, i32) {
    %c0_i32 = arith.constant 0 : i32
    %c0_i32_0 = arith.constant 0 : i32
    %c0_i32_1 = arith.constant 0 : i32
    return %c0_i32, %c0_i32_0 : i32, i32
  }
  func.func @transform_2(%arg0: i32) -> (i32, i32) {
    %c0_i32 = arith.constant 0 : i32
    %c0_i32_0 = arith.constant 0 : i32
    %c0_i32_1 = arith.constant 0 : i32
    return %c0_i32, %c0_i32_0 : i32, i32
  }
  func.func @transform_3(%arg0: i32) -> (i32, i32) {
    %c0_i32 = arith.constant 0 : i32
    %c0_i32_0 = arith.constant 0 : i32
    %c0_i32_1 = arith.constant 0 : i32
    return %c0_i32, %c0_i32_0 : i32, i32
  }
  func.func @transform_4(%arg0: i32) -> (i32, i32, i32) {
    %c0_i32 = arith.constant 0 : i32
    %c0_i32_0 = arith.constant 0 : i32
    %c0_i32_1 = arith.constant 0 : i32
    %c0_i32_2 = arith.constant 0 : i32
    return %c0_i32, %c0_i32_0, %c0_i32_1 : i32, i32, i32
  }
  func.func @transform_5(%arg0: i32) -> (i32, i32, i32) {
    %c0_i32 = arith.constant 0 : i32
    %c0_i32_0 = arith.constant 0 : i32
    %c0_i32_1 = arith.constant 0 : i32
    %c0_i32_2 = arith.constant 0 : i32
    return %c0_i32, %c0_i32_0, %c0_i32_1 : i32, i32, i32
  }
  func.func @transform_6(%arg0: i32) -> (i32, i32, i32) {
    %c0_i32 = arith.constant 0 : i32
    %c0_i32_0 = arith.constant 0 : i32
    %c0_i32_1 = arith.constant 0 : i32
    %c0_i32_2 = arith.constant 0 : i32
    return %c0_i32, %c0_i32_0, %c0_i32_1 : i32, i32, i32
  }
  func.func @transform_7(%arg0: i32) -> (i32, i32, i32) {
    %c0_i32 = arith.constant 0 : i32
    %c0_i32_0 = arith.constant 0 : i32
    %c0_i32_1 = arith.constant 0 : i32
    %c0_i32_2 = arith.constant 0 : i32
    return %c0_i32, %c0_i32_0, %c0_i32_1 : i32, i32, i32
  }
  func.func @transform_8(%arg0: i32) -> (i32, i32, i32) {
    %c0_i32 = arith.constant 0 : i32
    %c0_i32_0 = arith.constant 0 : i32
    %c0_i32_1 = arith.constant 0 : i32
    %c0_i32_2 = arith.constant 0 : i32
    return %c0_i32, %c0_i32_0, %c0_i32_1 : i32, i32, i32
  }
  func.func @transform_9(%arg0: i32) -> (i32, i32, i32) {
    %c0_i32 = arith.constant 0 : i32
    %c0_i32_0 = arith.constant 0 : i32
    %c0_i32_1 = arith.constant 0 : i32
    %c0_i32_2 = arith.constant 0 : i32
    return %c0_i32, %c0_i32_0, %c0_i32_1 : i32, i32, i32
  }
  func.func @transform_10(%arg0: i32) -> (i32, i32, i32) {
    %c0_i32 = arith.constant 0 : i32
    %c0_i32_0 = arith.constant 0 : i32
    %c0_i32_1 = arith.constant 0 : i32
    %c0_i32_2 = arith.constant 0 : i32
    return %c0_i32, %c0_i32_0, %c0_i32_1 : i32, i32, i32
  }
  func.func @transform_11(%arg0: i32) -> (i32, i32, i32) {
    %c0_i32 = arith.constant 0 : i32
    %c0_i32_0 = arith.constant 0 : i32
    %c0_i32_1 = arith.constant 0 : i32
    %c0_i32_2 = arith.constant 0 : i32
    return %c0_i32, %c0_i32_0, %c0_i32_1 : i32, i32, i32
  }
  func.func @transform_12(%arg0: i32) -> (i32, i32, i32) {
    %c0_i32 = arith.constant 0 : i32
    %c0_i32_0 = arith.constant 0 : i32
    %c0_i32_1 = arith.constant 0 : i32
    %c0_i32_2 = arith.constant 0 : i32
    return %c0_i32, %c0_i32_0, %c0_i32_1 : i32, i32, i32
  }
  func.func @transform_13(%arg0: i32) -> (i32, i32, i32) {
    %c0_i32 = arith.constant 0 : i32
    %c0_i32_0 = arith.constant 0 : i32
    %c0_i32_1 = arith.constant 0 : i32
    %c0_i32_2 = arith.constant 0 : i32
    return %c0_i32, %c0_i32_0, %c0_i32_1 : i32, i32, i32
  }
  func.func @transform_14(%arg0: i32) -> (i32, i32, i32) {
    %c0_i32 = arith.constant 0 : i32
    %c0_i32_0 = arith.constant 0 : i32
    %c0_i32_1 = arith.constant 0 : i32
    %c0_i32_2 = arith.constant 0 : i32
    return %c0_i32, %c0_i32_0, %c0_i32_1 : i32, i32, i32
  }
  func.func @transform_15(%arg0: i32) -> (i32, i32, i32) {
    %c0_i32 = arith.constant 0 : i32
    %c0_i32_0 = arith.constant 0 : i32
    %c0_i32_1 = arith.constant 0 : i32
    %c0_i32_2 = arith.constant 0 : i32
    return %c0_i32, %c0_i32_0, %c0_i32_1 : i32, i32, i32
  }
  func.func @transform_16(%arg0: i32) -> (i32, i32) {
    %c0_i32 = arith.constant 0 : i32
    %c0_i32_0 = arith.constant 0 : i32
    %c0_i32_1 = arith.constant 0 : i32
    return %c0_i32, %c0_i32_0 : i32, i32
  }
  func.func @transform_17(%arg0: i32) -> (i32, i32) {
    %c0_i32 = arith.constant 0 : i32
    %c0_i32_0 = arith.constant 0 : i32
    %c0_i32_1 = arith.constant 0 : i32
    return %c0_i32, %c0_i32_0 : i32, i32
  }
  func.func @transform_18(%arg0: i32) -> (i32, i32) {
    %c0_i32 = arith.constant 0 : i32
    %c0_i32_0 = arith.constant 0 : i32
    %c0_i32_1 = arith.constant 0 : i32
    return %c0_i32, %c0_i32_0 : i32, i32
  }
  func.func @transform_19(%arg0: i32) -> (i32, i32) {
    %c0_i32 = arith.constant 0 : i32
    %c0_i32_0 = arith.constant 0 : i32
    %c0_i32_1 = arith.constant 0 : i32
    return %c0_i32, %c0_i32_0 : i32, i32
  }
  func.func @transform_20(%arg0: i32) -> (i32, i32) {
    %c0_i32 = arith.constant 0 : i32
    %c0_i32_0 = arith.constant 0 : i32
    %c0_i32_1 = arith.constant 0 : i32
    return %c0_i32, %c0_i32_0 : i32, i32
  }
}

</mosaic_0001>

<llo_original>
// kernel: transformer_forward.1
$region0: #{transformer_forward.1}
  #allocation0 [shape = 'u32[]', space=smem, size = 0x4, offset = 0x4, fixed_abs, tag = 'smem constant byte address 0x4 - core index']
  #allocation1 [shape = 'u32[144,128]{1,0:T(1,128)}', space=vmem, size = 0x12000, scoped, tag = 'internal scratch']
  #allocation2 [shape = 'f32[16,32]{1,0:T(8,128)}', space=vmem, size = 0x2000, scoped, tag = 'scratch operand']
  %s0 = inlined_call_operand.vmem [shape: s32[16,1], index: 0, kind: input, shape index: {}]
  %s1 = inlined_call_operand.vmem [shape: s32[16,1], index: 1, kind: input, shape index: {}]
  %s2 = inlined_call_operand.vmem [shape: bf16[64,32], index: 2, kind: input, shape index: {}]
  %s3 = inlined_call_operand.vmem [shape: f32[8,32], index: 3, kind: input, shape index: {}]
  %s4 = inlined_call_operand.vmem [shape: f32[2,1,32], index: 4, kind: input, shape index: {}]
  %s5 = inlined_call_operand.vmem [shape: f32[2,1,32], index: 5, kind: input, shape index: {}]
  %s6 = inlined_call_operand.vmem [shape: bf16[2,32,96], index: 6, kind: input, shape index: {}]
  %s7 = inlined_call_operand.vmem [shape: f32[2,1,96], index: 7, kind: input, shape index: {}]
  %s8 = inlined_call_operand.vmem [shape: bf16[2,32,32], index: 8, kind: input, shape index: {}]
  %s9 = inlined_call_operand.vmem [shape: f32[2,1,32], index: 9, kind: input, shape index: {}]
  %s10 = inlined_call_operand.vmem [shape: f32[2,1,32], index: 10, kind: input, shape index: {}]
  %s11 = inlined_call_operand.vmem [shape: f32[2,1,32], index: 11, kind: input, shape index: {}]
  %s12 = inlined_call_operand.vmem [shape: bf16[2,32,64], index: 12, kind: input, shape index: {}]
  %s13 = inlined_call_operand.vmem [shape: f32[2,1,64], index: 13, kind: input, shape index: {}]
  %s14 = inlined_call_operand.vmem [shape: bf16[2,64,32], index: 14, kind: input, shape index: {}]
  %s15 = inlined_call_operand.vmem [shape: f32[2,1,32], index: 15, kind: input, shape index: {}]
  %s16 = inlined_call_operand.vmem [shape: f32[1,32], index: 16, kind: input, shape index: {}]
  %s17 = inlined_call_operand.vmem [shape: f32[1,32], index: 17, kind: input, shape index: {}]
  %s18 = inlined_call_operand.vmem [shape: bf16[32,64], index: 18, kind: input, shape index: {}]
  %s19 = inlined_call_operand.vmem [shape: f32[1,64], index: 19, kind: input, shape index: {}]
  %s20 = inlined_call_operand.hbm [shape: f32[2,8], index: 20, kind: output, shape index: {}]
  %s21 = sld [smem:[#allocation0]]
  $region90: #{transformer_forward.1} parent=0
    _
  %s23 = ssub.s32 1, %s21
  %s24 = scalar_select 0, %s23, %s21
  $region1: #{transformer_forward.1} parent=0
    #allocation3 [shape = 'u8[1024]{0}', space=vmem, size = 0x400, scoped, tag = 'output window, operand 0, single buffered']
    #allocation4 [shape = 's32[1]{0}', space=sflag, size = 0x4, scoped, tag = 'scoped memory for transformer_forward.1']
    %25 = vsyncpa [#allocation4], 0
    // Predicated region
    $region2: #{transformer_forward.1} parent=1 // pred_check
      _
    $region3: #{transformer_forward.1} parent=1 // pred_check_branch
      %27 = sbr.rel (0) target = $region5
    $region4: #{transformer_forward.1} parent=1 // pred_region
      _
    $region5: #{transformer_forward.1} parent=1 // pred_fallthru
      _
    // Predicated region
    $region6: #{transformer_forward.1} parent=1 // pred_check
      _
    $region7: #{transformer_forward.1} parent=1 // pred_check_branch
      %29 = sbr.rel (0) target = $region9
    $region8: #{transformer_forward.1} parent=1 // pred_region
      _
    $region9: #{transformer_forward.1} parent=1 // pred_fallthru
      _
    // Predicated region
    $region10: #{transformer_forward.1} parent=1 // pred_check
      _
    $region11: #{transformer_forward.1} parent=1 // pred_check_branch
      %31 = sbr.rel (0) target = $region13
    $region12: #{transformer_forward.1} parent=1 // pred_region
      _
    $region13: #{transformer_forward.1} parent=1 // pred_fallthru
      _
    // Predicated region
    $region14: #{transformer_forward.1} parent=1 // pred_check
      _
    $region15: #{transformer_forward.1} parent=1 // pred_check_branch
      %33 = sbr.rel (0) target = $region17
    $region16: #{transformer_forward.1} parent=1 // pred_region
      _
    $region17: #{transformer_forward.1} parent=1 // pred_fallthru
      _
    // Predicated region
    $region18: #{transformer_forward.1} parent=1 // pred_check
      _
    $region19: #{transformer_forward.1} parent=1 // pred_check_branch
      %35 = sbr.rel (0) target = $region21
    $region20: #{transformer_forward.1} parent=1 // pred_region
      _
    $region21: #{transformer_forward.1} parent=1 // pred_fallthru
      _
    // Predicated region
    $region22: #{transformer_forward.1} parent=1 // pred_check
      _
    $region23: #{transformer_forward.1} parent=1 // pred_check_branch
      %37 = sbr.rel (0) target = $region25
    $region24: #{transformer_forward.1} parent=1 // pred_region
      _
    $region25: #{transformer_forward.1} parent=1 // pred_fallthru
      _
    // Predicated region
    $region26: #{transformer_forward.1} parent=1 // pred_check
      _
    $region27: #{transformer_forward.1} parent=1 // pred_check_branch
      %39 = sbr.rel (0) target = $region29
    $region28: #{transformer_forward.1} parent=1 // pred_region
      _
    $region29: #{transformer_forward.1} parent=1 // pred_fallthru
      _
    // Predicated region
    $region30: #{transformer_forward.1} parent=1 // pred_check
      _
    $region31: #{transformer_forward.1} parent=1 // pred_check_branch
      %41 = sbr.rel (0) target = $region33
    $region32: #{transformer_forward.1} parent=1 // pred_region
      _
    $region33: #{transformer_forward.1} parent=1 // pred_fallthru
      _
    // Predicated region
    $region34: #{transformer_forward.1} parent=1 // pred_check
      _
    $region35: #{transformer_forward.1} parent=1 // pred_check_branch
      %43 = sbr.rel (0) target = $region37
    $region36: #{transformer_forward.1} parent=1 // pred_region
      _
    $region37: #{transformer_forward.1} parent=1 // pred_fallthru
      _
    // Predicated region
    $region38: #{transformer_forward.1} parent=1 // pred_check
      _
    $region39: #{transformer_forward.1} parent=1 // pred_check_branch
      %45 = sbr.rel (0) target = $region41
    $region40: #{transformer_forward.1} parent=1 // pred_region
      _
    $region41: #{transformer_forward.1} parent=1 // pred_fallthru
      _
    // Predicated region
    $region42: #{transformer_forward.1} parent=1 // pred_check
      _
    $region43: #{transformer_forward.1} parent=1 // pred_check_branch
      %47 = sbr.rel (0) target = $region45
    $region44: #{transformer_forward.1} parent=1 // pred_region
      _
    $region45: #{transformer_forward.1} parent=1 // pred_fallthru
      _
    // Predicated region
    $region46: #{transformer_forward.1} parent=1 // pred_check
      _
    $region47: #{transformer_forward.1} parent=1 // pred_check_branch
      %49 = sbr.rel (0) target = $region49
    $region48: #{transformer_forward.1} parent=1 // pred_region
      _
    $region49: #{transformer_forward.1} parent=1 // pred_fallthru
      _
    // Predicated region
    $region50: #{transformer_forward.1} parent=1 // pred_check
      _
    $region51: #{transformer_forward.1} parent=1 // pred_check_branch
      %51 = sbr.rel (0) target = $region53
    $region52: #{transformer_forward.1} parent=1 // pred_region
      _
    $region53: #{transformer_forward.1} parent=1 // pred_fallthru
      _
    // Predicated region
    $region54: #{transformer_forward.1} parent=1 // pred_check
      _
    $region55: #{transformer_forward.1} parent=1 // pred_check_branch
      %53 = sbr.rel (0) target = $region57
    $region56: #{transformer_forward.1} parent=1 // pred_region
      _
    $region57: #{transformer_forward.1} parent=1 // pred_fallthru
      _
    // Predicated region
    $region58: #{transformer_forward.1} parent=1 // pred_check
      _
    $region59: #{transformer_forward.1} parent=1 // pred_check_branch
      %55 = sbr.rel (0) target = $region61
    $region60: #{transformer_forward.1} parent=1 // pred_region
      _
    $region61: #{transformer_forward.1} parent=1 // pred_fallthru
      _
    // Predicated region
    $region62: #{transformer_forward.1} parent=1 // pred_check
      _
    $region63: #{transformer_forward.1} parent=1 // pred_check_branch
      %57 = sbr.rel (0) target = $region65
    $region64: #{transformer_forward.1} parent=1 // pred_region
      _
    $region65: #{transformer_forward.1} parent=1 // pred_fallthru
      _
    // Predicated region
    $region66: #{transformer_forward.1} parent=1 // pred_check
      _
    $region67: #{transformer_forward.1} parent=1 // pred_check_branch
      %59 = sbr.rel (0) target = $region69
    $region68: #{transformer_forward.1} parent=1 // pred_region
      _
    $region69: #{transformer_forward.1} parent=1 // pred_fallthru
      _
    // Predicated region
    $region70: #{transformer_forward.1} parent=1 // pred_check
      _
    $region71: #{transformer_forward.1} parent=1 // pred_check_branch
      %61 = sbr.rel (0) target = $region73
    $region72: #{transformer_forward.1} parent=1 // pred_region
      _
    $region73: #{transformer_forward.1} parent=1 // pred_fallthru
      _
    // Predicated region
    $region74: #{transformer_forward.1} parent=1 // pred_check
      _
    $region75: #{transformer_forward.1} parent=1 // pred_check_branch
      %63 = sbr.rel (0) target = $region77
    $region76: #{transformer_forward.1} parent=1 // pred_region
      _
    $region77: #{transformer_forward.1} parent=1 // pred_fallthru
      _
    // Predicated region
    $region78: #{transformer_forward.1} parent=1 // pred_check
      _
    $region79: #{transformer_forward.1} parent=1 // pred_check_branch
      %65 = sbr.rel (0) target = $region81
    $region80: #{transformer_forward.1} parent=1 // pred_region
      _
    $region81: #{transformer_forward.1} parent=1 // pred_fallthru
      _
    %v67 = vld [vmem:[%s0] sm:$0xff]
    %v68 = vld [vmem:[%s0 + $0x8] sm:$0xff]
    %v69 = vlaneseq
    %v70 = vand.u32 %v69, 127
    %71 = vset.pattern.permute.xlu0 0
    %72 = vperm.xlu0 %71, %v67
    %v73 = vpop.permute.xlu0 %72
    %74 = vset.pattern.permute.xlu0 0
    %75 = vperm.xlu0 %74, %v68
    %v76 = vpop.permute.xlu0 %75
    %vm77 = vcmp.eq.s32.totalorder %v70, %v73
    %vm78 = vcmp.eq.s32.totalorder %v70, %v76
    %v79 = vsel %vm77, 1, 0
    %v80 = vsel %vm78, 1, 0
    %v81 = vcvt.s32.f32 %v79
    %v82 = vcvt.s32.f32 %v80
    %v83 = vpack.c.bf16 %v82, %v81
    %v84 = vld [vmem:[%s2] sm:$0xf]
    %v85 = vld [vmem:[%s2 + $0x4] sm:$0xf]
    %v86 = vld [vmem:[%s2 + $0x8] sm:$0xf]
    %v87 = vld [vmem:[%s2 + $0xc] sm:$0xf]
    %v88 = vld [vmem:[%s2 + $0x10] sm:$0xf]
    %v89 = vld [vmem:[%s2 + $0x14] sm:$0xf]
    %v90 = vld [vmem:[%s2 + $0x18] sm:$0xf]
    %v91 = vld [vmem:[%s2 + $0x1c] sm:$0xf]
    %v100 = vunpack.c.l.b16 %v84
    %v101 = vunpack.c.l.b16 %v85
    %v102 = vunpack.c.l.b16 %v86
    %v103 = vunpack.c.l.b16 %v87
    %v104 = vunpack.c.l.b16 %v88
    %v105 = vunpack.c.l.b16 %v89
    %v106 = vunpack.c.l.b16 %v90
    %v107 = vunpack.c.l.b16 %v91
    %v108 = vpack.c.b16 %v101, %v100
    %v109 = vpack.c.b16 %v103, %v102
    %v110 = vpack.c.b16 %v105, %v104
    %v111 = vpack.c.b16 %v107, %v106
    %vm116 = vcmask 523264
    %v118 = vsel %vm116, %v83, 0
    %120 = vmatprep.subr.bf16.mxu0 0
    %121 = vmatpush1.bf16.msra.mxu0 %v108
    %122 = vmatprep.subr.bf16.mxu0 0
    %123 = vmatpush1.bf16.msra.mxu0 %v109
    %124 = vmatprep.subr.bf16.mxu0 0
    %125 = vmatpush1.bf16.msra.mxu0 %v110
    %126 = vmatprep.subr.bf16.mxu0 0
    %127 = vmatpush1.bf16.msra.mxu0 %v111
    %128 = vmatprep.subr.bf16.mxu0 0
    %129 = vmatpush1.bf16.msra.mxu0 0
    %130 = vmatprep.subr.bf16.mxu0 0
    %131 = vmatpush1.bf16.msra.mxu0 0
    %132 = vmatprep.subr.bf16.mxu0 0
    %133 = vmatpush1.bf16.msra.mxu0 0
    %134 = vmatprep.subr.bf16.mxu0 0
    %135 = vmatpush1.bf16.msra.mxu0 0
    %136 = vmatprep.subr.bf16.mxu0 0
    %137 = vmatpush1.bf16.msra.mxu0 0
    %138 = vmatprep.subr.bf16.mxu0 0
    %139 = vmatpush1.bf16.msra.mxu0 0
    %140 = vmatprep.subr.bf16.mxu0 0
    %141 = vmatpush1.bf16.msra.mxu0 0
    %142 = vmatprep.subr.bf16.mxu0 0
    %143 = vmatpush1.bf16.msra.mxu0 0
    %144 = vmatprep.subr.bf16.mxu0 0
    %145 = vmatpush1.bf16.msra.mxu0 0
    %146 = vmatprep.subr.bf16.mxu0 0
    %147 = vmatpush1.bf16.msra.mxu0 0
    %148 = vmatprep.subr.bf16.mxu0 0
    %149 = vmatpush1.bf16.msra.mxu0 0
    %150 = vmatprep.subr.bf16.mxu0 0
    %151 = vmatpush1.bf16.msra.mxu0 0
    %152 = vmatprep.mubr.bf16.mxu0 0
    %153 = vmatmul.mubr.bf16.gmra.mrb[0].mxu0 %v118
    %v154 = vpop.f32.mrb[0].mxu0
    %v155 = vadd.f32 0.0, %v154
    %v156 = vpop.f32.mrb[0].mxu0
    %v157 = vpop.f32.mrb[0].mxu0
    %v158 = vadd.f32 0.0, %v157
    %v159 = vpop.f32.mrb[0].mxu0
    %160 = vdwg.mxu0
    %v161 = vmul.f32 %v155, 5.656854
    %v162 = vmul.f32 %v158, 5.656854
    %v163 = vld [vmem:[%s3] sm:$0xff]
    %v164 = vadd.f32 %v161, %v163
    %v165 = vadd.f32 %v162, %v163
    %v166 = vlaneseq
    %v167 = vshrl.u32 %v166, 7
    %vm168 = vcmp.gt.s32.totalorder %v70, %v167
    %v169 = vsel %vm168, -1e+30, 0.0
    %v170 = vld [vmem:[%s4] sm:$0x1]
    %v171 = vld [vmem:[%s5] sm:$0x1]
    %vm172 = vcmask 261120
    %v173 = vsel %vm172, %v164, 0.0
    %174 = vadd.xlane.f32.xlu0 %v173
    %v175 = vpop.xlane.xlu0 %174
    %v176 = vsel %vm172, %v165, 0.0
    %177 = vadd.xlane.f32.xlu0 %v176
    %v178 = vpop.xlane.xlu0 %177
    %v179 = vrcp.pop 32.0
    %v180 = vmul.f32 %v175, %v179
    %v181 = vmul.f32 %v178, %v179
    %v182 = vsub.f32 %v164, %v180
    %v183 = vsub.f32 %v165, %v181
    %v184 = vmul.f32 %v182, %v182
    %v185 = vmul.f32 %v183, %v183
    %v186 = vsel %vm172, %v184, 0.0
    %187 = vadd.xlane.f32.xlu0 %v186
    %v188 = vpop.xlane.xlu0 %187
    %v189 = vsel %vm172, %v185, 0.0
    %190 = vadd.xlane.f32.xlu0 %v189
    %v191 = vpop.xlane.xlu0 %190
    %v192 = vmul.f32 %v188, %v179
    %v193 = vmul.f32 %v191, %v179
    %v194 = vadd.f32 %v192, 1e-05
    %v195 = vadd.f32 %v193, 1e-05
    %v196 = vrsqrt.pop %v194
    %v197 = vrsqrt.pop %v195
    %v198 = vmul.f32 %v182, %v196
    %v199 = vmul.f32 %v183, %v197
    %v201 = vlaneseq
    %v202 = vshrl.u32 %v201, 7
    %v203 = vsub.s32 0, %v202
    %v204 = vrot.slane %v170, %v203
    %v206 = vmul.f32 %v198, %v204
    %v207 = vmul.f32 %v199, %v204
    %v209 = vlaneseq
    %v210 = vshrl.u32 %v209, 7
    %v211 = vsub.s32 0, %v210
    %v212 = vrot.slane %v171, %v211
    %v214 = vadd.f32 %v206, %v212
    %v215 = vadd.f32 %v207, %v212
    %v216 = vpack.c.bf16 %v215, %v214
    %v217 = vld [vmem:[%s6] sm:$0xf]
    %v218 = vld [vmem:[%s6 + $0x4] sm:$0xf]
    %v219 = vld [vmem:[%s6 + $0x8] sm:$0xf]
    %v220 = vld [vmem:[%s6 + $0xc] sm:$0xf]
    %v221 = vld [vmem:[%s7] sm:$0x1]
    %v223 = vlaneseq
    %v224 = vshrl.u32 %v223, 7
    %v225 = vsub.s32 0, %v224
    %v226 = vrot.slane %v221, %v225
    %v232 = vunpack.c.l.b16 %v217
    %v233 = vunpack.c.l.b16 %v218
    %v234 = vunpack.c.l.b16 %v219
    %v235 = vunpack.c.l.b16 %v220
    %v236 = vpack.c.b16 %v233, %v232
    %v237 = vpack.c.b16 %v235, %v234
    %v241 = vsel %vm172, %v216, 0
    %243 = vmatprep.subr.bf16.mxu0 0
    %244 = vmatpush1.bf16.msra.mxu0 %v236
    %245 = vmatprep.subr.bf16.mxu0 0
    %246 = vmatpush1.bf16.msra.mxu0 %v237
    %247 = vmatprep.subr.bf16.mxu0 0
    %248 = vmatpush1.bf16.msra.mxu0 0
    %249 = vmatprep.subr.bf16.mxu0 0
    %250 = vmatpush1.bf16.msra.mxu0 0
    %251 = vmatprep.subr.bf16.mxu0 0
    %252 = vmatpush1.bf16.msra.mxu0 0
    %253 = vmatprep.subr.bf16.mxu0 0
    %254 = vmatpush1.bf16.msra.mxu0 0
    %255 = vmatprep.subr.bf16.mxu0 0
    %256 = vmatpush1.bf16.msra.mxu0 0
    %257 = vmatprep.subr.bf16.mxu0 0
    %258 = vmatpush1.bf16.msra.mxu0 0
    %259 = vmatprep.subr.bf16.mxu0 0
    %260 = vmatpush1.bf16.msra.mxu0 0
    %261 = vmatprep.subr.bf16.mxu0 0
    %262 = vmatpush1.bf16.msra.mxu0 0
    %263 = vmatprep.subr.bf16.mxu0 0
    %264 = vmatpush1.bf16.msra.mxu0 0
    %265 = vmatprep.subr.bf16.mxu0 0
    %266 = vmatpush1.bf16.msra.mxu0 0
    %267 = vmatprep.subr.bf16.mxu0 0
    %268 = vmatpush1.bf16.msra.mxu0 0
    %269 = vmatprep.subr.bf16.mxu0 0
    %270 = vmatpush1.bf16.msra.mxu0 0
    %271 = vmatprep.subr.bf16.mxu0 0
    %272 = vmatpush1.bf16.msra.mxu0 0
    %273 = vmatprep.subr.bf16.mxu0 0
    %274 = vmatpush1.bf16.msra.mxu0 0
    %275 = vmatprep.mubr.bf16.mxu0 0
    %276 = vmatmul.mubr.bf16.gmra.mrb[0].mxu0 %v241
    %v277 = vpop.f32.mrb[0].mxu0
    %v278 = vadd.f32 %v226, %v277
    %v279 = vpop.f32.mrb[0].mxu0
    %v280 = vpop.f32.mrb[0].mxu0
    %v281 = vadd.f32 %v226, %v280
    %v282 = vpop.f32.mrb[0].mxu0
    %283 = vdwg.mxu0
    %v284 = vpack.c.bf16 %v281, %v278
    %286 = vrot.lane.b32.xlu0 %v284, 120
    %v287 = vpop.permute.xlu0 %286
    %288 = vrot.lane.b32.xlu0 %v284, 112
    %v289 = vpop.permute.xlu0 %288
    %290 = vrot.lane.b32.xlu0 %v284, 104
    %v291 = vpop.permute.xlu0 %290
    %292 = vrot.lane.b32.xlu0 %v284, 96
    %v293 = vpop.permute.xlu0 %292
    %294 = vrot.lane.b32.xlu0 %v287, 96
    %v295 = vpop.permute.xlu0 %294
    %296 = vrot.lane.b32.xlu0 %v289, 96
    %v297 = vpop.permute.xlu0 %296
    %298 = vrot.lane.b32.xlu0 %v291, 96
    %v299 = vpop.permute.xlu0 %298
    %304 = vxpose.xlu0.c.b16.start [1/8] %v293, 128
    %305 = vxpose.xlu0.c.b16.cont [2/8] 0, 128
    %306 = vxpose.xlu0.c.b16.cont [3/8] 0, 128
    %307 = vxpose.xlu0.c.b16.cont [4/8] 0, 128
    %308 = vxpose.xlu0.c.b16.cont [5/8] 0, 128
    %309 = vxpose.xlu0.c.b16.cont [6/8] 0, 128
    %310 = vxpose.xlu0.c.b16.cont [7/8] 0, 128
    %311 = vxpose.xlu0.c.b16.end [8/8] 0, 128
    %v312 = vpop.trf.xlu0
    %v313 = vpop.trf.xlu0
    %v314 = vpop.trf.xlu0
    %v315 = vpop.trf.xlu0
    %v316 = vpop.trf.xlu0
    %v317 = vpop.trf.xlu0
    %v318 = vpop.trf.xlu0
    %v319 = vpop.trf.xlu0
    %320 = vxpose.xlu0.c.b16.start [1/8] %v295, 128
    %321 = vxpose.xlu0.c.b16.cont [2/8] 0, 128
    %322 = vxpose.xlu0.c.b16.cont [3/8] 0, 128
    %323 = vxpose.xlu0.c.b16.cont [4/8] 0, 128
    %324 = vxpose.xlu0.c.b16.cont [5/8] 0, 128
    %325 = vxpose.xlu0.c.b16.cont [6/8] 0, 128
    %326 = vxpose.xlu0.c.b16.cont [7/8] 0, 128
    %327 = vxpose.xlu0.c.b16.end [8/8] 0, 128
    %v328 = vpop.trf.xlu0
    %v329 = vpop.trf.xlu0
    %v330 = vpop.trf.xlu0
    %v331 = vpop.trf.xlu0
    %v332 = vpop.trf.xlu0
    %v333 = vpop.trf.xlu0
    %v334 = vpop.trf.xlu0
    %v335 = vpop.trf.xlu0
    %336 = vxpose.xlu0.c.b16.start [1/8] %v297, 128
    %337 = vxpose.xlu0.c.b16.cont [2/8] 0, 128
    %338 = vxpose.xlu0.c.b16.cont [3/8] 0, 128
    %339 = vxpose.xlu0.c.b16.cont [4/8] 0, 128
    %340 = vxpose.xlu0.c.b16.cont [5/8] 0, 128
    %341 = vxpose.xlu0.c.b16.cont [6/8] 0, 128
    %342 = vxpose.xlu0.c.b16.cont [7/8] 0, 128
    %343 = vxpose.xlu0.c.b16.end [8/8] 0, 128
    %v344 = vpop.trf.xlu0
    %v345 = vpop.trf.xlu0
    %v346 = vpop.trf.xlu0
    %v347 = vpop.trf.xlu0
    %v348 = vpop.trf.xlu0
    %v349 = vpop.trf.xlu0
    %v350 = vpop.trf.xlu0
    %v351 = vpop.trf.xlu0
    %352 = vxpose.xlu0.c.b16.start [1/8] %v299, 128
    %353 = vxpose.xlu0.c.b16.cont [2/8] 0, 128
    %354 = vxpose.xlu0.c.b16.cont [3/8] 0, 128
    %355 = vxpose.xlu0.c.b16.cont [4/8] 0, 128
    %356 = vxpose.xlu0.c.b16.cont [5/8] 0, 128
    %357 = vxpose.xlu0.c.b16.cont [6/8] 0, 128
    %358 = vxpose.xlu0.c.b16.cont [7/8] 0, 128
    %359 = vxpose.xlu0.c.b16.end [8/8] 0, 128
    %v360 = vpop.trf.xlu0
    %v361 = vpop.trf.xlu0
    %v362 = vpop.trf.xlu0
    %v363 = vpop.trf.xlu0
    %v364 = vpop.trf.xlu0
    %v365 = vpop.trf.xlu0
    %v366 = vpop.trf.xlu0
    %v367 = vpop.trf.xlu0
    %vm368 = vcmask 64512
    %v370 = vsel %vm368, %v284, 0
    %vm372 = vcmask 1043456
    %v374 = vsel %vm372, %v312, 0
    %376 = vmatprep.subr.bf16.mxu0 0
    %377 = vmatpush1.bf16.msra.mxu0 %v374
    %378 = vmatprep.subr.bf16.mxu0 0
    %379 = vmatpush1.bf16.msra.mxu0 0
    %380 = vmatprep.subr.bf16.mxu0 0
    %381 = vmatpush1.bf16.msra.mxu0 0
    %382 = vmatprep.subr.bf16.mxu0 0
    %383 = vmatpush1.bf16.msra.mxu0 0
    %384 = vmatprep.subr.bf16.mxu0 0
    %385 = vmatpush1.bf16.msra.mxu0 0
    %386 = vmatprep.subr.bf16.mxu0 0
    %387 = vmatpush1.bf16.msra.mxu0 0
    %388 = vmatprep.subr.bf16.mxu0 0
    %389 = vmatpush1.bf16.msra.mxu0 0
    %390 = vmatprep.subr.bf16.mxu0 0
    %391 = vmatpush1.bf16.msra.mxu0 0
    %392 = vmatprep.subr.bf16.mxu0 0
    %393 = vmatpush1.bf16.msra.mxu0 0
    %394 = vmatprep.subr.bf16.mxu0 0
    %395 = vmatpush1.bf16.msra.mxu0 0
    %396 = vmatprep.subr.bf16.mxu0 0
    %397 = vmatpush1.bf16.msra.mxu0 0
    %398 = vmatprep.subr.bf16.mxu0 0
    %399 = vmatpush1.bf16.msra.mxu0 0
    %400 = vmatprep.subr.bf16.mxu0 0
    %401 = vmatpush1.bf16.msra.mxu0 0
    %402 = vmatprep.subr.bf16.mxu0 0
    %403 = vmatpush1.bf16.msra.mxu0 0
    %404 = vmatprep.subr.bf16.mxu0 0
    %405 = vmatpush1.bf16.msra.mxu0 0
    %406 = vmatprep.subr.bf16.mxu0 0
    %407 = vmatpush1.bf16.msra.mxu0 0
    %408 = vmatprep.mubr.bf16.mxu0 0
    %409 = vmatmul.mubr.bf16.gmra.mrb[0].mxu0 %v370
    %v410 = vpop.f32.mrb[0].mxu0
    %v411 = vadd.f32 0.0, %v410
    %v412 = vpop.f32.mrb[0].mxu0
    %v413 = vpop.f32.mrb[0].mxu0
    %v414 = vpop.f32.mrb[0].mxu0
    %415 = vdwg.mxu0
    %v417 = vsel %vm368, %v287, 0
    %v420 = vsel %vm372, %v328, 0
    %422 = vmatprep.subr.bf16.mxu0 0
    %423 = vmatpush1.bf16.msra.mxu0 %v420
    %424 = vmatprep.subr.bf16.mxu0 0
    %425 = vmatpush1.bf16.msra.mxu0 0
    %426 = vmatprep.subr.bf16.mxu0 0
    %427 = vmatpush1.bf16.msra.mxu0 0
    %428 = vmatprep.subr.bf16.mxu0 0
    %429 = vmatpush1.bf16.msra.mxu0 0
    %430 = vmatprep.subr.bf16.mxu0 0
    %431 = vmatpush1.bf16.msra.mxu0 0
    %432 = vmatprep.subr.bf16.mxu0 0
    %433 = vmatpush1.bf16.msra.mxu0 0
    %434 = vmatprep.subr.bf16.mxu0 0
    %435 = vmatpush1.bf16.msra.mxu0 0
    %436 = vmatprep.subr.bf16.mxu0 0
    %437 = vmatpush1.bf16.msra.mxu0 0
    %438 = vmatprep.subr.bf16.mxu0 0
    %439 = vmatpush1.bf16.msra.mxu0 0
    %440 = vmatprep.subr.bf16.mxu0 0
    %441 = vmatpush1.bf16.msra.mxu0 0
    %442 = vmatprep.subr.bf16.mxu0 0
    %443 = vmatpush1.bf16.msra.mxu0 0
    %444 = vmatprep.subr.bf16.mxu0 0
    %445 = vmatpush1.bf16.msra.mxu0 0
    %446 = vmatprep.subr.bf16.mxu0 0
    %447 = vmatpush1.bf16.msra.mxu0 0
    %448 = vmatprep.subr.bf16.mxu0 0
    %449 = vmatpush1.bf16.msra.mxu0 0
    %450 = vmatprep.subr.bf16.mxu0 0
    %451 = vmatpush1.bf16.msra.mxu0 0
    %452 = vmatprep.subr.bf16.mxu0 0
    %453 = vmatpush1.bf16.msra.mxu0 0
    %454 = vmatprep.mubr.bf16.mxu0 0
    %455 = vmatmul.mubr.bf16.gmra.mrb[0].mxu0 %v417
    %v456 = vpop.f32.mrb[0].mxu0
    %v457 = vadd.f32 0.0, %v456
    %v458 = vpop.f32.mrb[0].mxu0
    %v459 = vpop.f32.mrb[0].mxu0
    %v460 = vpop.f32.mrb[0].mxu0
    %461 = vdwg.mxu0
    %v463 = vsel %vm368, %v289, 0
    %v466 = vsel %vm372, %v344, 0
    %468 = vmatprep.subr.bf16.mxu0 0
    %469 = vmatpush1.bf16.msra.mxu0 %v466
    %470 = vmatprep.subr.bf16.mxu0 0
    %471 = vmatpush1.bf16.msra.mxu0 0
    %472 = vmatprep.subr.bf16.mxu0 0
    %473 = vmatpush1.bf16.msra.mxu0 0
    %474 = vmatprep.subr.bf16.mxu0 0
    %475 = vmatpush1.bf16.msra.mxu0 0
    %476 = vmatprep.subr.bf16.mxu0 0
    %477 = vmatpush1.bf16.msra.mxu0 0
    %478 = vmatprep.subr.bf16.mxu0 0
    %479 = vmatpush1.bf16.msra.mxu0 0
    %480 = vmatprep.subr.bf16.mxu0 0
    %481 = vmatpush1.bf16.msra.mxu0 0
    %482 = vmatprep.subr.bf16.mxu0 0
    %483 = vmatpush1.bf16.msra.mxu0 0
    %484 = vmatprep.subr.bf16.mxu0 0
    %485 = vmatpush1.bf16.msra.mxu0 0
    %486 = vmatprep.subr.bf16.mxu0 0
    %487 = vmatpush1.bf16.msra.mxu0 0
    %488 = vmatprep.subr.bf16.mxu0 0
    %489 = vmatpush1.bf16.msra.mxu0 0
    %490 = vmatprep.subr.bf16.mxu0 0
    %491 = vmatpush1.bf16.msra.mxu0 0
    %492 = vmatprep.subr.bf16.mxu0 0
    %493 = vmatpush1.bf16.msra.mxu0 0
    %494 = vmatprep.subr.bf16.mxu0 0
    %495 = vmatpush1.bf16.msra.mxu0 0
    %496 = vmatprep.subr.bf16.mxu0 0
    %497 = vmatpush1.bf16.msra.mxu0 0
    %498 = vmatprep.subr.bf16.mxu0 0
    %499 = vmatpush1.bf16.msra.mxu0 0
    %500 = vmatprep.mubr.bf16.mxu0 0
    %501 = vmatmul.mubr.bf16.gmra.mrb[0].mxu0 %v463
    %v502 = vpop.f32.mrb[0].mxu0
    %v503 = vadd.f32 0.0, %v502
    %v504 = vpop.f32.mrb[0].mxu0
    %v505 = vpop.f32.mrb[0].mxu0
    %v506 = vpop.f32.mrb[0].mxu0
    %507 = vdwg.mxu0
    %v509 = vsel %vm368, %v291, 0
    %v512 = vsel %vm372, %v360, 0
    %514 = vmatprep.subr.bf16.mxu0 0
    %515 = vmatpush1.bf16.msra.mxu0 %v512
    %516 = vmatprep.subr.bf16.mxu0 0
    %517 = vmatpush1.bf16.msra.mxu0 0
    %518 = vmatprep.subr.bf16.mxu0 0
    %519 = vmatpush1.bf16.msra.mxu0 0
    %520 = vmatprep.subr.bf16.mxu0 0
    %521 = vmatpush1.bf16.msra.mxu0 0
    %522 = vmatprep.subr.bf16.mxu0 0
    %523 = vmatpush1.bf16.msra.mxu0 0
    %524 = vmatprep.subr.bf16.mxu0 0
    %525 = vmatpush1.bf16.msra.mxu0 0
    %526 = vmatprep.subr.bf16.mxu0 0
    %527 = vmatpush1.bf16.msra.mxu0 0
    %528 = vmatprep.subr.bf16.mxu0 0
    %529 = vmatpush1.bf16.msra.mxu0 0
    %530 = vmatprep.subr.bf16.mxu0 0
    %531 = vmatpush1.bf16.msra.mxu0 0
    %532 = vmatprep.subr.bf16.mxu0 0
    %533 = vmatpush1.bf16.msra.mxu0 0
    %534 = vmatprep.subr.bf16.mxu0 0
    %535 = vmatpush1.bf16.msra.mxu0 0
    %536 = vmatprep.subr.bf16.mxu0 0
    %537 = vmatpush1.bf16.msra.mxu0 0
    %538 = vmatprep.subr.bf16.mxu0 0
    %539 = vmatpush1.bf16.msra.mxu0 0
    %540 = vmatprep.subr.bf16.mxu0 0
    %541 = vmatpush1.bf16.msra.mxu0 0
    %542 = vmatprep.subr.bf16.mxu0 0
    %543 = vmatpush1.bf16.msra.mxu0 0
    %544 = vmatprep.subr.bf16.mxu0 0
    %545 = vmatpush1.bf16.msra.mxu0 0
    %546 = vmatprep.mubr.bf16.mxu0 0
    %547 = vmatmul.mubr.bf16.gmra.mrb[0].mxu0 %v509
    %v548 = vpop.f32.mrb[0].mxu0
    %v549 = vadd.f32 0.0, %v548
    %v550 = vpop.f32.mrb[0].mxu0
    %v551 = vpop.f32.mrb[0].mxu0
    %v552 = vpop.f32.mrb[0].mxu0
    %553 = vdwg.mxu0
    %v554 = vmul.f32 %v411, 0.35355338
    %v555 = vmul.f32 %v457, 0.35355338
    %v556 = vmul.f32 %v503, 0.35355338
    %v557 = vmul.f32 %v549, 0.35355338
    %v558 = vadd.f32 %v554, %v169
    %v559 = vadd.f32 %v555, %v169
    %v560 = vadd.f32 %v556, %v169
    %v561 = vadd.f32 %v557, %v169
    %v562 = vsel %vm368, %v558, -inf
    %563 = vmax.xlane.f32.xlu0 %v562
    %v564 = vpop.xlane.xlu0 %563
    %v565 = vsel %vm368, %v559, -inf
    %566 = vmax.xlane.f32.xlu0 %v565
    %v567 = vpop.xlane.xlu0 %566
    %v568 = vsel %vm368, %v560, -inf
    %569 = vmax.xlane.f32.xlu0 %v568
    %v570 = vpop.xlane.xlu0 %569
    %v571 = vsel %vm368, %v561, -inf
    %572 = vmax.xlane.f32.xlu0 %v571
    %v573 = vpop.xlane.xlu0 %572
    %v574 = vsub.f32 %v558, %v564
    %v575 = vsub.f32 %v559, %v567
    %v576 = vsub.f32 %v560, %v570
    %v577 = vsub.f32 %v561, %v573
    %v578 = vmul.f32 %v574, 1.442695
    %v579 = vpow.pop %v578
    %v580 = vmul.f32 %v575, 1.442695
    %v581 = vpow.pop %v580
    %v582 = vmul.f32 %v576, 1.442695
    %v583 = vpow.pop %v582
    %v584 = vmul.f32 %v577, 1.442695
    %v585 = vpow.pop %v584
    %v586 = vsel %vm368, %v579, 0.0
    %587 = vadd.xlane.f32.xlu0 %v586
    %v588 = vpop.xlane.xlu0 %587
    %v589 = vsel %vm368, %v581, 0.0
    %590 = vadd.xlane.f32.xlu0 %v589
    %v591 = vpop.xlane.xlu0 %590
    %v592 = vsel %vm368, %v583, 0.0
    %593 = vadd.xlane.f32.xlu0 %v592
    %v594 = vpop.xlane.xlu0 %593
    %v595 = vsel %vm368, %v585, 0.0
    %596 = vadd.xlane.f32.xlu0 %v595
    %v597 = vpop.xlane.xlu0 %596
    %v598 = vrcp.pop %v588
    %v599 = vrcp.pop %v591
    %v600 = vrcp.pop %v594
    %v601 = vrcp.pop %v597
    %v602 = vmul.f32 %v579, %v598
    %v603 = vmul.f32 %v581, %v599
    %v604 = vmul.f32 %v583, %v600
    %v605 = vmul.f32 %v585, %v601
    %v606 = vpack.c.bf16 %v602, %v602
    %v607 = vpack.c.bf16 %v603, %v603
    %v608 = vpack.c.bf16 %v604, %v604
    %v609 = vpack.c.bf16 %v605, %v605
    %610 = vrot.lane.b32.xlu0 %v284, 64
    %v611 = vpop.permute.xlu0 %610
    %612 = vrot.lane.b32.xlu0 %v287, 64
    %v613 = vpop.permute.xlu0 %612
    %614 = vrot.lane.b32.xlu0 %v289, 64
    %v615 = vpop.permute.xlu0 %614
    %616 = vrot.lane.b32.xlu0 %v291, 64
    %v617 = vpop.permute.xlu0 %616
    %622 = vxpose.xlu0.c.b16.start [1/8] %v611, 128
    %623 = vxpose.xlu0.c.b16.cont [2/8] 0, 128
    %624 = vxpose.xlu0.c.b16.cont [3/8] 0, 128
    %625 = vxpose.xlu0.c.b16.cont [4/8] 0, 128
    %626 = vxpose.xlu0.c.b16.cont [5/8] 0, 128
    %627 = vxpose.xlu0.c.b16.cont [6/8] 0, 128
    %628 = vxpose.xlu0.c.b16.cont [7/8] 0, 128
    %629 = vxpose.xlu0.c.b16.end [8/8] 0, 128
    %v630 = vpop.trf.xlu0
    %v631 = vpop.trf.xlu0
    %v632 = vpop.trf.xlu0
    %v633 = vpop.trf.xlu0
    %v634 = vpop.trf.xlu0
    %v635 = vpop.trf.xlu0
    %v636 = vpop.trf.xlu0
    %v637 = vpop.trf.xlu0
    %638 = vxpose.xlu0.c.b16.start [1/8] %v613, 128
    %639 = vxpose.xlu0.c.b16.cont [2/8] 0, 128
    %640 = vxpose.xlu0.c.b16.cont [3/8] 0, 128
    %641 = vxpose.xlu0.c.b16.cont [4/8] 0, 128
    %642 = vxpose.xlu0.c.b16.cont [5/8] 0, 128
    %643 = vxpose.xlu0.c.b16.cont [6/8] 0, 128
    %644 = vxpose.xlu0.c.b16.cont [7/8] 0, 128
    %645 = vxpose.xlu0.c.b16.end [8/8] 0, 128
    %v646 = vpop.trf.xlu0
    %v647 = vpop.trf.xlu0
    %v648 = vpop.trf.xlu0
    %v649 = vpop.trf.xlu0
    %v650 = vpop.trf.xlu0
    %v651 = vpop.trf.xlu0
    %v652 = vpop.trf.xlu0
    %v653 = vpop.trf.xlu0
    %654 = vxpose.xlu0.c.b16.start [1/8] %v615, 128
    %655 = vxpose.xlu0.c.b16.cont [2/8] 0, 128
    %656 = vxpose.xlu0.c.b16.cont [3/8] 0, 128
    %657 = vxpose.xlu0.c.b16.cont [4/8] 0, 128
    %658 = vxpose.xlu0.c.b16.cont [5/8] 0, 128
    %659 = vxpose.xlu0.c.b16.cont [6/8] 0, 128
    %660 = vxpose.xlu0.c.b16.cont [7/8] 0, 128
    %661 = vxpose.xlu0.c.b16.end [8/8] 0, 128
    %v662 = vpop.trf.xlu0
    %v663 = vpop.trf.xlu0
    %v664 = vpop.trf.xlu0
    %v665 = vpop.trf.xlu0
    %v666 = vpop.trf.xlu0
    %v667 = vpop.trf.xlu0
    %v668 = vpop.trf.xlu0
    %v669 = vpop.trf.xlu0
    %670 = vxpose.xlu0.c.b16.start [1/8] %v617, 128
    %671 = vxpose.xlu0.c.b16.cont [2/8] 0, 128
    %672 = vxpose.xlu0.c.b16.cont [3/8] 0, 128
    %673 = vxpose.xlu0.c.b16.cont [4/8] 0, 128
    %674 = vxpose.xlu0.c.b16.cont [5/8] 0, 128
    %675 = vxpose.xlu0.c.b16.cont [6/8] 0, 128
    %676 = vxpose.xlu0.c.b16.cont [7/8] 0, 128
    %677 = vxpose.xlu0.c.b16.end [8/8] 0, 128
    %v678 = vpop.trf.xlu0
    %v679 = vpop.trf.xlu0
    %v680 = vpop.trf.xlu0
    %v681 = vpop.trf.xlu0
    %v682 = vpop.trf.xlu0
    %v683 = vpop.trf.xlu0
    %v684 = vpop.trf.xlu0
    %v685 = vpop.trf.xlu0
    %v687 = vsel %vm368, %v630, 0
    %v690 = vsel %vm368, %v606, 0
    %692 = vmatprep.subr.bf16.mxu0 0
    %693 = vmatpush1.bf16.xpose.msra.mxu0 %v690
    %694 = vmatprep.subr.bf16.mxu0 0
    %695 = vmatpush1.bf16.xpose.msra.mxu0 0
    %696 = vmatprep.subr.bf16.mxu0 0
    %697 = vmatpush1.bf16.xpose.msra.mxu0 0
    %698 = vmatprep.subr.bf16.mxu0 0
    %699 = vmatpush1.bf16.xpose.msra.mxu0 0
    %700 = vmatprep.subr.bf16.mxu0 0
    %701 = vmatpush1.bf16.xpose.msra.mxu0 0
    %702 = vmatprep.subr.bf16.mxu0 0
    %703 = vmatpush1.bf16.xpose.msra.mxu0 0
    %704 = vmatprep.subr.bf16.mxu0 0
    %705 = vmatpush1.bf16.xpose.msra.mxu0 0
    %706 = vmatprep.subr.bf16.mxu0 0
    %707 = vmatpush1.bf16.xpose.msra.mxu0 0
    %708 = vmatprep.subr.bf16.mxu0 0
    %709 = vmatpush1.bf16.xpose.msra.mxu0 0
    %710 = vmatprep.subr.bf16.mxu0 0
    %711 = vmatpush1.bf16.xpose.msra.mxu0 0
    %712 = vmatprep.subr.bf16.mxu0 0
    %713 = vmatpush1.bf16.xpose.msra.mxu0 0
    %714 = vmatprep.subr.bf16.mxu0 0
    %715 = vmatpush1.bf16.xpose.msra.mxu0 0
    %716 = vmatprep.subr.bf16.mxu0 0
    %717 = vmatpush1.bf16.xpose.msra.mxu0 0
    %718 = vmatprep.subr.bf16.mxu0 0
    %719 = vmatpush1.bf16.xpose.msra.mxu0 0
    %720 = vmatprep.subr.bf16.mxu0 0
    %721 = vmatpush1.bf16.xpose.msra.mxu0 0
    %722 = vmatprep.subr.bf16.mxu0 0
    %723 = vmatpush1.bf16.xpose.msra.mxu0 0
    %724 = vmatprep.mubr.bf16.mxu0 0
    %725 = vmatmul.mubr.bf16.gmra.mrb[0].mxu0 %v687
    %v726 = vpop.f32.mrb[0].mxu0
    %v727 = vadd.f32 0.0, %v726
    %v728 = vpop.f32.mrb[0].mxu0
    %v729 = vpop.f32.mrb[0].mxu0
    %v730 = vpop.f32.mrb[0].mxu0
    %731 = vdwg.mxu0
    %v733 = vsel %vm368, %v646, 0
    %v736 = vsel %vm368, %v607, 0
    %738 = vmatprep.subr.bf16.mxu0 0
    %739 = vmatpush1.bf16.xpose.msra.mxu0 %v736
    %740 = vmatprep.subr.bf16.mxu0 0
    %741 = vmatpush1.bf16.xpose.msra.mxu0 0
    %742 = vmatprep.subr.bf16.mxu0 0
    %743 = vmatpush1.bf16.xpose.msra.mxu0 0
    %744 = vmatprep.subr.bf16.mxu0 0
    %745 = vmatpush1.bf16.xpose.msra.mxu0 0
    %746 = vmatprep.subr.bf16.mxu0 0
    %747 = vmatpush1.bf16.xpose.msra.mxu0 0
    %748 = vmatprep.subr.bf16.mxu0 0
    %749 = vmatpush1.bf16.xpose.msra.mxu0 0
    %750 = vmatprep.subr.bf16.mxu0 0
    %751 = vmatpush1.bf16.xpose.msra.mxu0 0
    %752 = vmatprep.subr.bf16.mxu0 0
    %753 = vmatpush1.bf16.xpose.msra.mxu0 0
    %754 = vmatprep.subr.bf16.mxu0 0
    %755 = vmatpush1.bf16.xpose.msra.mxu0 0
    %756 = vmatprep.subr.bf16.mxu0 0
    %757 = vmatpush1.bf16.xpose.msra.mxu0 0
    %758 = vmatprep.subr.bf16.mxu0 0
    %759 = vmatpush1.bf16.xpose.msra.mxu0 0
    %760 = vmatprep.subr.bf16.mxu0 0
    %761 = vmatpush1.bf16.xpose.msra.mxu0 0
    %762 = vmatprep.subr.bf16.mxu0 0
    %763 = vmatpush1.bf16.xpose.msra.mxu0 0
    %764 = vmatprep.subr.bf16.mxu0 0
    %765 = vmatpush1.bf16.xpose.msra.mxu0 0
    %766 = vmatprep.subr.bf16.mxu0 0
    %767 = vmatpush1.bf16.xpose.msra.mxu0 0
    %768 = vmatprep.subr.bf16.mxu0 0
    %769 = vmatpush1.bf16.xpose.msra.mxu0 0
    %770 = vmatprep.mubr.bf16.mxu0 0
    %771 = vmatmul.mubr.bf16.gmra.mrb[0].mxu0 %v733
    %v772 = vpop.f32.mrb[0].mxu0
    %v773 = vadd.f32 0.0, %v772
    %v774 = vpop.f32.mrb[0].mxu0
    %v775 = vpop.f32.mrb[0].mxu0
    %v776 = vpop.f32.mrb[0].mxu0
    %777 = vdwg.mxu0
    %v779 = vsel %vm368, %v662, 0
    %v782 = vsel %vm368, %v608, 0
    %784 = vmatprep.subr.bf16.mxu0 0
    %785 = vmatpush1.bf16.xpose.msra.mxu0 %v782
    %786 = vmatprep.subr.bf16.mxu0 0
    %787 = vmatpush1.bf16.xpose.msra.mxu0 0
    %788 = vmatprep.subr.bf16.mxu0 0
    %789 = vmatpush1.bf16.xpose.msra.mxu0 0
    %790 = vmatprep.subr.bf16.mxu0 0
    %791 = vmatpush1.bf16.xpose.msra.mxu0 0
    %792 = vmatprep.subr.bf16.mxu0 0
    %793 = vmatpush1.bf16.xpose.msra.mxu0 0
    %794 = vmatprep.subr.bf16.mxu0 0
    %795 = vmatpush1.bf16.xpose.msra.mxu0 0
    %796 = vmatprep.subr.bf16.mxu0 0
    %797 = vmatpush1.bf16.xpose.msra.mxu0 0
    %798 = vmatprep.subr.bf16.mxu0 0
    %799 = vmatpush1.bf16.xpose.msra.mxu0 0
    %800 = vmatprep.subr.bf16.mxu0 0
    %801 = vmatpush1.bf16.xpose.msra.mxu0 0
    %802 = vmatprep.subr.bf16.mxu0 0
    %803 = vmatpush1.bf16.xpose.msra.mxu0 0
    %804 = vmatprep.subr.bf16.mxu0 0
    %805 = vmatpush1.bf16.xpose.msra.mxu0 0
    %806 = vmatprep.subr.bf16.mxu0 0
    %807 = vmatpush1.bf16.xpose.msra.mxu0 0
    %808 = vmatprep.subr.bf16.mxu0 0
    %809 = vmatpush1.bf16.xpose.msra.mxu0 0
    %810 = vmatprep.subr.bf16.mxu0 0
    %811 = vmatpush1.bf16.xpose.msra.mxu0 0
    %812 = vmatprep.subr.bf16.mxu0 0
    %813 = vmatpush1.bf16.xpose.msra.mxu0 0
    %814 = vmatprep.subr.bf16.mxu0 0
    %815 = vmatpush1.bf16.xpose.msra.mxu0 0
    %816 = vmatprep.mubr.bf16.mxu0 0
    %817 = vmatmul.mubr.bf16.gmra.mrb[0].mxu0 %v779
    %v818 = vpop.f32.mrb[0].mxu0
    %v819 = vadd.f32 0.0, %v818
    %v820 = vpop.f32.mrb[0].mxu0
    %v821 = vpop.f32.mrb[0].mxu0
    %v822 = vpop.f32.mrb[0].mxu0
    %823 = vdwg.mxu0
    %v825 = vsel %vm368, %v678, 0
    %v828 = vsel %vm368, %v609, 0
    %830 = vmatprep.subr.bf16.mxu0 0
    %831 = vmatpush1.bf16.xpose.msra.mxu0 %v828
    %832 = vmatprep.subr.bf16.mxu0 0
    %833 = vmatpush1.bf16.xpose.msra.mxu0 0
    %834 = vmatprep.subr.bf16.mxu0 0
    %835 = vmatpush1.bf16.xpose.msra.mxu0 0
    %836 = vmatprep.subr.bf16.mxu0 0
    %837 = vmatpush1.bf16.xpose.msra.mxu0 0
    %838 = vmatprep.subr.bf16.mxu0 0
    %839 = vmatpush1.bf16.xpose.msra.mxu0 0
    %840 = vmatprep.subr.bf16.mxu0 0
    %841 = vmatpush1.bf16.xpose.msra.mxu0 0
    %842 = vmatprep.subr.bf16.mxu0 0
    %843 = vmatpush1.bf16.xpose.msra.mxu0 0
    %844 = vmatprep.subr.bf16.mxu0 0
    %845 = vmatpush1.bf16.xpose.msra.mxu0 0
    %846 = vmatprep.subr.bf16.mxu0 0
    %847 = vmatpush1.bf16.xpose.msra.mxu0 0
    %848 = vmatprep.subr.bf16.mxu0 0
    %849 = vmatpush1.bf16.xpose.msra.mxu0 0
    %850 = vmatprep.subr.bf16.mxu0 0
    %851 = vmatpush1.bf16.xpose.msra.mxu0 0
    %852 = vmatprep.subr.bf16.mxu0 0
    %853 = vmatpush1.bf16.xpose.msra.mxu0 0
    %854 = vmatprep.subr.bf16.mxu0 0
    %855 = vmatpush1.bf16.xpose.msra.mxu0 0
    %856 = vmatprep.subr.bf16.mxu0 0
    %857 = vmatpush1.bf16.xpose.msra.mxu0 0
    %858 = vmatprep.subr.bf16.mxu0 0
    %859 = vmatpush1.bf16.xpose.msra.mxu0 0
    %860 = vmatprep.subr.bf16.mxu0 0
    %861 = vmatpush1.bf16.xpose.msra.mxu0 0
    %862 = vmatprep.mubr.bf16.mxu0 0
    %863 = vmatmul.mubr.bf16.gmra.mrb[0].mxu0 %v825
    %v864 = vpop.f32.mrb[0].mxu0
    %v865 = vadd.f32 0.0, %v864
    %v866 = vpop.f32.mrb[0].mxu0
    %v867 = vpop.f32.mrb[0].mxu0
    %v868 = vpop.f32.mrb[0].mxu0
    %869 = vdwg.mxu0
    %870 = vxpose.xlu0.b32.start [1/16] %v727, 128
    %871 = vxpose.xlu0.b32.cont [2/16] 0.0, 128
    %872 = vxpose.xlu0.b32.cont [3/16] 0.0, 128
    %873 = vxpose.xlu0.b32.cont [4/16] 0.0, 128
    %874 = vxpose.xlu0.b32.cont [5/16] 0.0, 128
    %875 = vxpose.xlu0.b32.cont [6/16] 0.0, 128
    %876 = vxpose.xlu0.b32.cont [7/16] 0.0, 128
    %877 = vxpose.xlu0.b32.cont [8/16] 0.0, 128
    %878 = vxpose.xlu0.b32.cont [9/16] 0.0, 128
    %879 = vxpose.xlu0.b32.cont [10/16] 0.0, 128
    %880 = vxpose.xlu0.b32.cont [11/16] 0.0, 128
    %881 = vxpose.xlu0.b32.cont [12/16] 0.0, 128
    %882 = vxpose.xlu0.b32.cont [13/16] 0.0, 128
    %883 = vxpose.xlu0.b32.cont [14/16] 0.0, 128
    %884 = vxpose.xlu0.b32.cont [15/16] 0.0, 128
    %885 = vxpose.xlu0.b32.end [16/16] 0.0, 128
    %v886 = vpop.trf.xlu0
    %v887 = vpop.trf.xlu0
    %v888 = vpop.trf.xlu0
    %v889 = vpop.trf.xlu0
    %v890 = vpop.trf.xlu0
    %v891 = vpop.trf.xlu0
    %v892 = vpop.trf.xlu0
    %v893 = vpop.trf.xlu0
    %v894 = vpop.trf.xlu0
    %v895 = vpop.trf.xlu0
    %v896 = vpop.trf.xlu0
    %v897 = vpop.trf.xlu0
    %v898 = vpop.trf.xlu0
    %v899 = vpop.trf.xlu0
    %v900 = vpop.trf.xlu0
    %v901 = vpop.trf.xlu0
    %902 = vxpose.xlu0.b32.start [1/16] %v773, 128
    %903 = vxpose.xlu0.b32.cont [2/16] 0.0, 128
    %904 = vxpose.xlu0.b32.cont [3/16] 0.0, 128
    %905 = vxpose.xlu0.b32.cont [4/16] 0.0, 128
    %906 = vxpose.xlu0.b32.cont [5/16] 0.0, 128
    %907 = vxpose.xlu0.b32.cont [6/16] 0.0, 128
    %908 = vxpose.xlu0.b32.cont [7/16] 0.0, 128
    %909 = vxpose.xlu0.b32.cont [8/16] 0.0, 128
    %910 = vxpose.xlu0.b32.cont [9/16] 0.0, 128
    %911 = vxpose.xlu0.b32.cont [10/16] 0.0, 128
    %912 = vxpose.xlu0.b32.cont [11/16] 0.0, 128
    %913 = vxpose.xlu0.b32.cont [12/16] 0.0, 128
    %914 = vxpose.xlu0.b32.cont [13/16] 0.0, 128
    %915 = vxpose.xlu0.b32.cont [14/16] 0.0, 128
    %916 = vxpose.xlu0.b32.cont [15/16] 0.0, 128
    %917 = vxpose.xlu0.b32.end [16/16] 0.0, 128
    %v918 = vpop.trf.xlu0
    %v919 = vpop.trf.xlu0
    %v920 = vpop.trf.xlu0
    %v921 = vpop.trf.xlu0
    %v922 = vpop.trf.xlu0
    %v923 = vpop.trf.xlu0
    %v924 = vpop.trf.xlu0
    %v925 = vpop.trf.xlu0
    %v926 = vpop.trf.xlu0
    %v927 = vpop.trf.xlu0
    %v928 = vpop.trf.xlu0
    %v929 = vpop.trf.xlu0
    %v930 = vpop.trf.xlu0
    %v931 = vpop.trf.xlu0
    %v932 = vpop.trf.xlu0
    %v933 = vpop.trf.xlu0
    %934 = vxpose.xlu0.b32.start [1/16] %v819, 128
    %935 = vxpose.xlu0.b32.cont [2/16] 0.0, 128
    %936 = vxpose.xlu0.b32.cont [3/16] 0.0, 128
    %937 = vxpose.xlu0.b32.cont [4/16] 0.0, 128
    %938 = vxpose.xlu0.b32.cont [5/16] 0.0, 128
    %939 = vxpose.xlu0.b32.cont [6/16] 0.0, 128
    %940 = vxpose.xlu0.b32.cont [7/16] 0.0, 128
    %941 = vxpose.xlu0.b32.cont [8/16] 0.0, 128
    %942 = vxpose.xlu0.b32.cont [9/16] 0.0, 128
    %943 = vxpose.xlu0.b32.cont [10/16] 0.0, 128
    %944 = vxpose.xlu0.b32.cont [11/16] 0.0, 128
    %945 = vxpose.xlu0.b32.cont [12/16] 0.0, 128
    %946 = vxpose.xlu0.b32.cont [13/16] 0.0, 128
    %947 = vxpose.xlu0.b32.cont [14/16] 0.0, 128
    %948 = vxpose.xlu0.b32.cont [15/16] 0.0, 128
    %949 = vxpose.xlu0.b32.end [16/16] 0.0, 128
    %v950 = vpop.trf.xlu0
    %v951 = vpop.trf.xlu0
    %v952 = vpop.trf.xlu0
    %v953 = vpop.trf.xlu0
    %v954 = vpop.trf.xlu0
    %v955 = vpop.trf.xlu0
    %v956 = vpop.trf.xlu0
    %v957 = vpop.trf.xlu0
    %v958 = vpop.trf.xlu0
    %v959 = vpop.trf.xlu0
    %v960 = vpop.trf.xlu0
    %v961 = vpop.trf.xlu0
    %v962 = vpop.trf.xlu0
    %v963 = vpop.trf.xlu0
    %v964 = vpop.trf.xlu0
    %v965 = vpop.trf.xlu0
    %966 = vxpose.xlu0.b32.start [1/16] %v865, 128
    %967 = vxpose.xlu0.b32.cont [2/16] 0.0, 128
    %968 = vxpose.xlu0.b32.cont [3/16] 0.0, 128
    %969 = vxpose.xlu0.b32.cont [4/16] 0.0, 128
    %970 = vxpose.xlu0.b32.cont [5/16] 0.0, 128
    %971 = vxpose.xlu0.b32.cont [6/16] 0.0, 128
    %972 = vxpose.xlu0.b32.cont [7/16] 0.0, 128
    %973 = vxpose.xlu0.b32.cont [8/16] 0.0, 128
    %974 = vxpose.xlu0.b32.cont [9/16] 0.0, 128
    %975 = vxpose.xlu0.b32.cont [10/16] 0.0, 128
    %976 = vxpose.xlu0.b32.cont [11/16] 0.0, 128
    %977 = vxpose.xlu0.b32.cont [12/16] 0.0, 128
    %978 = vxpose.xlu0.b32.cont [13/16] 0.0, 128
    %979 = vxpose.xlu0.b32.cont [14/16] 0.0, 128
    %980 = vxpose.xlu0.b32.cont [15/16] 0.0, 128
    %981 = vxpose.xlu0.b32.end [16/16] 0.0, 128
    %v982 = vpop.trf.xlu0
    %v983 = vpop.trf.xlu0
    %v984 = vpop.trf.xlu0
    %v985 = vpop.trf.xlu0
    %v986 = vpop.trf.xlu0
    %v987 = vpop.trf.xlu0
    %v988 = vpop.trf.xlu0
    %v989 = vpop.trf.xlu0
    %v990 = vpop.trf.xlu0
    %v991 = vpop.trf.xlu0
    %v992 = vpop.trf.xlu0
    %v993 = vpop.trf.xlu0
    %v994 = vpop.trf.xlu0
    %v995 = vpop.trf.xlu0
    %v996 = vpop.trf.xlu0
    %v997 = vpop.trf.xlu0
    %v998 = vcombine.low %v886, %v950
    %v999 = vcombine.high %v886, %v950
    %v1001 = vunpack.c.l.s4 1983009808
    %v1002 = vunpack.c.0.s8 %v1001
    %v1003 = vlaneseq
    %v1004 = vshrl.u32 %v1003, 7
    %v1005 = vsub.s32 %v1002, %v1004
    %v1006 = vrot.slane %v998, %v1005
    %v1008 = vunpack.c.l.s4 1983009808
    %v1009 = vunpack.c.0.s8 %v1008
    %v1010 = vlaneseq
    %v1011 = vshrl.u32 %v1010, 7
    %v1012 = vsub.s32 %v1009, %v1011
    %v1013 = vrot.slane %v999, %v1012
    %v1014 = vcombine.low %v918, %v982
    %v1015 = vcombine.high %v918, %v982
    %v1017 = vunpack.c.l.s4 1983009808
    %v1018 = vunpack.c.0.s8 %v1017
    %v1019 = vlaneseq
    %v1020 = vshrl.u32 %v1019, 7
    %v1021 = vsub.s32 %v1018, %v1020
    %v1022 = vrot.slane %v1014, %v1021
    %v1024 = vunpack.c.l.s4 1983009808
    %v1025 = vunpack.c.0.s8 %v1024
    %v1026 = vlaneseq
    %v1027 = vshrl.u32 %v1026, 7
    %v1028 = vsub.s32 %v1025, %v1027
    %v1029 = vrot.slane %v1015, %v1028
    %v1030 = vcombine.low %v1006, %v1022
    %v1031 = vcombine.high %v1006, %v1022
    %v1033 = vunpack.c.l.s4 1934713408
    %v1034 = vunpack.c.0.s8 %v1033
    %v1035 = vlaneseq
    %v1036 = vshrl.u32 %v1035, 7
    %v1037 = vsub.s32 %v1034, %v1036
    %v1038 = vrot.slane %v1030, %v1037
    %v1040 = vunpack.c.l.s4 1934713408
    %v1041 = vunpack.c.0.s8 %v1040
    %v1042 = vlaneseq
    %v1043 = vshrl.u32 %v1042, 7
    %v1044 = vsub.s32 %v1041, %v1043
    %v1045 = vrot.slane %v1031, %v1044
    %v1046 = vcombine.low %v1013, %v1029
    %v1047 = vcombine.high %v1013, %v1029
    %v1049 = vunpack.c.l.s4 1934713408
    %v1050 = vunpack.c.0.s8 %v1049
    %v1051 = vlaneseq
    %v1052 = vshrl.u32 %v1051, 7
    %v1053 = vsub.s32 %v1050, %v1052
    %v1054 = vrot.slane %v1046, %v1053
    %v1056 = vunpack.c.l.s4 1934713408
    %v1057 = vunpack.c.0.s8 %v1056
    %v1058 = vlaneseq
    %v1059 = vshrl.u32 %v1058, 7
    %v1060 = vsub.s32 %v1057, %v1059
    %v1061 = vrot.slane %v1047, %v1060
    %v1062 = vcombine.high %v1038, 0.0
    %v1063 = vcombine.high %v1045, 0.0
    %v1064 = vcombine.high %v1054, 0.0
    %v1065 = vcombine.high %v1061, 0.0
    %v1066 = vcombine.low %v1038, %v1045
    %v1068 = vunpack.c.l.s4 1983009808
    %v1069 = vunpack.c.0.s8 %v1068
    %v1070 = vlaneseq
    %v1071 = vshrl.u32 %v1070, 7
    %v1072 = vsub.s32 %v1069, %v1071
    %v1073 = vrot.slane %v1066, %v1072
    %v1074 = vcombine.low %v1062, %v1063
    %v1076 = vunpack.c.l.s4 1983009808
    %v1077 = vunpack.c.0.s8 %v1076
    %v1078 = vlaneseq
    %v1079 = vshrl.u32 %v1078, 7
    %v1080 = vsub.s32 %v1077, %v1079
    %v1081 = vrot.slane %v1074, %v1080
    %v1082 = vcombine.low %v1054, %v1061
    %v1084 = vunpack.c.l.s4 1983009808
    %v1085 = vunpack.c.0.s8 %v1084
    %v1086 = vlaneseq
    %v1087 = vshrl.u32 %v1086, 7
    %v1088 = vsub.s32 %v1085, %v1087
    %v1089 = vrot.slane %v1082, %v1088
    %v1090 = vcombine.low %v1064, %v1065
    %v1092 = vunpack.c.l.s4 1983009808
    %v1093 = vunpack.c.0.s8 %v1092
    %v1094 = vlaneseq
    %v1095 = vshrl.u32 %v1094, 7
    %v1096 = vsub.s32 %v1093, %v1095
    %v1097 = vrot.slane %v1090, %v1096
    %v1098 = vcombine.low %v1073, %v1081
    %v1099 = vcombine.high %v1073, %v1081
    %v1101 = vunpack.c.l.s4 1934713408
    %v1102 = vunpack.c.0.s8 %v1101
    %v1103 = vlaneseq
    %v1104 = vshrl.u32 %v1103, 7
    %v1105 = vsub.s32 %v1102, %v1104
    %v1106 = vrot.slane %v1098, %v1105
    %v1108 = vunpack.c.l.s4 1934713408
    %v1109 = vunpack.c.0.s8 %v1108
    %v1110 = vlaneseq
    %v1111 = vshrl.u32 %v1110, 7
    %v1112 = vsub.s32 %v1109, %v1111
    %v1113 = vrot.slane %v1099, %v1112
    %v1114 = vcombine.low %v1089, %v1097
    %v1115 = vcombine.high %v1089, %v1097
    %v1117 = vunpack.c.l.s4 1934713408
    %v1118 = vunpack.c.0.s8 %v1117
    %v1119 = vlaneseq
    %v1120 = vshrl.u32 %v1119, 7
    %v1121 = vsub.s32 %v1118, %v1120
    %v1122 = vrot.slane %v1114, %v1121
    %v1124 = vunpack.c.l.s4 1934713408
    %v1125 = vunpack.c.0.s8 %v1124
    %v1126 = vlaneseq
    %v1127 = vshrl.u32 %v1126, 7
    %v1128 = vsub.s32 %v1125, %v1127
    %v1129 = vrot.slane %v1115, %v1128
    %v1130 = vcombine.low %v1106, %v1122
    %v1131 = vcombine.high %v1106, %v1122
    %v1132 = vcombine.low %v1113, %v1129
    %v1133 = vcombine.high %v1113, %v1129
    %1135 = vrot.lane.b32.xlu0 %v1131, 8
    %v1136 = vpop.permute.xlu0 %1135
    %1139 = vrot.lane.b32.xlu0 %v1132, 16
    %v1140 = vpop.permute.xlu0 %1139
    %1143 = vrot.lane.b32.xlu0 %v1133, 24
    %v1144 = vpop.permute.xlu0 %1143
    %v1146 = vsel %vm368, %v1130, %v1136
    %vm1147 = vcmask 130048
    %v1148 = vsel %vm1147, %v1146, %v1140
    %vm1149 = vcmask 195584
    %v1150 = vsel %vm1149, %v1148, %v1144
    %1151 = vst.msk [vmem:[#allocation2] sm:$0xff] %vm172, %v1150
    %v1152 = vrot.slane %v284, 4
    %v1153 = vrot.slane %v287, 4
    %v1154 = vrot.slane %v289, 4
    %v1155 = vrot.slane %v291, 4
    %1156 = vrot.lane.b32.xlu0 %v1152, 96
    %v1157 = vpop.permute.xlu0 %1156
    %1158 = vrot.lane.b32.xlu0 %v1153, 96
    %v1159 = vpop.permute.xlu0 %1158
    %1160 = vrot.lane.b32.xlu0 %v1154, 96
    %v1161 = vpop.permute.xlu0 %1160
    %1162 = vrot.lane.b32.xlu0 %v1155, 96
    %v1163 = vpop.permute.xlu0 %1162
    %1168 = vxpose.xlu0.c.b16.start [1/8] %v1157, 128
    %1169 = vxpose.xlu0.c.b16.cont [2/8] 0, 128
    %1170 = vxpose.xlu0.c.b16.cont [3/8] 0, 128
    %1171 = vxpose.xlu0.c.b16.cont [4/8] 0, 128
    %1172 = vxpose.xlu0.c.b16.cont [5/8] 0, 128
    %1173 = vxpose.xlu0.c.b16.cont [6/8] 0, 128
    %1174 = vxpose.xlu0.c.b16.cont [7/8] 0, 128
    %1175 = vxpose.xlu0.c.b16.end [8/8] 0, 128
    %v1176 = vpop.trf.xlu0
    %v1177 = vpop.trf.xlu0
    %v1178 = vpop.trf.xlu0
    %v1179 = vpop.trf.xlu0
    %v1180 = vpop.trf.xlu0
    %v1181 = vpop.trf.xlu0
    %v1182 = vpop.trf.xlu0
    %v1183 = vpop.trf.xlu0
    %1184 = vxpose.xlu0.c.b16.start [1/8] %v1159, 128
    %1185 = vxpose.xlu0.c.b16.cont [2/8] 0, 128
    %1186 = vxpose.xlu0.c.b16.cont [3/8] 0, 128
    %1187 = vxpose.xlu0.c.b16.cont [4/8] 0, 128
    %1188 = vxpose.xlu0.c.b16.cont [5/8] 0, 128
    %1189 = vxpose.xlu0.c.b16.cont [6/8] 0, 128
    %1190 = vxpose.xlu0.c.b16.cont [7/8] 0, 128
    %1191 = vxpose.xlu0.c.b16.end [8/8] 0, 128
    %v1192 = vpop.trf.xlu0
    %v1193 = vpop.trf.xlu0
    %v1194 = vpop.trf.xlu0
    %v1195 = vpop.trf.xlu0
    %v1196 = vpop.trf.xlu0
    %v1197 = vpop.trf.xlu0
    %v1198 = vpop.trf.xlu0
    %v1199 = vpop.trf.xlu0
    %1200 = vxpose.xlu0.c.b16.start [1/8] %v1161, 128
    %1201 = vxpose.xlu0.c.b16.cont [2/8] 0, 128
    %1202 = vxpose.xlu0.c.b16.cont [3/8] 0, 128
    %1203 = vxpose.xlu0.c.b16.cont [4/8] 0, 128
    %1204 = vxpose.xlu0.c.b16.cont [5/8] 0, 128
    %1205 = vxpose.xlu0.c.b16.cont [6/8] 0, 128
    %1206 = vxpose.xlu0.c.b16.cont [7/8] 0, 128
    %1207 = vxpose.xlu0.c.b16.end [8/8] 0, 128
    %v1208 = vpop.trf.xlu0
    %v1209 = vpop.trf.xlu0
    %v1210 = vpop.trf.xlu0
    %v1211 = vpop.trf.xlu0
    %v1212 = vpop.trf.xlu0
    %v1213 = vpop.trf.xlu0
    %v1214 = vpop.trf.xlu0
    %v1215 = vpop.trf.xlu0
    %1216 = vxpose.xlu0.c.b16.start [1/8] %v1163, 128
    %1217 = vxpose.xlu0.c.b16.cont [2/8] 0, 128
    %1218 = vxpose.xlu0.c.b16.cont [3/8] 0, 128
    %1219 = vxpose.xlu0.c.b16.cont [4/8] 0, 128
    %1220 = vxpose.xlu0.c.b16.cont [5/8] 0, 128
    %1221 = vxpose.xlu0.c.b16.cont [6/8] 0, 128
    %1222 = vxpose.xlu0.c.b16.cont [7/8] 0, 128
    %1223 = vxpose.xlu0.c.b16.end [8/8] 0, 128
    %v1224 = vpop.trf.xlu0
    %v1225 = vpop.trf.xlu0
    %v1226 = vpop.trf.xlu0
    %v1227 = vpop.trf.xlu0
    %v1228 = vpop.trf.xlu0
    %v1229 = vpop.trf.xlu0
    %v1230 = vpop.trf.xlu0
    %v1231 = vpop.trf.xlu0
    %v1233 = vsel %vm368, %v1152, 0
    %v1236 = vsel %vm372, %v1176, 0
    %1238 = vmatprep.subr.bf16.mxu0 0
    %1239 = vmatpush1.bf16.msra.mxu0 %v1236
    %1240 = vmatprep.subr.bf16.mxu0 0
    %1241 = vmatpush1.bf16.msra.mxu0 0
    %1242 = vmatprep.subr.bf16.mxu0 0
    %1243 = vmatpush1.bf16.msra.mxu0 0
    %1244 = vmatprep.subr.bf16.mxu0 0
    %1245 = vmatpush1.bf16.msra.mxu0 0
    %1246 = vmatprep.subr.bf16.mxu0 0
    %1247 = vmatpush1.bf16.msra.mxu0 0
    %1248 = vmatprep.subr.bf16.mxu0 0
    %1249 = vmatpush1.bf16.msra.mxu0 0
    %1250 = vmatprep.subr.bf16.mxu0 0
    %1251 = vmatpush1.bf16.msra.mxu0 0
    %1252 = vmatprep.subr.bf16.mxu0 0
    %1253 = vmatpush1.bf16.msra.mxu0 0
    %1254 = vmatprep.subr.bf16.mxu0 0
    %1255 = vmatpush1.bf16.msra.mxu0 0
    %1256 = vmatprep.subr.bf16.mxu0 0
    %1257 = vmatpush1.bf16.msra.mxu0 0
    %1258 = vmatprep.subr.bf16.mxu0 0
    %1259 = vmatpush1.bf16.msra.mxu0 0
    %1260 = vmatprep.subr.bf16.mxu0 0
    %1261 = vmatpush1.bf16.msra.mxu0 0
    %1262 = vmatprep.subr.bf16.mxu0 0
    %1263 = vmatpush1.bf16.msra.mxu0 0
    %1264 = vmatprep.subr.bf16.mxu0 0
    %1265 = vmatpush1.bf16.msra.mxu0 0
    %1266 = vmatprep.subr.bf16.mxu0 0
    %1267 = vmatpush1.bf16.msra.mxu0 0
    %1268 = vmatprep.subr.bf16.mxu0 0
    %1269 = vmatpush1.bf16.msra.mxu0 0
    %1270 = vmatprep.mubr.bf16.mxu0 0
    %1271 = vmatmul.mubr.bf16.gmra.mrb[0].mxu0 %v1233
    %v1272 = vpop.f32.mrb[0].mxu0
    %v1273 = vadd.f32 0.0, %v1272
    %v1274 = vpop.f32.mrb[0].mxu0
    %v1275 = vpop.f32.mrb[0].mxu0
    %v1276 = vpop.f32.mrb[0].mxu0
    %1277 = vdwg.mxu0
    %v1279 = vsel %vm368, %v1153, 0
    %v1282 = vsel %vm372, %v1192, 0
    %1284 = vmatprep.subr.bf16.mxu0 0
    %1285 = vmatpush1.bf16.msra.mxu0 %v1282
    %1286 = vmatprep.subr.bf16.mxu0 0
    %1287 = vmatpush1.bf16.msra.mxu0 0
    %1288 = vmatprep.subr.bf16.mxu0 0
    %1289 = vmatpush1.bf16.msra.mxu0 0
    %1290 = vmatprep.subr.bf16.mxu0 0
    %1291 = vmatpush1.bf16.msra.mxu0 0
    %1292 = vmatprep.subr.bf16.mxu0 0
    %1293 = vmatpush1.bf16.msra.mxu0 0
    %1294 = vmatprep.subr.bf16.mxu0 0
    %1295 = vmatpush1.bf16.msra.mxu0 0
    %1296 = vmatprep.subr.bf16.mxu0 0
    %1297 = vmatpush1.bf16.msra.mxu0 0
    %1298 = vmatprep.subr.bf16.mxu0 0
    %1299 = vmatpush1.bf16.msra.mxu0 0
    %1300 = vmatprep.subr.bf16.mxu0 0
    %1301 = vmatpush1.bf16.msra.mxu0 0
    %1302 = vmatprep.subr.bf16.mxu0 0
    %1303 = vmatpush1.bf16.msra.mxu0 0
    %1304 = vmatprep.subr.bf16.mxu0 0
    %1305 = vmatpush1.bf16.msra.mxu0 0
    %1306 = vmatprep.subr.bf16.mxu0 0
    %1307 = vmatpush1.bf16.msra.mxu0 0
    %1308 = vmatprep.subr.bf16.mxu0 0
    %1309 = vmatpush1.bf16.msra.mxu0 0
    %1310 = vmatprep.subr.bf16.mxu0 0
    %1311 = vmatpush1.bf16.msra.mxu0 0
    %1312 = vmatprep.subr.bf16.mxu0 0
    %1313 = vmatpush1.bf16.msra.mxu0 0
    %1314 = vmatprep.subr.bf16.mxu0 0
    %1315 = vmatpush1.bf16.msra.mxu0 0
    %1316 = vmatprep.mubr.bf16.mxu0 0
    %1317 = vmatmul.mubr.bf16.gmra.mrb[0].mxu0 %v1279
    %v1318 = vpop.f32.mrb[0].mxu0
    %v1319 = vadd.f32 0.0, %v1318
    %v1320 = vpop.f32.mrb[0].mxu0
    %v1321 = vpop.f32.mrb[0].mxu0
    %v1322 = vpop.f32.mrb[0].mxu0
    %1323 = vdwg.mxu0
    %v1325 = vsel %vm368, %v1154, 0
    %v1328 = vsel %vm372, %v1208, 0
    %1330 = vmatprep.subr.bf16.mxu0 0
    %1331 = vmatpush1.bf16.msra.mxu0 %v1328
    %1332 = vmatprep.subr.bf16.mxu0 0
    %1333 = vmatpush1.bf16.msra.mxu0 0
    %1334 = vmatprep.subr.bf16.mxu0 0
    %1335 = vmatpush1.bf16.msra.mxu0 0
    %1336 = vmatprep.subr.bf16.mxu0 0
    %1337 = vmatpush1.bf16.msra.mxu0 0
    %1338 = vmatprep.subr.bf16.mxu0 0
    %1339 = vmatpush1.bf16.msra.mxu0 0
    %1340 = vmatprep.subr.bf16.mxu0 0
    %1341 = vmatpush1.bf16.msra.mxu0 0
    %1342 = vmatprep.subr.bf16.mxu0 0
    %1343 = vmatpush1.bf16.msra.mxu0 0
    %1344 = vmatprep.subr.bf16.mxu0 0
    %1345 = vmatpush1.bf16.msra.mxu0 0
    %1346 = vmatprep.subr.bf16.mxu0 0
    %1347 = vmatpush1.bf16.msra.mxu0 0
    %1348 = vmatprep.subr.bf16.mxu0 0
    %1349 = vmatpush1.bf16.msra.mxu0 0
    %1350 = vmatprep.subr.bf16.mxu0 0
    %1351 = vmatpush1.bf16.msra.mxu0 0
    %1352 = vmatprep.subr.bf16.mxu0 0
    %1353 = vmatpush1.bf16.msra.mxu0 0
    %1354 = vmatprep.subr.bf16.mxu0 0
    %1355 = vmatpush1.bf16.msra.mxu0 0
    %1356 = vmatprep.subr.bf16.mxu0 0
    %1357 = vmatpush1.bf16.msra.mxu0 0
    %1358 = vmatprep.subr.bf16.mxu0 0
    %1359 = vmatpush1.bf16.msra.mxu0 0
    %1360 = vmatprep.subr.bf16.mxu0 0
    %1361 = vmatpush1.bf16.msra.mxu0 0
    %1362 = vmatprep.mubr.bf16.mxu0 0
    %1363 = vmatmul.mubr.bf16.gmra.mrb[0].mxu0 %v1325
    %v1364 = vpop.f32.mrb[0].mxu0
    %v1365 = vadd.f32 0.0, %v1364
    %v1366 = vpop.f32.mrb[0].mxu0
    %v1367 = vpop.f32.mrb[0].mxu0
    %v1368 = vpop.f32.mrb[0].mxu0
    %1369 = vdwg.mxu0
    %v1371 = vsel %vm368, %v1155, 0
    %v1374 = vsel %vm372, %v1224, 0
    %1376 = vmatprep.subr.bf16.mxu0 0
    %1377 = vmatpush1.bf16.msra.mxu0 %v1374
    %1378 = vmatprep.subr.bf16.mxu0 0
    %1379 = vmatpush1.bf16.msra.mxu0 0
    %1380 = vmatprep.subr.bf16.mxu0 0
    %1381 = vmatpush1.bf16.msra.mxu0 0
    %1382 = vmatprep.subr.bf16.mxu0 0
    %1383 = vmatpush1.bf16.msra.mxu0 0
    %1384 = vmatprep.subr.bf16.mxu0 0
    %1385 = vmatpush1.bf16.msra.mxu0 0
    %1386 = vmatprep.subr.bf16.mxu0 0
    %1387 = vmatpush1.bf16.msra.mxu0 0
    %1388 = vmatprep.subr.bf16.mxu0 0
    %1389 = vmatpush1.bf16.msra.mxu0 0
    %1390 = vmatprep.subr.bf16.mxu0 0
    %1391 = vmatpush1.bf16.msra.mxu0 0
    %1392 = vmatprep.subr.bf16.mxu0 0
    %1393 = vmatpush1.bf16.msra.mxu0 0
    %1394 = vmatprep.subr.bf16.mxu0 0
    %1395 = vmatpush1.bf16.msra.mxu0 0
    %1396 = vmatprep.subr.bf16.mxu0 0
    %1397 = vmatpush1.bf16.msra.mxu0 0
    %1398 = vmatprep.subr.bf16.mxu0 0
    %1399 = vmatpush1.bf16.msra.mxu0 0
    %1400 = vmatprep.subr.bf16.mxu0 0
    %1401 = vmatpush1.bf16.msra.mxu0 0
    %1402 = vmatprep.subr.bf16.mxu0 0
    %1403 = vmatpush1.bf16.msra.mxu0 0
    %1404 = vmatprep.subr.bf16.mxu0 0
    %1405 = vmatpush1.bf16.msra.mxu0 0
    %1406 = vmatprep.subr.bf16.mxu0 0
    %1407 = vmatpush1.bf16.msra.mxu0 0
    %1408 = vmatprep.mubr.bf16.mxu0 0
    %1409 = vmatmul.mubr.bf16.gmra.mrb[0].mxu0 %v1371
    %v1410 = vpop.f32.mrb[0].mxu0
    %v1411 = vadd.f32 0.0, %v1410
    %v1412 = vpop.f32.mrb[0].mxu0
    %v1413 = vpop.f32.mrb[0].mxu0
    %v1414 = vpop.f32.mrb[0].mxu0
    %1415 = vdwg.mxu0
    %v1416 = vmul.f32 %v1273, 0.35355338
    %v1417 = vmul.f32 %v1319, 0.35355338
    %v1418 = vmul.f32 %v1365, 0.35355338
    %v1419 = vmul.f32 %v1411, 0.35355338
    %v1420 = vadd.f32 %v1416, %v169
    %v1421 = vadd.f32 %v1417, %v169
    %v1422 = vadd.f32 %v1418, %v169
    %v1423 = vadd.f32 %v1419, %v169
    %v1424 = vsel %vm368, %v1420, -inf
    %1425 = vmax.xlane.f32.xlu0 %v1424
    %v1426 = vpop.xlane.xlu0 %1425
    %v1427 = vsel %vm368, %v1421, -inf
    %1428 = vmax.xlane.f32.xlu0 %v1427
    %v1429 = vpop.xlane.xlu0 %1428
    %v1430 = vsel %vm368, %v1422, -inf
    %1431 = vmax.xlane.f32.xlu0 %v1430
    %v1432 = vpop.xlane.xlu0 %1431
    %v1433 = vsel %vm368, %v1423, -inf
    %1434 = vmax.xlane.f32.xlu0 %v1433
    %v1435 = vpop.xlane.xlu0 %1434
    %v1436 = vsub.f32 %v1420, %v1426
    %v1437 = vsub.f32 %v1421, %v1429
    %v1438 = vsub.f32 %v1422, %v1432
    %v1439 = vsub.f32 %v1423, %v1435
    %v1440 = vmul.f32 %v1436, 1.442695
    %v1441 = vpow.pop %v1440
    %v1442 = vmul.f32 %v1437, 1.442695
    %v1443 = vpow.pop %v1442
    %v1444 = vmul.f32 %v1438, 1.442695
    %v1445 = vpow.pop %v1444
    %v1446 = vmul.f32 %v1439, 1.442695
    %v1447 = vpow.pop %v1446
    %v1448 = vsel %vm368, %v1441, 0.0
    %1449 = vadd.xlane.f32.xlu0 %v1448
    %v1450 = vpop.xlane.xlu0 %1449
    %v1451 = vsel %vm368, %v1443, 0.0
    %1452 = vadd.xlane.f32.xlu0 %v1451
    %v1453 = vpop.xlane.xlu0 %1452
    %v1454 = vsel %vm368, %v1445, 0.0
    %1455 = vadd.xlane.f32.xlu0 %v1454
    %v1456 = vpop.xlane.xlu0 %1455
    %v1457 = vsel %vm368, %v1447, 0.0
    %1458 = vadd.xlane.f32.xlu0 %v1457
    %v1459 = vpop.xlane.xlu0 %1458
    %v1460 = vrcp.pop %v1450
    %v1461 = vrcp.pop %v1453
    %v1462 = vrcp.pop %v1456
    %v1463 = vrcp.pop %v1459
    %v1464 = vmul.f32 %v1441, %v1460
    %v1465 = vmul.f32 %v1443, %v1461
    %v1466 = vmul.f32 %v1445, %v1462
    %v1467 = vmul.f32 %v1447, %v1463
    %v1468 = vpack.c.bf16 %v1464, %v1464
    %v1469 = vpack.c.bf16 %v1465, %v1465
    %v1470 = vpack.c.bf16 %v1466, %v1466
    %v1471 = vpack.c.bf16 %v1467, %v1467
    %1472 = vrot.lane.b32.xlu0 %v1152, 64
    %v1473 = vpop.permute.xlu0 %1472
    %1474 = vrot.lane.b32.xlu0 %v1153, 64
    %v1475 = vpop.permute.xlu0 %1474
    %1476 = vrot.lane.b32.xlu0 %v1154, 64
    %v1477 = vpop.permute.xlu0 %1476
    %1478 = vrot.lane.b32.xlu0 %v1155, 64
    %v1479 = vpop.permute.xlu0 %1478
    %1484 = vxpose.xlu0.c.b16.start [1/8] %v1473, 128
    %1485 = vxpose.xlu0.c.b16.cont [2/8] 0, 128
    %1486 = vxpose.xlu0.c.b16.cont [3/8] 0, 128
    %1487 = vxpose.xlu0.c.b16.cont [4/8] 0, 128
    %1488 = vxpose.xlu0.c.b16.cont [5/8] 0, 128
    %1489 = vxpose.xlu0.c.b16.cont [6/8] 0, 128
    %1490 = vxpose.xlu0.c.b16.cont [7/8] 0, 128
    %1491 = vxpose.xlu0.c.b16.end [8/8] 0, 128
    %v1492 = vpop.trf.xlu0
    %v1493 = vpop.trf.xlu0
    %v1494 = vpop.trf.xlu0
    %v1495 = vpop.trf.xlu0
    %v1496 = vpop.trf.xlu0
    %v1497 = vpop.trf.xlu0
    %v1498 = vpop.trf.xlu0
    %v1499 = vpop.trf.xlu0
    %1500 = vxpose.xlu0.c.b16.start [1/8] %v1475, 128
    %1501 = vxpose.xlu0.c.b16.cont [2/8] 0, 128
    %1502 = vxpose.xlu0.c.b16.cont [3/8] 0, 128
    %1503 = vxpose.xlu0.c.b16.cont [4/8] 0, 128
    %1504 = vxpose.xlu0.c.b16.cont [5/8] 0, 128
    %1505 = vxpose.xlu0.c.b16.cont [6/8] 0, 128
    %1506 = vxpose.xlu0.c.b16.cont [7/8] 0, 128
    %1507 = vxpose.xlu0.c.b16.end [8/8] 0, 128
    %v1508 = vpop.trf.xlu0
    %v1509 = vpop.trf.xlu0
    %v1510 = vpop.trf.xlu0
    %v1511 = vpop.trf.xlu0
    %v1512 = vpop.trf.xlu0
    %v1513 = vpop.trf.xlu0
    %v1514 = vpop.trf.xlu0
    %v1515 = vpop.trf.xlu0
    %1516 = vxpose.xlu0.c.b16.start [1/8] %v1477, 128
    %1517 = vxpose.xlu0.c.b16.cont [2/8] 0, 128
    %1518 = vxpose.xlu0.c.b16.cont [3/8] 0, 128
    %1519 = vxpose.xlu0.c.b16.cont [4/8] 0, 128
    %1520 = vxpose.xlu0.c.b16.cont [5/8] 0, 128
    %1521 = vxpose.xlu0.c.b16.cont [6/8] 0, 128
    %1522 = vxpose.xlu0.c.b16.cont [7/8] 0, 128
    %1523 = vxpose.xlu0.c.b16.end [8/8] 0, 128
    %v1524 = vpop.trf.xlu0
    %v1525 = vpop.trf.xlu0
    %v1526 = vpop.trf.xlu0
    %v1527 = vpop.trf.xlu0
    %v1528 = vpop.trf.xlu0
    %v1529 = vpop.trf.xlu0
    %v1530 = vpop.trf.xlu0
    %v1531 = vpop.trf.xlu0
    %1532 = vxpose.xlu0.c.b16.start [1/8] %v1479, 128
    %1533 = vxpose.xlu0.c.b16.cont [2/8] 0, 128
    %1534 = vxpose.xlu0.c.b16.cont [3/8] 0, 128
    %1535 = vxpose.xlu0.c.b16.cont [4/8] 0, 128
    %1536 = vxpose.xlu0.c.b16.cont [5/8] 0, 128
    %1537 = vxpose.xlu0.c.b16.cont [6/8] 0, 128
    %1538 = vxpose.xlu0.c.b16.cont [7/8] 0, 128
    %1539 = vxpose.xlu0.c.b16.end [8/8] 0, 128
    %v1540 = vpop.trf.xlu0
    %v1541 = vpop.trf.xlu0
    %v1542 = vpop.trf.xlu0
    %v1543 = vpop.trf.xlu0
    %v1544 = vpop.trf.xlu0
    %v1545 = vpop.trf.xlu0
    %v1546 = vpop.trf.xlu0
    %v1547 = vpop.trf.xlu0
    %v1549 = vsel %vm368, %v1492, 0
    %v1552 = vsel %vm368, %v1468, 0
    %1554 = vmatprep.subr.bf16.mxu0 0
    %1555 = vmatpush1.bf16.xpose.msra.mxu0 %v1552
    %1556 = vmatprep.subr.bf16.mxu0 0
    %1557 = vmatpush1.bf16.xpose.msra.mxu0 0
    %1558 = vmatprep.subr.bf16.mxu0 0
    %1559 = vmatpush1.bf16.xpose.msra.mxu0 0
    %1560 = vmatprep.subr.bf16.mxu0 0
    %1561 = vmatpush1.bf16.xpose.msra.mxu0 0
    %1562 = vmatprep.subr.bf16.mxu0 0
    %1563 = vmatpush1.bf16.xpose.msra.mxu0 0
    %1564 = vmatprep.subr.bf16.mxu0 0
    %1565 = vmatpush1.bf16.xpose.msra.mxu0 0
    %1566 = vmatprep.subr.bf16.mxu0 0
    %1567 = vmatpush1.bf16.xpose.msra.mxu0 0
    %1568 = vmatprep.subr.bf16.mxu0 0
    %1569 = vmatpush1.bf16.xpose.msra.mxu0 0
    %1570 = vmatprep.subr.bf16.mxu0 0
    %1571 = vmatpush1.bf16.xpose.msra.mxu0 0
    %1572 = vmatprep.subr.bf16.mxu0 0
    %1573 = vmatpush1.bf16.xpose.msra.mxu0 0
    %1574 = vmatprep.subr.bf16.mxu0 0
    %1575 = vmatpush1.bf16.xpose.msra.mxu0 0
    %1576 = vmatprep.subr.bf16.mxu0 0
    %1577 = vmatpush1.bf16.xpose.msra.mxu0 0
    %1578 = vmatprep.subr.bf16.mxu0 0
    %1579 = vmatpush1.bf16.xpose.msra.mxu0 0
    %1580 = vmatprep.subr.bf16.mxu0 0
    %1581 = vmatpush1.bf16.xpose.msra.mxu0 0
    %1582 = vmatprep.subr.bf16.mxu0 0
    %1583 = vmatpush1.bf16.xpose.msra.mxu0 0
    %1584 = vmatprep.subr.bf16.mxu0 0
    %1585 = vmatpush1.bf16.xpose.msra.mxu0 0
    %1586 = vmatprep.mubr.bf16.mxu0 0
    %1587 = vmatmul.mubr.bf16.gmra.mrb[0].mxu0 %v1549
    %v1588 = vpop.f32.mrb[0].mxu0
    %v1589 = vadd.f32 0.0, %v1588
    %v1590 = vpop.f32.mrb[0].mxu0
    %v1591 = vpop.f32.mrb[0].mxu0
    %v1592 = vpop.f32.mrb[0].mxu0
    %1593 = vdwg.mxu0
    %v1595 = vsel %vm368, %v1508, 0
    %v1598 = vsel %vm368, %v1469, 0
    %1600 = vmatprep.subr.bf16.mxu0 0
    %1601 = vmatpush1.bf16.xpose.msra.mxu0 %v1598
    %1602 = vmatprep.subr.bf16.mxu0 0
    %1603 = vmatpush1.bf16.xpose.msra.mxu0 0
    %1604 = vmatprep.subr.bf16.mxu0 0
    %1605 = vmatpush1.bf16.xpose.msra.mxu0 0
    %1606 = vmatprep.subr.bf16.mxu0 0
    %1607 = vmatpush1.bf16.xpose.msra.mxu0 0
    %1608 = vmatprep.subr.bf16.mxu0 0
    %1609 = vmatpush1.bf16.xpose.msra.mxu0 0
    %1610 = vmatprep.subr.bf16.mxu0 0
    %1611 = vmatpush1.bf16.xpose.msra.mxu0 0
    %1612 = vmatprep.subr.bf16.mxu0 0
    %1613 = vmatpush1.bf16.xpose.msra.mxu0 0
    %1614 = vmatprep.subr.bf16.mxu0 0
    %1615 = vmatpush1.bf16.xpose.msra.mxu0 0
    %1616 = vmatprep.subr.bf16.mxu0 0
    %1617 = vmatpush1.bf16.xpose.msra.mxu0 0
    %1618 = vmatprep.subr.bf16.mxu0 0
    %1619 = vmatpush1.bf16.xpose.msra.mxu0 0
    %1620 = vmatprep.subr.bf16.mxu0 0
    %1621 = vmatpush1.bf16.xpose.msra.mxu0 0
    %1622 = vmatprep.subr.bf16.mxu0 0
    %1623 = vmatpush1.bf16.xpose.msra.mxu0 0
    %1624 = vmatprep.subr.bf16.mxu0 0
    %1625 = vmatpush1.bf16.xpose.msra.mxu0 0
    %1626 = vmatprep.subr.bf16.mxu0 0
    %1627 = vmatpush1.bf16.xpose.msra.mxu0 0
    %1628 = vmatprep.subr.bf16.mxu0 0
    %1629 = vmatpush1.bf16.xpose.msra.mxu0 0
    %1630 = vmatprep.subr.bf16.mxu0 0
    %1631 = vmatpush1.bf16.xpose.msra.mxu0 0
    %1632 = vmatprep.mubr.bf16.mxu0 0
    %1633 = vmatmul.mubr.bf16.gmra.mrb[0].mxu0 %v1595
    %v1634 = vpop.f32.mrb[0].mxu0
    %v1635 = vadd.f32 0.0, %v1634
    %v1636 = vpop.f32.mrb[0].mxu0
    %v1637 = vpop.f32.mrb[0].mxu0
    %v1638 = vpop.f32.mrb[0].mxu0
    %1639 = vdwg.mxu0
    %v1641 = vsel %vm368, %v1524, 0
    %v1644 = vsel %vm368, %v1470, 0
    %1646 = vmatprep.subr.bf16.mxu0 0
    %1647 = vmatpush1.bf16.xpose.msra.mxu0 %v1644
    %1648 = vmatprep.subr.bf16.mxu0 0
    %1649 = vmatpush1.bf16.xpose.msra.mxu0 0
    %1650 = vmatprep.subr.bf16.mxu0 0
    %1651 = vmatpush1.bf16.xpose.msra.mxu0 0
    %1652 = vmatprep.subr.bf16.mxu0 0
    %1653 = vmatpush1.bf16.xpose.msra.mxu0 0
    %1654 = vmatprep.subr.bf16.mxu0 0
    %1655 = vmatpush1.bf16.xpose.msra.mxu0 0
    %1656 = vmatprep.subr.bf16.mxu0 0
    %1657 = vmatpush1.bf16.xpose.msra.mxu0 0
    %1658 = vmatprep.subr.bf16.mxu0 0
    %1659 = vmatpush1.bf16.xpose.msra.mxu0 0
    %1660 = vmatprep.subr.bf16.mxu0 0
    %1661 = vmatpush1.bf16.xpose.msra.mxu0 0
    %1662 = vmatprep.subr.bf16.mxu0 0
    %1663 = vmatpush1.bf16.xpose.msra.mxu0 0
    %1664 = vmatprep.subr.bf16.mxu0 0
    %1665 = vmatpush1.bf16.xpose.msra.mxu0 0
    %1666 = vmatprep.subr.bf16.mxu0 0
    %1667 = vmatpush1.bf16.xpose.msra.mxu0 0
    %1668 = vmatprep.subr.bf16.mxu0 0
    %1669 = vmatpush1.bf16.xpose.msra.mxu0 0
    %1670 = vmatprep.subr.bf16.mxu0 0
    %1671 = vmatpush1.bf16.xpose.msra.mxu0 0
    %1672 = vmatprep.subr.bf16.mxu0 0
    %1673 = vmatpush1.bf16.xpose.msra.mxu0 0
    %1674 = vmatprep.subr.bf16.mxu0 0
    %1675 = vmatpush1.bf16.xpose.msra.mxu0 0
    %1676 = vmatprep.subr.bf16.mxu0 0
    %1677 = vmatpush1.bf16.xpose.msra.mxu0 0
    %1678 = vmatprep.mubr.bf16.mxu0 0
    %1679 = vmatmul.mubr.bf16.gmra.mrb[0].mxu0 %v1641
    %v1680 = vpop.f32.mrb[0].mxu0
    %v1681 = vadd.f32 0.0, %v1680
    %v1682 = vpop.f32.mrb[0].mxu0
    %v1683 = vpop.f32.mrb[0].mxu0
    %v1684 = vpop.f32.mrb[0].mxu0
    %1685 = vdwg.mxu0
    %v1687 = vsel %vm368, %v1540, 0
    %v1690 = vsel %vm368, %v1471, 0
    %1692 = vmatprep.subr.bf16.mxu0 0
    %1693 = vmatpush1.bf16.xpose.msra.mxu0 %v1690
    %1694 = vmatprep.subr.bf16.mxu0 0
    %1695 = vmatpush1.bf16.xpose.msra.mxu0 0
    %1696 = vmatprep.subr.bf16.mxu0 0
    %1697 = vmatpush1.bf16.xpose.msra.mxu0 0
    %1698 = vmatprep.subr.bf16.mxu0 0
    %1699 = vmatpush1.bf16.xpose.msra.mxu0 0
    %1700 = vmatprep.subr.bf16.mxu0 0
    %1701 = vmatpush1.bf16.xpose.msra.mxu0 0
    %1702 = vmatprep.subr.bf16.mxu0 0
    %1703 = vmatpush1.bf16.xpose.msra.mxu0 0
    %1704 = vmatprep.subr.bf16.mxu0 0
    %1705 = vmatpush1.bf16.xpose.msra.mxu0 0
    %1706 = vmatprep.subr.bf16.mxu0 0
    %1707 = vmatpush1.bf16.xpose.msra.mxu0 0
    %1708 = vmatprep.subr.bf16.mxu0 0
    %1709 = vmatpush1.bf16.xpose.msra.mxu0 0
    %1710 = vmatprep.subr.bf16.mxu0 0
    %1711 = vmatpush1.bf16.xpose.msra.mxu0 0
    %1712 = vmatprep.subr.bf16.mxu0 0
    %1713 = vmatpush1.bf16.xpose.msra.mxu0 0
    %1714 = vmatprep.subr.bf16.mxu0 0
    %1715 = vmatpush1.bf16.xpose.msra.mxu0 0
    %1716 = vmatprep.subr.bf16.mxu0 0
    %1717 = vmatpush1.bf16.xpose.msra.mxu0 0
    %1718 = vmatprep.subr.bf16.mxu0 0
    %1719 = vmatpush1.bf16.xpose.msra.mxu0 0
    %1720 = vmatprep.subr.bf16.mxu0 0
    %1721 = vmatpush1.bf16.xpose.msra.mxu0 0
    %1722 = vmatprep.subr.bf16.mxu0 0
    %1723 = vmatpush1.bf16.xpose.msra.mxu0 0
    %1724 = vmatprep.mubr.bf16.mxu0 0
    %1725 = vmatmul.mubr.bf16.gmra.mrb[0].mxu0 %v1687
    %v1726 = vpop.f32.mrb[0].mxu0
    %v1727 = vadd.f32 0.0, %v1726
    %v1728 = vpop.f32.mrb[0].mxu0
    %v1729 = vpop.f32.mrb[0].mxu0
    %v1730 = vpop.f32.mrb[0].mxu0
    %1731 = vdwg.mxu0
    %1732 = vxpose.xlu0.b32.start [1/16] %v1589, 128
    %1733 = vxpose.xlu0.b32.cont [2/16] 0.0, 128
    %1734 = vxpose.xlu0.b32.cont [3/16] 0.0, 128
    %1735 = vxpose.xlu0.b32.cont [4/16] 0.0, 128
    %1736 = vxpose.xlu0.b32.cont [5/16] 0.0, 128
    %1737 = vxpose.xlu0.b32.cont [6/16] 0.0, 128
    %1738 = vxpose.xlu0.b32.cont [7/16] 0.0, 128
    %1739 = vxpose.xlu0.b32.cont [8/16] 0.0, 128
    %1740 = vxpose.xlu0.b32.cont [9/16] 0.0, 128
    %1741 = vxpose.xlu0.b32.cont [10/16] 0.0, 128
    %1742 = vxpose.xlu0.b32.cont [11/16] 0.0, 128
    %1743 = vxpose.xlu0.b32.cont [12/16] 0.0, 128
    %1744 = vxpose.xlu0.b32.cont [13/16] 0.0, 128
    %1745 = vxpose.xlu0.b32.cont [14/16] 0.0, 128
    %1746 = vxpose.xlu0.b32.cont [15/16] 0.0, 128
    %1747 = vxpose.xlu0.b32.end [16/16] 0.0, 128
    %v1748 = vpop.trf.xlu0
    %v1749 = vpop.trf.xlu0
    %v1750 = vpop.trf.xlu0
    %v1751 = vpop.trf.xlu0
    %v1752 = vpop.trf.xlu0
    %v1753 = vpop.trf.xlu0
    %v1754 = vpop.trf.xlu0
    %v1755 = vpop.trf.xlu0
    %v1756 = vpop.trf.xlu0
    %v1757 = vpop.trf.xlu0
    %v1758 = vpop.trf.xlu0
    %v1759 = vpop.trf.xlu0
    %v1760 = vpop.trf.xlu0
    %v1761 = vpop.trf.xlu0
    %v1762 = vpop.trf.xlu0
    %v1763 = vpop.trf.xlu0
    %1764 = vxpose.xlu0.b32.start [1/16] %v1635, 128
    %1765 = vxpose.xlu0.b32.cont [2/16] 0.0, 128
    %1766 = vxpose.xlu0.b32.cont [3/16] 0.0, 128
    %1767 = vxpose.xlu0.b32.cont [4/16] 0.0, 128
    %1768 = vxpose.xlu0.b32.cont [5/16] 0.0, 128
    %1769 = vxpose.xlu0.b32.cont [6/16] 0.0, 128
    %1770 = vxpose.xlu0.b32.cont [7/16] 0.0, 128
    %1771 = vxpose.xlu0.b32.cont [8/16] 0.0, 128
    %1772 = vxpose.xlu0.b32.cont [9/16] 0.0, 128
    %1773 = vxpose.xlu0.b32.cont [10/16] 0.0, 128
    %1774 = vxpose.xlu0.b32.cont [11/16] 0.0, 128
    %1775 = vxpose.xlu0.b32.cont [12/16] 0.0, 128
    %1776 = vxpose.xlu0.b32.cont [13/16] 0.0, 128
    %1777 = vxpose.xlu0.b32.cont [14/16] 0.0, 128
    %1778 = vxpose.xlu0.b32.cont [15/16] 0.0, 128
    %1779 = vxpose.xlu0.b32.end [16/16] 0.0, 128
    %v1780 = vpop.trf.xlu0
    %v1781 = vpop.trf.xlu0
    %v1782 = vpop.trf.xlu0
    %v1783 = vpop.trf.xlu0
    %v1784 = vpop.trf.xlu0
    %v1785 = vpop.trf.xlu0
    %v1786 = vpop.trf.xlu0
    %v1787 = vpop.trf.xlu0
    %v1788 = vpop.trf.xlu0
    %v1789 = vpop.trf.xlu0
    %v1790 = vpop.trf.xlu0
    %v1791 = vpop.trf.xlu0
    %v1792 = vpop.trf.xlu0
    %v1793 = vpop.trf.xlu0
    %v1794 = vpop.trf.xlu0
    %v1795 = vpop.trf.xlu0
    %1796 = vxpose.xlu0.b32.start [1/16] %v1681, 128
    %1797 = vxpose.xlu0.b32.cont [2/16] 0.0, 128
    %1798 = vxpose.xlu0.b32.cont [3/16] 0.0, 128
    %1799 = vxpose.xlu0.b32.cont [4/16] 0.0, 128
    %1800 = vxpose.xlu0.b32.cont [5/16] 0.0, 128
    %1801 = vxpose.xlu0.b32.cont [6/16] 0.0, 128
    %1802 = vxpose.xlu0.b32.cont [7/16] 0.0, 128
    %1803 = vxpose.xlu0.b32.cont [8/16] 0.0, 128
    %1804 = vxpose.xlu0.b32.cont [9/16] 0.0, 128
    %1805 = vxpose.xlu0.b32.cont [10/16] 0.0, 128
    %1806 = vxpose.xlu0.b32.cont [11/16] 0.0, 128
    %1807 = vxpose.xlu0.b32.cont [12/16] 0.0, 128
    %1808 = vxpose.xlu0.b32.cont [13/16] 0.0, 128
    %1809 = vxpose.xlu0.b32.cont [14/16] 0.0, 128
    %1810 = vxpose.xlu0.b32.cont [15/16] 0.0, 128
    %1811 = vxpose.xlu0.b32.end [16/16] 0.0, 128
    %v1812 = vpop.trf.xlu0
    %v1813 = vpop.trf.xlu0
    %v1814 = vpop.trf.xlu0
    %v1815 = vpop.trf.xlu0
    %v1816 = vpop.trf.xlu0
    %v1817 = vpop.trf.xlu0
    %v1818 = vpop.trf.xlu0
    %v1819 = vpop.trf.xlu0
    %v1820 = vpop.trf.xlu0
    %v1821 = vpop.trf.xlu0
    %v1822 = vpop.trf.xlu0
    %v1823 = vpop.trf.xlu0
    %v1824 = vpop.trf.xlu0
    %v1825 = vpop.trf.xlu0
    %v1826 = vpop.trf.xlu0
    %v1827 = vpop.trf.xlu0
    %1828 = vxpose.xlu0.b32.start [1/16] %v1727, 128
    %1829 = vxpose.xlu0.b32.cont [2/16] 0.0, 128
    %1830 = vxpose.xlu0.b32.cont [3/16] 0.0, 128
    %1831 = vxpose.xlu0.b32.cont [4/16] 0.0, 128
    %1832 = vxpose.xlu0.b32.cont [5/16] 0.0, 128
    %1833 = vxpose.xlu0.b32.cont [6/16] 0.0, 128
    %1834 = vxpose.xlu0.b32.cont [7/16] 0.0, 128
    %1835 = vxpose.xlu0.b32.cont [8/16] 0.0, 128
    %1836 = vxpose.xlu0.b32.cont [9/16] 0.0, 128
    %1837 = vxpose.xlu0.b32.cont [10/16] 0.0, 128
    %1838 = vxpose.xlu0.b32.cont [11/16] 0.0, 128
    %1839 = vxpose.xlu0.b32.cont [12/16] 0.0, 128
    %1840 = vxpose.xlu0.b32.cont [13/16] 0.0, 128
    %1841 = vxpose.xlu0.b32.cont [14/16] 0.0, 128
    %1842 = vxpose.xlu0.b32.cont [15/16] 0.0, 128
    %1843 = vxpose.xlu0.b32.end [16/16] 0.0, 128
    %v1844 = vpop.trf.xlu0
    %v1845 = vpop.trf.xlu0
    %v1846 = vpop.trf.xlu0
    %v1847 = vpop.trf.xlu0
    %v1848 = vpop.trf.xlu0
    %v1849 = vpop.trf.xlu0
    %v1850 = vpop.trf.xlu0
    %v1851 = vpop.trf.xlu0
    %v1852 = vpop.trf.xlu0
    %v1853 = vpop.trf.xlu0
    %v1854 = vpop.trf.xlu0
    %v1855 = vpop.trf.xlu0
    %v1856 = vpop.trf.xlu0
    %v1857 = vpop.trf.xlu0
    %v1858 = vpop.trf.xlu0
    %v1859 = vpop.trf.xlu0
    %v1860 = vcombine.low %v1748, %v1812
    %v1861 = vcombine.high %v1748, %v1812
    %v1863 = vunpack.c.l.s4 1983009808
    %v1864 = vunpack.c.0.s8 %v1863
    %v1865 = vlaneseq
    %v1866 = vshrl.u32 %v1865, 7
    %v1867 = vsub.s32 %v1864, %v1866
    %v1868 = vrot.slane %v1860, %v1867
    %v1870 = vunpack.c.l.s4 1983009808
    %v1871 = vunpack.c.0.s8 %v1870
    %v1872 = vlaneseq
    %v1873 = vshrl.u32 %v1872, 7
    %v1874 = vsub.s32 %v1871, %v1873
    %v1875 = vrot.slane %v1861, %v1874
    %v1876 = vcombine.low %v1780, %v1844
    %v1877 = vcombine.high %v1780, %v1844
    %v1879 = vunpack.c.l.s4 1983009808
    %v1880 = vunpack.c.0.s8 %v1879
    %v1881 = vlaneseq
    %v1882 = vshrl.u32 %v1881, 7
    %v1883 = vsub.s32 %v1880, %v1882
    %v1884 = vrot.slane %v1876, %v1883
    %v1886 = vunpack.c.l.s4 1983009808
    %v1887 = vunpack.c.0.s8 %v1886
    %v1888 = vlaneseq
    %v1889 = vshrl.u32 %v1888, 7
    %v1890 = vsub.s32 %v1887, %v1889
    %v1891 = vrot.slane %v1877, %v1890
    %v1892 = vcombine.low %v1868, %v1884
    %v1893 = vcombine.high %v1868, %v1884
    %v1895 = vunpack.c.l.s4 1934713408
    %v1896 = vunpack.c.0.s8 %v1895
    %v1897 = vlaneseq
    %v1898 = vshrl.u32 %v1897, 7
    %v1899 = vsub.s32 %v1896, %v1898
    %v1900 = vrot.slane %v1892, %v1899
    %v1902 = vunpack.c.l.s4 1934713408
    %v1903 = vunpack.c.0.s8 %v1902
    %v1904 = vlaneseq
    %v1905 = vshrl.u32 %v1904, 7
    %v1906 = vsub.s32 %v1903, %v1905
    %v1907 = vrot.slane %v1893, %v1906
    %v1908 = vcombine.low %v1875, %v1891
    %v1909 = vcombine.high %v1875, %v1891
    %v1911 = vunpack.c.l.s4 1934713408
    %v1912 = vunpack.c.0.s8 %v1911
    %v1913 = vlaneseq
    %v1914 = vshrl.u32 %v1913, 7
    %v1915 = vsub.s32 %v1912, %v1914
    %v1916 = vrot.slane %v1908, %v1915
    %v1918 = vunpack.c.l.s4 1934713408
    %v1919 = vunpack.c.0.s8 %v1918
    %v1920 = vlaneseq
    %v1921 = vshrl.u32 %v1920, 7
    %v1922 = vsub.s32 %v1919, %v1921
    %v1923 = vrot.slane %v1909, %v1922
    %v1924 = vcombine.high %v1900, 0.0
    %v1925 = vcombine.high %v1907, 0.0
    %v1926 = vcombine.high %v1916, 0.0
    %v1927 = vcombine.high %v1923, 0.0
    %v1928 = vcombine.low %v1900, %v1907
    %v1930 = vunpack.c.l.s4 1983009808
    %v1931 = vunpack.c.0.s8 %v1930
    %v1932 = vlaneseq
    %v1933 = vshrl.u32 %v1932, 7
    %v1934 = vsub.s32 %v1931, %v1933
    %v1935 = vrot.slane %v1928, %v1934
    %v1936 = vcombine.low %v1924, %v1925
    %v1938 = vunpack.c.l.s4 1983009808
    %v1939 = vunpack.c.0.s8 %v1938
    %v1940 = vlaneseq
    %v1941 = vshrl.u32 %v1940, 7
    %v1942 = vsub.s32 %v1939, %v1941
    %v1943 = vrot.slane %v1936, %v1942
    %v1944 = vcombine.low %v1916, %v1923
    %v1946 = vunpack.c.l.s4 1983009808
    %v1947 = vunpack.c.0.s8 %v1946
    %v1948 = vlaneseq
    %v1949 = vshrl.u32 %v1948, 7
    %v1950 = vsub.s32 %v1947, %v1949
    %v1951 = vrot.slane %v1944, %v1950
    %v1952 = vcombine.low %v1926, %v1927
    %v1954 = vunpack.c.l.s4 1983009808
    %v1955 = vunpack.c.0.s8 %v1954
    %v1956 = vlaneseq
    %v1957 = vshrl.u32 %v1956, 7
    %v1958 = vsub.s32 %v1955, %v1957
    %v1959 = vrot.slane %v1952, %v1958
    %v1960 = vcombine.low %v1935, %v1943
    %v1961 = vcombine.high %v1935, %v1943
    %v1963 = vunpack.c.l.s4 1934713408
    %v1964 = vunpack.c.0.s8 %v1963
    %v1965 = vlaneseq
    %v1966 = vshrl.u32 %v1965, 7
    %v1967 = vsub.s32 %v1964, %v1966
    %v1968 = vrot.slane %v1960, %v1967
    %v1970 = vunpack.c.l.s4 1934713408
    %v1971 = vunpack.c.0.s8 %v1970
    %v1972 = vlaneseq
    %v1973 = vshrl.u32 %v1972, 7
    %v1974 = vsub.s32 %v1971, %v1973
    %v1975 = vrot.slane %v1961, %v1974
    %v1976 = vcombine.low %v1951, %v1959
    %v1977 = vcombine.high %v1951, %v1959
    %v1979 = vunpack.c.l.s4 1934713408
    %v1980 = vunpack.c.0.s8 %v1979
    %v1981 = vlaneseq
    %v1982 = vshrl.u32 %v1981, 7
    %v1983 = vsub.s32 %v1980, %v1982
    %v1984 = vrot.slane %v1976, %v1983
    %v1986 = vunpack.c.l.s4 1934713408
    %v1987 = vunpack.c.0.s8 %v1986
    %v1988 = vlaneseq
    %v1989 = vshrl.u32 %v1988, 7
    %v1990 = vsub.s32 %v1987, %v1989
    %v1991 = vrot.slane %v1977, %v1990
    %v1992 = vcombine.low %v1968, %v1984
    %v1993 = vcombine.high %v1968, %v1984
    %v1994 = vcombine.low %v1975, %v1991
    %v1995 = vcombine.high %v1975, %v1991
    %1997 = vrot.lane.b32.xlu0 %v1993, 8
    %v1998 = vpop.permute.xlu0 %1997
    %2001 = vrot.lane.b32.xlu0 %v1994, 16
    %v2002 = vpop.permute.xlu0 %2001
    %2005 = vrot.lane.b32.xlu0 %v1995, 24
    %v2006 = vpop.permute.xlu0 %2005
    %v2008 = vsel %vm368, %v1992, %v1998
    %v2009 = vsel %vm1147, %v2008, %v2002
    %v2010 = vsel %vm1149, %v2009, %v2006
    %2011 = vst.msk [vmem:[#allocation2 + $0x8] sm:$0xff] %vm172, %v2010
    %v2012 = vld [vmem:[#allocation2] sm:$0xff]
    %v2013 = vld [vmem:[#allocation2 + $0x8] sm:$0xff]
    %v2014 = vpack.c.bf16 %v2013, %v2012
    %v2015 = vld [vmem:[%s8] sm:$0xf]
    %v2016 = vld [vmem:[%s8 + $0x4] sm:$0xf]
    %v2017 = vld [vmem:[%s8 + $0x8] sm:$0xf]
    %v2018 = vld [vmem:[%s8 + $0xc] sm:$0xf]
    %v2023 = vunpack.c.l.b16 %v2015
    %v2024 = vunpack.c.l.b16 %v2016
    %v2025 = vunpack.c.l.b16 %v2017
    %v2026 = vunpack.c.l.b16 %v2018
    %v2027 = vpack.c.b16 %v2024, %v2023
    %v2028 = vpack.c.b16 %v2026, %v2025
    %v2032 = vsel %vm172, %v2014, 0
    %2034 = vmatprep.subr.bf16.mxu0 0
    %2035 = vmatpush1.bf16.msra.mxu0 %v2027
    %2036 = vmatprep.subr.bf16.mxu0 0
    %2037 = vmatpush1.bf16.msra.mxu0 %v2028
    %2038 = vmatprep.subr.bf16.mxu0 0
    %2039 = vmatpush1.bf16.msra.mxu0 0
    %2040 = vmatprep.subr.bf16.mxu0 0
    %2041 = vmatpush1.bf16.msra.mxu0 0
    %2042 = vmatprep.subr.bf16.mxu0 0
    %2043 = vmatpush1.bf16.msra.mxu0 0
    %2044 = vmatprep.subr.bf16.mxu0 0
    %2045 = vmatpush1.bf16.msra.mxu0 0
    %2046 = vmatprep.subr.bf16.mxu0 0
    %2047 = vmatpush1.bf16.msra.mxu0 0
    %2048 = vmatprep.subr.bf16.mxu0 0
    %2049 = vmatpush1.bf16.msra.mxu0 0
    %2050 = vmatprep.subr.bf16.mxu0 0
    %2051 = vmatpush1.bf16.msra.mxu0 0
    %2052 = vmatprep.subr.bf16.mxu0 0
    %2053 = vmatpush1.bf16.msra.mxu0 0
    %2054 = vmatprep.subr.bf16.mxu0 0
    %2055 = vmatpush1.bf16.msra.mxu0 0
    %2056 = vmatprep.subr.bf16.mxu0 0
    %2057 = vmatpush1.bf16.msra.mxu0 0
    %2058 = vmatprep.subr.bf16.mxu0 0
    %2059 = vmatpush1.bf16.msra.mxu0 0
    %2060 = vmatprep.subr.bf16.mxu0 0
    %2061 = vmatpush1.bf16.msra.mxu0 0
    %2062 = vmatprep.subr.bf16.mxu0 0
    %2063 = vmatpush1.bf16.msra.mxu0 0
    %2064 = vmatprep.subr.bf16.mxu0 0
    %2065 = vmatpush1.bf16.msra.mxu0 0
    %2066 = vmatprep.mubr.bf16.mxu0 0
    %2067 = vmatmul.mubr.bf16.gmra.mrb[0].mxu0 %v2032
    %v2068 = vpop.f32.mrb[0].mxu0
    %v2069 = vadd.f32 0.0, %v2068
    %v2070 = vpop.f32.mrb[0].mxu0
    %v2071 = vpop.f32.mrb[0].mxu0
    %v2072 = vadd.f32 0.0, %v2071
    %v2073 = vpop.f32.mrb[0].mxu0
    %2074 = vdwg.mxu0
    %v2075 = vadd.f32 %v164, %v2069
    %v2076 = vadd.f32 %v165, %v2072
    %v2077 = vld [vmem:[%s9] sm:$0x1]
    %v2079 = vlaneseq
    %v2080 = vshrl.u32 %v2079, 7
    %v2081 = vsub.s32 0, %v2080
    %v2082 = vrot.slane %v2077, %v2081
    %v2084 = vadd.f32 %v2075, %v2082
    %v2085 = vadd.f32 %v2076, %v2082
    %v2086 = vld [vmem:[%s10] sm:$0x1]
    %v2087 = vld [vmem:[%s11] sm:$0x1]
    %v2088 = vsel %vm172, %v2084, 0.0
    %2089 = vadd.xlane.f32.xlu0 %v2088
    %v2090 = vpop.xlane.xlu0 %2089
    %v2091 = vsel %vm172, %v2085, 0.0
    %2092 = vadd.xlane.f32.xlu0 %v2091
    %v2093 = vpop.xlane.xlu0 %2092
    %v2094 = vmul.f32 %v2090, %v179
    %v2095 = vmul.f32 %v2093, %v179
    %v2096 = vsub.f32 %v2084, %v2094
    %v2097 = vsub.f32 %v2085, %v2095
    %v2098 = vmul.f32 %v2096, %v2096
    %v2099 = vmul.f32 %v2097, %v2097
    %v2100 = vsel %vm172, %v2098, 0.0
    %2101 = vadd.xlane.f32.xlu0 %v2100
    %v2102 = vpop.xlane.xlu0 %2101
    %v2103 = vsel %vm172, %v2099, 0.0
    %2104 = vadd.xlane.f32.xlu0 %v2103
    %v2105 = vpop.xlane.xlu0 %2104
    %v2106 = vmul.f32 %v2102, %v179
    %v2107 = vmul.f32 %v2105, %v179
    %v2108 = vadd.f32 %v2106, 1e-05
    %v2109 = vadd.f32 %v2107, 1e-05
    %v2110 = vrsqrt.pop %v2108
    %v2111 = vrsqrt.pop %v2109
    %v2112 = vmul.f32 %v2096, %v2110
    %v2113 = vmul.f32 %v2097, %v2111
    %v2115 = vlaneseq
    %v2116 = vshrl.u32 %v2115, 7
    %v2117 = vsub.s32 0, %v2116
    %v2118 = vrot.slane %v2086, %v2117
    %v2120 = vmul.f32 %v2112, %v2118
    %v2121 = vmul.f32 %v2113, %v2118
    %v2123 = vlaneseq
    %v2124 = vshrl.u32 %v2123, 7
    %v2125 = vsub.s32 0, %v2124
    %v2126 = vrot.slane %v2087, %v2125
    %v2128 = vadd.f32 %v2120, %v2126
    %v2129 = vadd.f32 %v2121, %v2126
    %v2130 = vpack.c.bf16 %v2129, %v2128
    %v2131 = vld [vmem:[%s12] sm:$0xf]
    %v2132 = vld [vmem:[%s12 + $0x4] sm:$0xf]
    %v2133 = vld [vmem:[%s12 + $0x8] sm:$0xf]
    %v2134 = vld [vmem:[%s12 + $0xc] sm:$0xf]
    %v2135 = vld [vmem:[%s13] sm:$0x1]
    %v2137 = vlaneseq
    %v2138 = vshrl.u32 %v2137, 7
    %v2139 = vsub.s32 0, %v2138
    %v2140 = vrot.slane %v2135, %v2139
    %v2146 = vunpack.c.l.b16 %v2131
    %v2147 = vunpack.c.l.b16 %v2132
    %v2148 = vunpack.c.l.b16 %v2133
    %v2149 = vunpack.c.l.b16 %v2134
    %v2150 = vpack.c.b16 %v2147, %v2146
    %v2151 = vpack.c.b16 %v2149, %v2148
    %v2155 = vsel %vm172, %v2130, 0
    %2157 = vmatprep.subr.bf16.mxu0 0
    %2158 = vmatpush1.bf16.msra.mxu0 %v2150
    %2159 = vmatprep.subr.bf16.mxu0 0
    %2160 = vmatpush1.bf16.msra.mxu0 %v2151
    %2161 = vmatprep.subr.bf16.mxu0 0
    %2162 = vmatpush1.bf16.msra.mxu0 0
    %2163 = vmatprep.subr.bf16.mxu0 0
    %2164 = vmatpush1.bf16.msra.mxu0 0
    %2165 = vmatprep.subr.bf16.mxu0 0
    %2166 = vmatpush1.bf16.msra.mxu0 0
    %2167 = vmatprep.subr.bf16.mxu0 0
    %2168 = vmatpush1.bf16.msra.mxu0 0
    %2169 = vmatprep.subr.bf16.mxu0 0
    %2170 = vmatpush1.bf16.msra.mxu0 0
    %2171 = vmatprep.subr.bf16.mxu0 0
    %2172 = vmatpush1.bf16.msra.mxu0 0
    %2173 = vmatprep.subr.bf16.mxu0 0
    %2174 = vmatpush1.bf16.msra.mxu0 0
    %2175 = vmatprep.subr.bf16.mxu0 0
    %2176 = vmatpush1.bf16.msra.mxu0 0
    %2177 = vmatprep.subr.bf16.mxu0 0
    %2178 = vmatpush1.bf16.msra.mxu0 0
    %2179 = vmatprep.subr.bf16.mxu0 0
    %2180 = vmatpush1.bf16.msra.mxu0 0
    %2181 = vmatprep.subr.bf16.mxu0 0
    %2182 = vmatpush1.bf16.msra.mxu0 0
    %2183 = vmatprep.subr.bf16.mxu0 0
    %2184 = vmatpush1.bf16.msra.mxu0 0
    %2185 = vmatprep.subr.bf16.mxu0 0
    %2186 = vmatpush1.bf16.msra.mxu0 0
    %2187 = vmatprep.subr.bf16.mxu0 0
    %2188 = vmatpush1.bf16.msra.mxu0 0
    %2189 = vmatprep.mubr.bf16.mxu0 0
    %2190 = vmatmul.mubr.bf16.gmra.mrb[0].mxu0 %v2155
    %v2191 = vpop.f32.mrb[0].mxu0
    %v2192 = vadd.f32 %v2140, %v2191
    %v2193 = vpop.f32.mrb[0].mxu0
    %v2194 = vpop.f32.mrb[0].mxu0
    %v2195 = vadd.f32 %v2140, %v2194
    %v2196 = vpop.f32.mrb[0].mxu0
    %2197 = vdwg.mxu0
    %v2198 = vmax.f32 %v2192, 0.0
    %v2199 = vmax.f32 %v2195, 0.0
    %v2200 = vpack.c.bf16 %v2199, %v2198
    %v2201 = vld [vmem:[%s14] sm:$0xf]
    %v2202 = vld [vmem:[%s14 + $0x4] sm:$0xf]
    %v2203 = vld [vmem:[%s14 + $0x8] sm:$0xf]
    %v2204 = vld [vmem:[%s14 + $0xc] sm:$0xf]
    %v2205 = vld [vmem:[%s14 + $0x10] sm:$0xf]
    %v2206 = vld [vmem:[%s14 + $0x14] sm:$0xf]
    %v2207 = vld [vmem:[%s14 + $0x18] sm:$0xf]
    %v2208 = vld [vmem:[%s14 + $0x1c] sm:$0xf]
    %v2217 = vunpack.c.l.b16 %v2201
    %v2218 = vunpack.c.l.b16 %v2202
    %v2219 = vunpack.c.l.b16 %v2203
    %v2220 = vunpack.c.l.b16 %v2204
    %v2221 = vunpack.c.l.b16 %v2205
    %v2222 = vunpack.c.l.b16 %v2206
    %v2223 = vunpack.c.l.b16 %v2207
    %v2224 = vunpack.c.l.b16 %v2208
    %v2225 = vpack.c.b16 %v2218, %v2217
    %v2226 = vpack.c.b16 %v2220, %v2219
    %v2227 = vpack.c.b16 %v2222, %v2221
    %v2228 = vpack.c.b16 %v2224, %v2223
    %v2234 = vsel %vm116, %v2200, 0
    %2236 = vmatprep.subr.bf16.mxu0 0
    %2237 = vmatpush1.bf16.msra.mxu0 %v2225
    %2238 = vmatprep.subr.bf16.mxu0 0
    %2239 = vmatpush1.bf16.msra.mxu0 %v2226
    %2240 = vmatprep.subr.bf16.mxu0 0
    %2241 = vmatpush1.bf16.msra.mxu0 %v2227
    %2242 = vmatprep.subr.bf16.mxu0 0
    %2243 = vmatpush1.bf16.msra.mxu0 %v2228
    %2244 = vmatprep.subr.bf16.mxu0 0
    %2245 = vmatpush1.bf16.msra.mxu0 0
    %2246 = vmatprep.subr.bf16.mxu0 0
    %2247 = vmatpush1.bf16.msra.mxu0 0
    %2248 = vmatprep.subr.bf16.mxu0 0
    %2249 = vmatpush1.bf16.msra.mxu0 0
    %2250 = vmatprep.subr.bf16.mxu0 0
    %2251 = vmatpush1.bf16.msra.mxu0 0
    %2252 = vmatprep.subr.bf16.mxu0 0
    %2253 = vmatpush1.bf16.msra.mxu0 0
    %2254 = vmatprep.subr.bf16.mxu0 0
    %2255 = vmatpush1.bf16.msra.mxu0 0
    %2256 = vmatprep.subr.bf16.mxu0 0
    %2257 = vmatpush1.bf16.msra.mxu0 0
    %2258 = vmatprep.subr.bf16.mxu0 0
    %2259 = vmatpush1.bf16.msra.mxu0 0
    %2260 = vmatprep.subr.bf16.mxu0 0
    %2261 = vmatpush1.bf16.msra.mxu0 0
    %2262 = vmatprep.subr.bf16.mxu0 0
    %2263 = vmatpush1.bf16.msra.mxu0 0
    %2264 = vmatprep.subr.bf16.mxu0 0
    %2265 = vmatpush1.bf16.msra.mxu0 0
    %2266 = vmatprep.subr.bf16.mxu0 0
    %2267 = vmatpush1.bf16.msra.mxu0 0
    %2268 = vmatprep.mubr.bf16.mxu0 0
    %2269 = vmatmul.mubr.bf16.gmra.mrb[0].mxu0 %v2234
    %v2270 = vpop.f32.mrb[0].mxu0
    %v2271 = vadd.f32 0.0, %v2270
    %v2272 = vpop.f32.mrb[0].mxu0
    %v2273 = vpop.f32.mrb[0].mxu0
    %v2274 = vadd.f32 0.0, %v2273
    %v2275 = vpop.f32.mrb[0].mxu0
    %2276 = vdwg.mxu0
    %v2277 = vadd.f32 %v2084, %v2271
    %v2278 = vadd.f32 %v2085, %v2274
    %v2279 = vld [vmem:[%s15] sm:$0x1]
    %v2281 = vlaneseq
    %v2282 = vshrl.u32 %v2281, 7
    %v2283 = vsub.s32 0, %v2282
    %v2284 = vrot.slane %v2279, %v2283
    %v2286 = vadd.f32 %v2277, %v2284
    %v2287 = vadd.f32 %v2278, %v2284
    %s2288 = scalar_lea.vmem %s4, 1
    %v2289 = vld [vmem:[%s2288] sm:$0x1]
    %s2290 = scalar_lea.vmem %s5, 1
    %v2291 = vld [vmem:[%s2290] sm:$0x1]
    %v2292 = vsel %vm172, %v2286, 0.0
    %2293 = vadd.xlane.f32.xlu0 %v2292
    %v2294 = vpop.xlane.xlu0 %2293
    %v2295 = vsel %vm172, %v2287, 0.0
    %2296 = vadd.xlane.f32.xlu0 %v2295
    %v2297 = vpop.xlane.xlu0 %2296
    %v2298 = vmul.f32 %v2294, %v179
    %v2299 = vmul.f32 %v2297, %v179
    %v2300 = vsub.f32 %v2286, %v2298
    %v2301 = vsub.f32 %v2287, %v2299
    %v2302 = vmul.f32 %v2300, %v2300
    %v2303 = vmul.f32 %v2301, %v2301
    %v2304 = vsel %vm172, %v2302, 0.0
    %2305 = vadd.xlane.f32.xlu0 %v2304
    %v2306 = vpop.xlane.xlu0 %2305
    %v2307 = vsel %vm172, %v2303, 0.0
    %2308 = vadd.xlane.f32.xlu0 %v2307
    %v2309 = vpop.xlane.xlu0 %2308
    %v2310 = vmul.f32 %v2306, %v179
    %v2311 = vmul.f32 %v2309, %v179
    %v2312 = vadd.f32 %v2310, 1e-05
    %v2313 = vadd.f32 %v2311, 1e-05
    %v2314 = vrsqrt.pop %v2312
    %v2315 = vrsqrt.pop %v2313
    %v2316 = vmul.f32 %v2300, %v2314
    %v2317 = vmul.f32 %v2301, %v2315
    %v2319 = vlaneseq
    %v2320 = vshrl.u32 %v2319, 7
    %v2321 = vsub.s32 0, %v2320
    %v2322 = vrot.slane %v2289, %v2321
    %v2324 = vmul.f32 %v2316, %v2322
    %v2325 = vmul.f32 %v2317, %v2322
    %v2327 = vlaneseq
    %v2328 = vshrl.u32 %v2327, 7
    %v2329 = vsub.s32 0, %v2328
    %v2330 = vrot.slane %v2291, %v2329
    %v2332 = vadd.f32 %v2324, %v2330
    %v2333 = vadd.f32 %v2325, %v2330
    %v2334 = vpack.c.bf16 %v2333, %v2332
    %s2335 = scalar_lea.vmem %s6, 16
    %v2336 = vld [vmem:[%s2335] sm:$0xf]
    %v2337 = vld [vmem:[%s2335 + $0x4] sm:$0xf]
    %v2338 = vld [vmem:[%s2335 + $0x8] sm:$0xf]
    %v2339 = vld [vmem:[%s2335 + $0xc] sm:$0xf]
    %s2340 = scalar_lea.vmem %s7, 1
    %v2341 = vld [vmem:[%s2340] sm:$0x1]
    %v2343 = vlaneseq
    %v2344 = vshrl.u32 %v2343, 7
    %v2345 = vsub.s32 0, %v2344
    %v2346 = vrot.slane %v2341, %v2345
    %v2352 = vunpack.c.l.b16 %v2336
    %v2353 = vunpack.c.l.b16 %v2337
    %v2354 = vunpack.c.l.b16 %v2338
    %v2355 = vunpack.c.l.b16 %v2339
    %v2356 = vpack.c.b16 %v2353, %v2352
    %v2357 = vpack.c.b16 %v2355, %v2354
    %v2361 = vsel %vm172, %v2334, 0
    %2363 = vmatprep.subr.bf16.mxu0 0
    %2364 = vmatpush1.bf16.msra.mxu0 %v2356
    %2365 = vmatprep.subr.bf16.mxu0 0
    %2366 = vmatpush1.bf16.msra.mxu0 %v2357
    %2367 = vmatprep.subr.bf16.mxu0 0
    %2368 = vmatpush1.bf16.msra.mxu0 0
    %2369 = vmatprep.subr.bf16.mxu0 0
    %2370 = vmatpush1.bf16.msra.mxu0 0
    %2371 = vmatprep.subr.bf16.mxu0 0
    %2372 = vmatpush1.bf16.msra.mxu0 0
    %2373 = vmatprep.subr.bf16.mxu0 0
    %2374 = vmatpush1.bf16.msra.mxu0 0
    %2375 = vmatprep.subr.bf16.mxu0 0
    %2376 = vmatpush1.bf16.msra.mxu0 0
    %2377 = vmatprep.subr.bf16.mxu0 0
    %2378 = vmatpush1.bf16.msra.mxu0 0
    %2379 = vmatprep.subr.bf16.mxu0 0
    %2380 = vmatpush1.bf16.msra.mxu0 0
    %2381 = vmatprep.subr.bf16.mxu0 0
    %2382 = vmatpush1.bf16.msra.mxu0 0
    %2383 = vmatprep.subr.bf16.mxu0 0
    %2384 = vmatpush1.bf16.msra.mxu0 0
    %2385 = vmatprep.subr.bf16.mxu0 0
    %2386 = vmatpush1.bf16.msra.mxu0 0
    %2387 = vmatprep.subr.bf16.mxu0 0
    %2388 = vmatpush1.bf16.msra.mxu0 0
    %2389 = vmatprep.subr.bf16.mxu0 0
    %2390 = vmatpush1.bf16.msra.mxu0 0
    %2391 = vmatprep.subr.bf16.mxu0 0
    %2392 = vmatpush1.bf16.msra.mxu0 0
    %2393 = vmatprep.subr.bf16.mxu0 0
    %2394 = vmatpush1.bf16.msra.mxu0 0
    %2395 = vmatprep.mubr.bf16.mxu0 0
    %2396 = vmatmul.mubr.bf16.gmra.mrb[0].mxu0 %v2361
    %v2397 = vpop.f32.mrb[0].mxu0
    %v2398 = vadd.f32 %v2346, %v2397
    %v2399 = vpop.f32.mrb[0].mxu0
    %v2400 = vpop.f32.mrb[0].mxu0
    %v2401 = vadd.f32 %v2346, %v2400
    %v2402 = vpop.f32.mrb[0].mxu0
    %2403 = vdwg.mxu0
    %v2404 = vpack.c.bf16 %v2401, %v2398
    %2406 = vrot.lane.b32.xlu0 %v2404, 120
    %v2407 = vpop.permute.xlu0 %2406
    %2408 = vrot.lane.b32.xlu0 %v2404, 112
    %v2409 = vpop.permute.xlu0 %2408
    %2410 = vrot.lane.b32.xlu0 %v2404, 104
    %v2411 = vpop.permute.xlu0 %2410
    %2412 = vrot.lane.b32.xlu0 %v2404, 96
    %v2413 = vpop.permute.xlu0 %2412
    %2414 = vrot.lane.b32.xlu0 %v2407, 96
    %v2415 = vpop.permute.xlu0 %2414
    %2416 = vrot.lane.b32.xlu0 %v2409, 96
    %v2417 = vpop.permute.xlu0 %2416
    %2418 = vrot.lane.b32.xlu0 %v2411, 96
    %v2419 = vpop.permute.xlu0 %2418
    %2424 = vxpose.xlu0.c.b16.start [1/8] %v2413, 128
    %2425 = vxpose.xlu0.c.b16.cont [2/8] 0, 128
    %2426 = vxpose.xlu0.c.b16.cont [3/8] 0, 128
    %2427 = vxpose.xlu0.c.b16.cont [4/8] 0, 128
    %2428 = vxpose.xlu0.c.b16.cont [5/8] 0, 128
    %2429 = vxpose.xlu0.c.b16.cont [6/8] 0, 128
    %2430 = vxpose.xlu0.c.b16.cont [7/8] 0, 128
    %2431 = vxpose.xlu0.c.b16.end [8/8] 0, 128
    %v2432 = vpop.trf.xlu0
    %v2433 = vpop.trf.xlu0
    %v2434 = vpop.trf.xlu0
    %v2435 = vpop.trf.xlu0
    %v2436 = vpop.trf.xlu0
    %v2437 = vpop.trf.xlu0
    %v2438 = vpop.trf.xlu0
    %v2439 = vpop.trf.xlu0
    %2440 = vxpose.xlu0.c.b16.start [1/8] %v2415, 128
    %2441 = vxpose.xlu0.c.b16.cont [2/8] 0, 128
    %2442 = vxpose.xlu0.c.b16.cont [3/8] 0, 128
    %2443 = vxpose.xlu0.c.b16.cont [4/8] 0, 128
    %2444 = vxpose.xlu0.c.b16.cont [5/8] 0, 128
    %2445 = vxpose.xlu0.c.b16.cont [6/8] 0, 128
    %2446 = vxpose.xlu0.c.b16.cont [7/8] 0, 128
    %2447 = vxpose.xlu0.c.b16.end [8/8] 0, 128
    %v2448 = vpop.trf.xlu0
    %v2449 = vpop.trf.xlu0
    %v2450 = vpop.trf.xlu0
    %v2451 = vpop.trf.xlu0
    %v2452 = vpop.trf.xlu0
    %v2453 = vpop.trf.xlu0
    %v2454 = vpop.trf.xlu0
    %v2455 = vpop.trf.xlu0
    %2456 = vxpose.xlu0.c.b16.start [1/8] %v2417, 128
    %2457 = vxpose.xlu0.c.b16.cont [2/8] 0, 128
    %2458 = vxpose.xlu0.c.b16.cont [3/8] 0, 128
    %2459 = vxpose.xlu0.c.b16.cont [4/8] 0, 128
    %2460 = vxpose.xlu0.c.b16.cont [5/8] 0, 128
    %2461 = vxpose.xlu0.c.b16.cont [6/8] 0, 128
    %2462 = vxpose.xlu0.c.b16.cont [7/8] 0, 128
    %2463 = vxpose.xlu0.c.b16.end [8/8] 0, 128
    %v2464 = vpop.trf.xlu0
    %v2465 = vpop.trf.xlu0
    %v2466 = vpop.trf.xlu0
    %v2467 = vpop.trf.xlu0
    %v2468 = vpop.trf.xlu0
    %v2469 = vpop.trf.xlu0
    %v2470 = vpop.trf.xlu0
    %v2471 = vpop.trf.xlu0
    %2472 = vxpose.xlu0.c.b16.start [1/8] %v2419, 128
    %2473 = vxpose.xlu0.c.b16.cont [2/8] 0, 128
    %2474 = vxpose.xlu0.c.b16.cont [3/8] 0, 128
    %2475 = vxpose.xlu0.c.b16.cont [4/8] 0, 128
    %2476 = vxpose.xlu0.c.b16.cont [5/8] 0, 128
    %2477 = vxpose.xlu0.c.b16.cont [6/8] 0, 128
    %2478 = vxpose.xlu0.c.b16.cont [7/8] 0, 128
    %2479 = vxpose.xlu0.c.b16.end [8/8] 0, 128
    %v2480 = vpop.trf.xlu0
    %v2481 = vpop.trf.xlu0
    %v2482 = vpop.trf.xlu0
    %v2483 = vpop.trf.xlu0
    %v2484 = vpop.trf.xlu0
    %v2485 = vpop.trf.xlu0
    %v2486 = vpop.trf.xlu0
    %v2487 = vpop.trf.xlu0
    %v2489 = vsel %vm368, %v2404, 0
    %v2492 = vsel %vm372, %v2432, 0
    %2494 = vmatprep.subr.bf16.mxu0 0
    %2495 = vmatpush1.bf16.msra.mxu0 %v2492
    %2496 = vmatprep.subr.bf16.mxu0 0
    %2497 = vmatpush1.bf16.msra.mxu0 0
    %2498 = vmatprep.subr.bf16.mxu0 0
    %2499 = vmatpush1.bf16.msra.mxu0 0
    %2500 = vmatprep.subr.bf16.mxu0 0
    %2501 = vmatpush1.bf16.msra.mxu0 0
    %2502 = vmatprep.subr.bf16.mxu0 0
    %2503 = vmatpush1.bf16.msra.mxu0 0
    %2504 = vmatprep.subr.bf16.mxu0 0
    %2505 = vmatpush1.bf16.msra.mxu0 0
    %2506 = vmatprep.subr.bf16.mxu0 0
    %2507 = vmatpush1.bf16.msra.mxu0 0
    %2508 = vmatprep.subr.bf16.mxu0 0
    %2509 = vmatpush1.bf16.msra.mxu0 0
    %2510 = vmatprep.subr.bf16.mxu0 0
    %2511 = vmatpush1.bf16.msra.mxu0 0
    %2512 = vmatprep.subr.bf16.mxu0 0
    %2513 = vmatpush1.bf16.msra.mxu0 0
    %2514 = vmatprep.subr.bf16.mxu0 0
    %2515 = vmatpush1.bf16.msra.mxu0 0
    %2516 = vmatprep.subr.bf16.mxu0 0
    %2517 = vmatpush1.bf16.msra.mxu0 0
    %2518 = vmatprep.subr.bf16.mxu0 0
    %2519 = vmatpush1.bf16.msra.mxu0 0
    %2520 = vmatprep.subr.bf16.mxu0 0
    %2521 = vmatpush1.bf16.msra.mxu0 0
    %2522 = vmatprep.subr.bf16.mxu0 0
    %2523 = vmatpush1.bf16.msra.mxu0 0
    %2524 = vmatprep.subr.bf16.mxu0 0
    %2525 = vmatpush1.bf16.msra.mxu0 0
    %2526 = vmatprep.mubr.bf16.mxu0 0
    %2527 = vmatmul.mubr.bf16.gmra.mrb[0].mxu0 %v2489
    %v2528 = vpop.f32.mrb[0].mxu0
    %v2529 = vadd.f32 0.0, %v2528
    %v2530 = vpop.f32.mrb[0].mxu0
    %v2531 = vpop.f32.mrb[0].mxu0
    %v2532 = vpop.f32.mrb[0].mxu0
    %2533 = vdwg.mxu0
    %v2535 = vsel %vm368, %v2407, 0
    %v2538 = vsel %vm372, %v2448, 0
    %2540 = vmatprep.subr.bf16.mxu0 0
    %2541 = vmatpush1.bf16.msra.mxu0 %v2538
    %2542 = vmatprep.subr.bf16.mxu0 0
    %2543 = vmatpush1.bf16.msra.mxu0 0
    %2544 = vmatprep.subr.bf16.mxu0 0
    %2545 = vmatpush1.bf16.msra.mxu0 0
    %2546 = vmatprep.subr.bf16.mxu0 0
    %2547 = vmatpush1.bf16.msra.mxu0 0
    %2548 = vmatprep.subr.bf16.mxu0 0
    %2549 = vmatpush1.bf16.msra.mxu0 0
    %2550 = vmatprep.subr.bf16.mxu0 0
    %2551 = vmatpush1.bf16.msra.mxu0 0
    %2552 = vmatprep.subr.bf16.mxu0 0
    %2553 = vmatpush1.bf16.msra.mxu0 0
    %2554 = vmatprep.subr.bf16.mxu0 0
    %2555 = vmatpush1.bf16.msra.mxu0 0
    %2556 = vmatprep.subr.bf16.mxu0 0
    %2557 = vmatpush1.bf16.msra.mxu0 0
    %2558 = vmatprep.subr.bf16.mxu0 0
    %2559 = vmatpush1.bf16.msra.mxu0 0
    %2560 = vmatprep.subr.bf16.mxu0 0
    %2561 = vmatpush1.bf16.msra.mxu0 0
    %2562 = vmatprep.subr.bf16.mxu0 0
    %2563 = vmatpush1.bf16.msra.mxu0 0
    %2564 = vmatprep.subr.bf16.mxu0 0
    %2565 = vmatpush1.bf16.msra.mxu0 0
    %2566 = vmatprep.subr.bf16.mxu0 0
    %2567 = vmatpush1.bf16.msra.mxu0 0
    %2568 = vmatprep.subr.bf16.mxu0 0
    %2569 = vmatpush1.bf16.msra.mxu0 0
    %2570 = vmatprep.subr.bf16.mxu0 0
    %2571 = vmatpush1.bf16.msra.mxu0 0
    %2572 = vmatprep.mubr.bf16.mxu0 0
    %2573 = vmatmul.mubr.bf16.gmra.mrb[0].mxu0 %v2535
    %v2574 = vpop.f32.mrb[0].mxu0
    %v2575 = vadd.f32 0.0, %v2574
    %v2576 = vpop.f32.mrb[0].mxu0
    %v2577 = vpop.f32.mrb[0].mxu0
    %v2578 = vpop.f32.mrb[0].mxu0
    %2579 = vdwg.mxu0
    %v2581 = vsel %vm368, %v2409, 0
    %v2584 = vsel %vm372, %v2464, 0
    %2586 = vmatprep.subr.bf16.mxu0 0
    %2587 = vmatpush1.bf16.msra.mxu0 %v2584
    %2588 = vmatprep.subr.bf16.mxu0 0
    %2589 = vmatpush1.bf16.msra.mxu0 0
    %2590 = vmatprep.subr.bf16.mxu0 0
    %2591 = vmatpush1.bf16.msra.mxu0 0
    %2592 = vmatprep.subr.bf16.mxu0 0
    %2593 = vmatpush1.bf16.msra.mxu0 0
    %2594 = vmatprep.subr.bf16.mxu0 0
    %2595 = vmatpush1.bf16.msra.mxu0 0
    %2596 = vmatprep.subr.bf16.mxu0 0
    %2597 = vmatpush1.bf16.msra.mxu0 0
    %2598 = vmatprep.subr.bf16.mxu0 0
    %2599 = vmatpush1.bf16.msra.mxu0 0
    %2600 = vmatprep.subr.bf16.mxu0 0
    %2601 = vmatpush1.bf16.msra.mxu0 0
    %2602 = vmatprep.subr.bf16.mxu0 0
    %2603 = vmatpush1.bf16.msra.mxu0 0
    %2604 = vmatprep.subr.bf16.mxu0 0
    %2605 = vmatpush1.bf16.msra.mxu0 0
    %2606 = vmatprep.subr.bf16.mxu0 0
    %2607 = vmatpush1.bf16.msra.mxu0 0
    %2608 = vmatprep.subr.bf16.mxu0 0
    %2609 = vmatpush1.bf16.msra.mxu0 0
    %2610 = vmatprep.subr.bf16.mxu0 0
    %2611 = vmatpush1.bf16.msra.mxu0 0
    %2612 = vmatprep.subr.bf16.mxu0 0
    %2613 = vmatpush1.bf16.msra.mxu0 0
    %2614 = vmatprep.subr.bf16.mxu0 0
    %2615 = vmatpush1.bf16.msra.mxu0 0
    %2616 = vmatprep.subr.bf16.mxu0 0
    %2617 = vmatpush1.bf16.msra.mxu0 0
    %2618 = vmatprep.mubr.bf16.mxu0 0
    %2619 = vmatmul.mubr.bf16.gmra.mrb[0].mxu0 %v2581
    %v2620 = vpop.f32.mrb[0].mxu0
    %v2621 = vadd.f32 0.0, %v2620
    %v2622 = vpop.f32.mrb[0].mxu0
    %v2623 = vpop.f32.mrb[0].mxu0
    %v2624 = vpop.f32.mrb[0].mxu0
    %2625 = vdwg.mxu0
    %v2627 = vsel %vm368, %v2411, 0
    %v2630 = vsel %vm372, %v2480, 0
    %2632 = vmatprep.subr.bf16.mxu0 0
    %2633 = vmatpush1.bf16.msra.mxu0 %v2630
    %2634 = vmatprep.subr.bf16.mxu0 0
    %2635 = vmatpush1.bf16.msra.mxu0 0
    %2636 = vmatprep.subr.bf16.mxu0 0
    %2637 = vmatpush1.bf16.msra.mxu0 0
    %2638 = vmatprep.subr.bf16.mxu0 0
    %2639 = vmatpush1.bf16.msra.mxu0 0
    %2640 = vmatprep.subr.bf16.mxu0 0
    %2641 = vmatpush1.bf16.msra.mxu0 0
    %2642 = vmatprep.subr.bf16.mxu0 0
    %2643 = vmatpush1.bf16.msra.mxu0 0
    %2644 = vmatprep.subr.bf16.mxu0 0
    %2645 = vmatpush1.bf16.msra.mxu0 0
    %2646 = vmatprep.subr.bf16.mxu0 0
    %2647 = vmatpush1.bf16.msra.mxu0 0
    %2648 = vmatprep.subr.bf16.mxu0 0
    %2649 = vmatpush1.bf16.msra.mxu0 0
    %2650 = vmatprep.subr.bf16.mxu0 0
    %2651 = vmatpush1.bf16.msra.mxu0 0
    %2652 = vmatprep.subr.bf16.mxu0 0
    %2653 = vmatpush1.bf16.msra.mxu0 0
    %2654 = vmatprep.subr.bf16.mxu0 0
    %2655 = vmatpush1.bf16.msra.mxu0 0
    %2656 = vmatprep.subr.bf16.mxu0 0
    %2657 = vmatpush1.bf16.msra.mxu0 0
    %2658 = vmatprep.subr.bf16.mxu0 0
    %2659 = vmatpush1.bf16.msra.mxu0 0
    %2660 = vmatprep.subr.bf16.mxu0 0
    %2661 = vmatpush1.bf16.msra.mxu0 0
    %2662 = vmatprep.subr.bf16.mxu0 0
    %2663 = vmatpush1.bf16.msra.mxu0 0
    %2664 = vmatprep.mubr.bf16.mxu0 0
    %2665 = vmatmul.mubr.bf16.gmra.mrb[0].mxu0 %v2627
    %v2666 = vpop.f32.mrb[0].mxu0
    %v2667 = vadd.f32 0.0, %v2666
    %v2668 = vpop.f32.mrb[0].mxu0
    %v2669 = vpop.f32.mrb[0].mxu0
    %v2670 = vpop.f32.mrb[0].mxu0
    %2671 = vdwg.mxu0
    %v2672 = vmul.f32 %v2529, 0.35355338
    %v2673 = vmul.f32 %v2575, 0.35355338
    %v2674 = vmul.f32 %v2621, 0.35355338
    %v2675 = vmul.f32 %v2667, 0.35355338
    %v2676 = vadd.f32 %v2672, %v169
    %v2677 = vadd.f32 %v2673, %v169
    %v2678 = vadd.f32 %v2674, %v169
    %v2679 = vadd.f32 %v2675, %v169
    %v2680 = vsel %vm368, %v2676, -inf
    %2681 = vmax.xlane.f32.xlu0 %v2680
    %v2682 = vpop.xlane.xlu0 %2681
    %v2683 = vsel %vm368, %v2677, -inf
    %2684 = vmax.xlane.f32.xlu0 %v2683
    %v2685 = vpop.xlane.xlu0 %2684
    %v2686 = vsel %vm368, %v2678, -inf
    %2687 = vmax.xlane.f32.xlu0 %v2686
    %v2688 = vpop.xlane.xlu0 %2687
    %v2689 = vsel %vm368, %v2679, -inf
    %2690 = vmax.xlane.f32.xlu0 %v2689
    %v2691 = vpop.xlane.xlu0 %2690
    %v2692 = vsub.f32 %v2676, %v2682
    %v2693 = vsub.f32 %v2677, %v2685
    %v2694 = vsub.f32 %v2678, %v2688
    %v2695 = vsub.f32 %v2679, %v2691
    %v2696 = vmul.f32 %v2692, 1.442695
    %v2697 = vpow.pop %v2696
    %v2698 = vmul.f32 %v2693, 1.442695
    %v2699 = vpow.pop %v2698
    %v2700 = vmul.f32 %v2694, 1.442695
    %v2701 = vpow.pop %v2700
    %v2702 = vmul.f32 %v2695, 1.442695
    %v2703 = vpow.pop %v2702
    %v2704 = vsel %vm368, %v2697, 0.0
    %2705 = vadd.xlane.f32.xlu0 %v2704
    %v2706 = vpop.xlane.xlu0 %2705
    %v2707 = vsel %vm368, %v2699, 0.0
    %2708 = vadd.xlane.f32.xlu0 %v2707
    %v2709 = vpop.xlane.xlu0 %2708
    %v2710 = vsel %vm368, %v2701, 0.0
    %2711 = vadd.xlane.f32.xlu0 %v2710
    %v2712 = vpop.xlane.xlu0 %2711
    %v2713 = vsel %vm368, %v2703, 0.0
    %2714 = vadd.xlane.f32.xlu0 %v2713
    %v2715 = vpop.xlane.xlu0 %2714
    %v2716 = vrcp.pop %v2706
    %v2717 = vrcp.pop %v2709
    %v2718 = vrcp.pop %v2712
    %v2719 = vrcp.pop %v2715
    %v2720 = vmul.f32 %v2697, %v2716
    %v2721 = vmul.f32 %v2699, %v2717
    %v2722 = vmul.f32 %v2701, %v2718
    %v2723 = vmul.f32 %v2703, %v2719
    %v2724 = vpack.c.bf16 %v2720, %v2720
    %v2725 = vpack.c.bf16 %v2721, %v2721
    %v2726 = vpack.c.bf16 %v2722, %v2722
    %v2727 = vpack.c.bf16 %v2723, %v2723
    %2728 = vrot.lane.b32.xlu0 %v2404, 64
    %v2729 = vpop.permute.xlu0 %2728
    %2730 = vrot.lane.b32.xlu0 %v2407, 64
    %v2731 = vpop.permute.xlu0 %2730
    %2732 = vrot.lane.b32.xlu0 %v2409, 64
    %v2733 = vpop.permute.xlu0 %2732
    %2734 = vrot.lane.b32.xlu0 %v2411, 64
    %v2735 = vpop.permute.xlu0 %2734
    %2740 = vxpose.xlu0.c.b16.start [1/8] %v2729, 128
    %2741 = vxpose.xlu0.c.b16.cont [2/8] 0, 128
    %2742 = vxpose.xlu0.c.b16.cont [3/8] 0, 128
    %2743 = vxpose.xlu0.c.b16.cont [4/8] 0, 128
    %2744 = vxpose.xlu0.c.b16.cont [5/8] 0, 128
    %2745 = vxpose.xlu0.c.b16.cont [6/8] 0, 128
    %2746 = vxpose.xlu0.c.b16.cont [7/8] 0, 128
    %2747 = vxpose.xlu0.c.b16.end [8/8] 0, 128
    %v2748 = vpop.trf.xlu0
    %v2749 = vpop.trf.xlu0
    %v2750 = vpop.trf.xlu0
    %v2751 = vpop.trf.xlu0
    %v2752 = vpop.trf.xlu0
    %v2753 = vpop.trf.xlu0
    %v2754 = vpop.trf.xlu0
    %v2755 = vpop.trf.xlu0
    %2756 = vxpose.xlu0.c.b16.start [1/8] %v2731, 128
    %2757 = vxpose.xlu0.c.b16.cont [2/8] 0, 128
    %2758 = vxpose.xlu0.c.b16.cont [3/8] 0, 128
    %2759 = vxpose.xlu0.c.b16.cont [4/8] 0, 128
    %2760 = vxpose.xlu0.c.b16.cont [5/8] 0, 128
    %2761 = vxpose.xlu0.c.b16.cont [6/8] 0, 128
    %2762 = vxpose.xlu0.c.b16.cont [7/8] 0, 128
    %2763 = vxpose.xlu0.c.b16.end [8/8] 0, 128
    %v2764 = vpop.trf.xlu0
    %v2765 = vpop.trf.xlu0
    %v2766 = vpop.trf.xlu0
    %v2767 = vpop.trf.xlu0
    %v2768 = vpop.trf.xlu0
    %v2769 = vpop.trf.xlu0
    %v2770 = vpop.trf.xlu0
    %v2771 = vpop.trf.xlu0
    %2772 = vxpose.xlu0.c.b16.start [1/8] %v2733, 128
    %2773 = vxpose.xlu0.c.b16.cont [2/8] 0, 128
    %2774 = vxpose.xlu0.c.b16.cont [3/8] 0, 128
    %2775 = vxpose.xlu0.c.b16.cont [4/8] 0, 128
    %2776 = vxpose.xlu0.c.b16.cont [5/8] 0, 128
    %2777 = vxpose.xlu0.c.b16.cont [6/8] 0, 128
    %2778 = vxpose.xlu0.c.b16.cont [7/8] 0, 128
    %2779 = vxpose.xlu0.c.b16.end [8/8] 0, 128
    %v2780 = vpop.trf.xlu0
    %v2781 = vpop.trf.xlu0
    %v2782 = vpop.trf.xlu0
    %v2783 = vpop.trf.xlu0
    %v2784 = vpop.trf.xlu0
    %v2785 = vpop.trf.xlu0
    %v2786 = vpop.trf.xlu0
    %v2787 = vpop.trf.xlu0
    %2788 = vxpose.xlu0.c.b16.start [1/8] %v2735, 128
    %2789 = vxpose.xlu0.c.b16.cont [2/8] 0, 128
    %2790 = vxpose.xlu0.c.b16.cont [3/8] 0, 128
    %2791 = vxpose.xlu0.c.b16.cont [4/8] 0, 128
    %2792 = vxpose.xlu0.c.b16.cont [5/8] 0, 128
    %2793 = vxpose.xlu0.c.b16.cont [6/8] 0, 128
    %2794 = vxpose.xlu0.c.b16.cont [7/8] 0, 128
    %2795 = vxpose.xlu0.c.b16.end [8/8] 0, 128
    %v2796 = vpop.trf.xlu0
    %v2797 = vpop.trf.xlu0
    %v2798 = vpop.trf.xlu0
    %v2799 = vpop.trf.xlu0
    %v2800 = vpop.trf.xlu0
    %v2801 = vpop.trf.xlu0
    %v2802 = vpop.trf.xlu0
    %v2803 = vpop.trf.xlu0
    %v2805 = vsel %vm368, %v2748, 0
    %v2808 = vsel %vm368, %v2724, 0
    %2810 = vmatprep.subr.bf16.mxu0 0
    %2811 = vmatpush1.bf16.xpose.msra.mxu0 %v2808
    %2812 = vmatprep.subr.bf16.mxu0 0
    %2813 = vmatpush1.bf16.xpose.msra.mxu0 0
    %2814 = vmatprep.subr.bf16.mxu0 0
    %2815 = vmatpush1.bf16.xpose.msra.mxu0 0
    %2816 = vmatprep.subr.bf16.mxu0 0
    %2817 = vmatpush1.bf16.xpose.msra.mxu0 0
    %2818 = vmatprep.subr.bf16.mxu0 0
    %2819 = vmatpush1.bf16.xpose.msra.mxu0 0
    %2820 = vmatprep.subr.bf16.mxu0 0
    %2821 = vmatpush1.bf16.xpose.msra.mxu0 0
    %2822 = vmatprep.subr.bf16.mxu0 0
    %2823 = vmatpush1.bf16.xpose.msra.mxu0 0
    %2824 = vmatprep.subr.bf16.mxu0 0
    %2825 = vmatpush1.bf16.xpose.msra.mxu0 0
    %2826 = vmatprep.subr.bf16.mxu0 0
    %2827 = vmatpush1.bf16.xpose.msra.mxu0 0
    %2828 = vmatprep.subr.bf16.mxu0 0
    %2829 = vmatpush1.bf16.xpose.msra.mxu0 0
    %2830 = vmatprep.subr.bf16.mxu0 0
    %2831 = vmatpush1.bf16.xpose.msra.mxu0 0
    %2832 = vmatprep.subr.bf16.mxu0 0
    %2833 = vmatpush1.bf16.xpose.msra.mxu0 0
    %2834 = vmatprep.subr.bf16.mxu0 0
    %2835 = vmatpush1.bf16.xpose.msra.mxu0 0
    %2836 = vmatprep.subr.bf16.mxu0 0
    %2837 = vmatpush1.bf16.xpose.msra.mxu0 0
    %2838 = vmatprep.subr.bf16.mxu0 0
    %2839 = vmatpush1.bf16.xpose.msra.mxu0 0
    %2840 = vmatprep.subr.bf16.mxu0 0
    %2841 = vmatpush1.bf16.xpose.msra.mxu0 0
    %2842 = vmatprep.mubr.bf16.mxu0 0
    %2843 = vmatmul.mubr.bf16.gmra.mrb[0].mxu0 %v2805
    %v2844 = vpop.f32.mrb[0].mxu0
    %v2845 = vadd.f32 0.0, %v2844
    %v2846 = vpop.f32.mrb[0].mxu0
    %v2847 = vpop.f32.mrb[0].mxu0
    %v2848 = vpop.f32.mrb[0].mxu0
    %2849 = vdwg.mxu0
    %v2851 = vsel %vm368, %v2764, 0
    %v2854 = vsel %vm368, %v2725, 0
    %2856 = vmatprep.subr.bf16.mxu0 0
    %2857 = vmatpush1.bf16.xpose.msra.mxu0 %v2854
    %2858 = vmatprep.subr.bf16.mxu0 0
    %2859 = vmatpush1.bf16.xpose.msra.mxu0 0
    %2860 = vmatprep.subr.bf16.mxu0 0
    %2861 = vmatpush1.bf16.xpose.msra.mxu0 0
    %2862 = vmatprep.subr.bf16.mxu0 0
    %2863 = vmatpush1.bf16.xpose.msra.mxu0 0
    %2864 = vmatprep.subr.bf16.mxu0 0
    %2865 = vmatpush1.bf16.xpose.msra.mxu0 0
    %2866 = vmatprep.subr.bf16.mxu0 0
    %2867 = vmatpush1.bf16.xpose.msra.mxu0 0
    %2868 = vmatprep.subr.bf16.mxu0 0
    %2869 = vmatpush1.bf16.xpose.msra.mxu0 0
    %2870 = vmatprep.subr.bf16.mxu0 0
    %2871 = vmatpush1.bf16.xpose.msra.mxu0 0
    %2872 = vmatprep.subr.bf16.mxu0 0
    %2873 = vmatpush1.bf16.xpose.msra.mxu0 0
    %2874 = vmatprep.subr.bf16.mxu0 0
    %2875 = vmatpush1.bf16.xpose.msra.mxu0 0
    %2876 = vmatprep.subr.bf16.mxu0 0
    %2877 = vmatpush1.bf16.xpose.msra.mxu0 0
    %2878 = vmatprep.subr.bf16.mxu0 0
    %2879 = vmatpush1.bf16.xpose.msra.mxu0 0
    %2880 = vmatprep.subr.bf16.mxu0 0
    %2881 = vmatpush1.bf16.xpose.msra.mxu0 0
    %2882 = vmatprep.subr.bf16.mxu0 0
    %2883 = vmatpush1.bf16.xpose.msra.mxu0 0
    %2884 = vmatprep.subr.bf16.mxu0 0
    %2885 = vmatpush1.bf16.xpose.msra.mxu0 0
    %2886 = vmatprep.subr.bf16.mxu0 0
    %2887 = vmatpush1.bf16.xpose.msra.mxu0 0
    %2888 = vmatprep.mubr.bf16.mxu0 0
    %2889 = vmatmul.mubr.bf16.gmra.mrb[0].mxu0 %v2851
    %v2890 = vpop.f32.mrb[0].mxu0
    %v2891 = vadd.f32 0.0, %v2890
    %v2892 = vpop.f32.mrb[0].mxu0
    %v2893 = vpop.f32.mrb[0].mxu0
    %v2894 = vpop.f32.mrb[0].mxu0
    %2895 = vdwg.mxu0
    %v2897 = vsel %vm368, %v2780, 0
    %v2900 = vsel %vm368, %v2726, 0
    %2902 = vmatprep.subr.bf16.mxu0 0
    %2903 = vmatpush1.bf16.xpose.msra.mxu0 %v2900
    %2904 = vmatprep.subr.bf16.mxu0 0
    %2905 = vmatpush1.bf16.xpose.msra.mxu0 0
    %2906 = vmatprep.subr.bf16.mxu0 0
    %2907 = vmatpush1.bf16.xpose.msra.mxu0 0
    %2908 = vmatprep.subr.bf16.mxu0 0
    %2909 = vmatpush1.bf16.xpose.msra.mxu0 0
    %2910 = vmatprep.subr.bf16.mxu0 0
    %2911 = vmatpush1.bf16.xpose.msra.mxu0 0
    %2912 = vmatprep.subr.bf16.mxu0 0
    %2913 = vmatpush1.bf16.xpose.msra.mxu0 0
    %2914 = vmatprep.subr.bf16.mxu0 0
    %2915 = vmatpush1.bf16.xpose.msra.mxu0 0
    %2916 = vmatprep.subr.bf16.mxu0 0
    %2917 = vmatpush1.bf16.xpose.msra.mxu0 0
    %2918 = vmatprep.subr.bf16.mxu0 0
    %2919 = vmatpush1.bf16.xpose.msra.mxu0 0
    %2920 = vmatprep.subr.bf16.mxu0 0
    %2921 = vmatpush1.bf16.xpose.msra.mxu0 0
    %2922 = vmatprep.subr.bf16.mxu0 0
    %2923 = vmatpush1.bf16.xpose.msra.mxu0 0
    %2924 = vmatprep.subr.bf16.mxu0 0
    %2925 = vmatpush1.bf16.xpose.msra.mxu0 0
    %2926 = vmatprep.subr.bf16.mxu0 0
    %2927 = vmatpush1.bf16.xpose.msra.mxu0 0
    %2928 = vmatprep.subr.bf16.mxu0 0
    %2929 = vmatpush1.bf16.xpose.msra.mxu0 0
    %2930 = vmatprep.subr.bf16.mxu0 0
    %2931 = vmatpush1.bf16.xpose.msra.mxu0 0
    %2932 = vmatprep.subr.bf16.mxu0 0
    %2933 = vmatpush1.bf16.xpose.msra.mxu0 0
    %2934 = vmatprep.mubr.bf16.mxu0 0
    %2935 = vmatmul.mubr.bf16.gmra.mrb[0].mxu0 %v2897
    %v2936 = vpop.f32.mrb[0].mxu0
    %v2937 = vadd.f32 0.0, %v2936
    %v2938 = vpop.f32.mrb[0].mxu0
    %v2939 = vpop.f32.mrb[0].mxu0
    %v2940 = vpop.f32.mrb[0].mxu0
    %2941 = vdwg.mxu0
    %v2943 = vsel %vm368, %v2796, 0
    %v2946 = vsel %vm368, %v2727, 0
    %2948 = vmatprep.subr.bf16.mxu0 0
    %2949 = vmatpush1.bf16.xpose.msra.mxu0 %v2946
    %2950 = vmatprep.subr.bf16.mxu0 0
    %2951 = vmatpush1.bf16.xpose.msra.mxu0 0
    %2952 = vmatprep.subr.bf16.mxu0 0
    %2953 = vmatpush1.bf16.xpose.msra.mxu0 0
    %2954 = vmatprep.subr.bf16.mxu0 0
    %2955 = vmatpush1.bf16.xpose.msra.mxu0 0
    %2956 = vmatprep.subr.bf16.mxu0 0
    %2957 = vmatpush1.bf16.xpose.msra.mxu0 0
    %2958 = vmatprep.subr.bf16.mxu0 0
    %2959 = vmatpush1.bf16.xpose.msra.mxu0 0
    %2960 = vmatprep.subr.bf16.mxu0 0
    %2961 = vmatpush1.bf16.xpose.msra.mxu0 0
    %2962 = vmatprep.subr.bf16.mxu0 0
    %2963 = vmatpush1.bf16.xpose.msra.mxu0 0
    %2964 = vmatprep.subr.bf16.mxu0 0
    %2965 = vmatpush1.bf16.xpose.msra.mxu0 0
    %2966 = vmatprep.subr.bf16.mxu0 0
    %2967 = vmatpush1.bf16.xpose.msra.mxu0 0
    %2968 = vmatprep.subr.bf16.mxu0 0
    %2969 = vmatpush1.bf16.xpose.msra.mxu0 0
    %2970 = vmatprep.subr.bf16.mxu0 0
    %2971 = vmatpush1.bf16.xpose.msra.mxu0 0
    %2972 = vmatprep.subr.bf16.mxu0 0
    %2973 = vmatpush1.bf16.xpose.msra.mxu0 0
    %2974 = vmatprep.subr.bf16.mxu0 0
    %2975 = vmatpush1.bf16.xpose.msra.mxu0 0
    %2976 = vmatprep.subr.bf16.mxu0 0
    %2977 = vmatpush1.bf16.xpose.msra.mxu0 0
    %2978 = vmatprep.subr.bf16.mxu0 0
    %2979 = vmatpush1.bf16.xpose.msra.mxu0 0
    %2980 = vmatprep.mubr.bf16.mxu0 0
    %2981 = vmatmul.mubr.bf16.gmra.mrb[0].mxu0 %v2943
    %v2982 = vpop.f32.mrb[0].mxu0
    %v2983 = vadd.f32 0.0, %v2982
    %v2984 = vpop.f32.mrb[0].mxu0
    %v2985 = vpop.f32.mrb[0].mxu0
    %v2986 = vpop.f32.mrb[0].mxu0
    %2987 = vdwg.mxu0
    %2988 = vxpose.xlu0.b32.start [1/16] %v2845, 128
    %2989 = vxpose.xlu0.b32.cont [2/16] 0.0, 128
    %2990 = vxpose.xlu0.b32.cont [3/16] 0.0, 128
    %2991 = vxpose.xlu0.b32.cont [4/16] 0.0, 128
    %2992 = vxpose.xlu0.b32.cont [5/16] 0.0, 128
    %2993 = vxpose.xlu0.b32.cont [6/16] 0.0, 128
    %2994 = vxpose.xlu0.b32.cont [7/16] 0.0, 128
    %2995 = vxpose.xlu0.b32.cont [8/16] 0.0, 128
    %2996 = vxpose.xlu0.b32.cont [9/16] 0.0, 128
    %2997 = vxpose.xlu0.b32.cont [10/16] 0.0, 128
    %2998 = vxpose.xlu0.b32.cont [11/16] 0.0, 128
    %2999 = vxpose.xlu0.b32.cont [12/16] 0.0, 128
    %3000 = vxpose.xlu0.b32.cont [13/16] 0.0, 128
    %3001 = vxpose.xlu0.b32.cont [14/16] 0.0, 128
    %3002 = vxpose.xlu0.b32.cont [15/16] 0.0, 128
    %3003 = vxpose.xlu0.b32.end [16/16] 0.0, 128
    %v3004 = vpop.trf.xlu0
    %v3005 = vpop.trf.xlu0
    %v3006 = vpop.trf.xlu0
    %v3007 = vpop.trf.xlu0
    %v3008 = vpop.trf.xlu0
    %v3009 = vpop.trf.xlu0
    %v3010 = vpop.trf.xlu0
    %v3011 = vpop.trf.xlu0
    %v3012 = vpop.trf.xlu0
    %v3013 = vpop.trf.xlu0
    %v3014 = vpop.trf.xlu0
    %v3015 = vpop.trf.xlu0
    %v3016 = vpop.trf.xlu0
    %v3017 = vpop.trf.xlu0
    %v3018 = vpop.trf.xlu0
    %v3019 = vpop.trf.xlu0
    %3020 = vxpose.xlu0.b32.start [1/16] %v2891, 128
    %3021 = vxpose.xlu0.b32.cont [2/16] 0.0, 128
    %3022 = vxpose.xlu0.b32.cont [3/16] 0.0, 128
    %3023 = vxpose.xlu0.b32.cont [4/16] 0.0, 128
    %3024 = vxpose.xlu0.b32.cont [5/16] 0.0, 128
    %3025 = vxpose.xlu0.b32.cont [6/16] 0.0, 128
    %3026 = vxpose.xlu0.b32.cont [7/16] 0.0, 128
    %3027 = vxpose.xlu0.b32.cont [8/16] 0.0, 128
    %3028 = vxpose.xlu0.b32.cont [9/16] 0.0, 128
    %3029 = vxpose.xlu0.b32.cont [10/16] 0.0, 128
    %3030 = vxpose.xlu0.b32.cont [11/16] 0.0, 128
    %3031 = vxpose.xlu0.b32.cont [12/16] 0.0, 128
    %3032 = vxpose.xlu0.b32.cont [13/16] 0.0, 128
    %3033 = vxpose.xlu0.b32.cont [14/16] 0.0, 128
    %3034 = vxpose.xlu0.b32.cont [15/16] 0.0, 128
    %3035 = vxpose.xlu0.b32.end [16/16] 0.0, 128
    %v3036 = vpop.trf.xlu0
    %v3037 = vpop.trf.xlu0
    %v3038 = vpop.trf.xlu0
    %v3039 = vpop.trf.xlu0
    %v3040 = vpop.trf.xlu0
    %v3041 = vpop.trf.xlu0
    %v3042 = vpop.trf.xlu0
    %v3043 = vpop.trf.xlu0
    %v3044 = vpop.trf.xlu0
    %v3045 = vpop.trf.xlu0
    %v3046 = vpop.trf.xlu0
    %v3047 = vpop.trf.xlu0
    %v3048 = vpop.trf.xlu0
    %v3049 = vpop.trf.xlu0
    %v3050 = vpop.trf.xlu0
    %v3051 = vpop.trf.xlu0
    %3052 = vxpose.xlu0.b32.start [1/16] %v2937, 128
    %3053 = vxpose.xlu0.b32.cont [2/16] 0.0, 128
    %3054 = vxpose.xlu0.b32.cont [3/16] 0.0, 128
    %3055 = vxpose.xlu0.b32.cont [4/16] 0.0, 128
    %3056 = vxpose.xlu0.b32.cont [5/16] 0.0, 128
    %3057 = vxpose.xlu0.b32.cont [6/16] 0.0, 128
    %3058 = vxpose.xlu0.b32.cont [7/16] 0.0, 128
    %3059 = vxpose.xlu0.b32.cont [8/16] 0.0, 128
    %3060 = vxpose.xlu0.b32.cont [9/16] 0.0, 128
    %3061 = vxpose.xlu0.b32.cont [10/16] 0.0, 128
    %3062 = vxpose.xlu0.b32.cont [11/16] 0.0, 128
    %3063 = vxpose.xlu0.b32.cont [12/16] 0.0, 128
    %3064 = vxpose.xlu0.b32.cont [13/16] 0.0, 128
    %3065 = vxpose.xlu0.b32.cont [14/16] 0.0, 128
    %3066 = vxpose.xlu0.b32.cont [15/16] 0.0, 128
    %3067 = vxpose.xlu0.b32.end [16/16] 0.0, 128
    %v3068 = vpop.trf.xlu0
    %v3069 = vpop.trf.xlu0
    %v3070 = vpop.trf.xlu0
    %v3071 = vpop.trf.xlu0
    %v3072 = vpop.trf.xlu0
    %v3073 = vpop.trf.xlu0
    %v3074 = vpop.trf.xlu0
    %v3075 = vpop.trf.xlu0
    %v3076 = vpop.trf.xlu0
    %v3077 = vpop.trf.xlu0
    %v3078 = vpop.trf.xlu0
    %v3079 = vpop.trf.xlu0
    %v3080 = vpop.trf.xlu0
    %v3081 = vpop.trf.xlu0
    %v3082 = vpop.trf.xlu0
    %v3083 = vpop.trf.xlu0
    %3084 = vxpose.xlu0.b32.start [1/16] %v2983, 128
    %3085 = vxpose.xlu0.b32.cont [2/16] 0.0, 128
    %3086 = vxpose.xlu0.b32.cont [3/16] 0.0, 128
    %3087 = vxpose.xlu0.b32.cont [4/16] 0.0, 128
    %3088 = vxpose.xlu0.b32.cont [5/16] 0.0, 128
    %3089 = vxpose.xlu0.b32.cont [6/16] 0.0, 128
    %3090 = vxpose.xlu0.b32.cont [7/16] 0.0, 128
    %3091 = vxpose.xlu0.b32.cont [8/16] 0.0, 128
    %3092 = vxpose.xlu0.b32.cont [9/16] 0.0, 128
    %3093 = vxpose.xlu0.b32.cont [10/16] 0.0, 128
    %3094 = vxpose.xlu0.b32.cont [11/16] 0.0, 128
    %3095 = vxpose.xlu0.b32.cont [12/16] 0.0, 128
    %3096 = vxpose.xlu0.b32.cont [13/16] 0.0, 128
    %3097 = vxpose.xlu0.b32.cont [14/16] 0.0, 128
    %3098 = vxpose.xlu0.b32.cont [15/16] 0.0, 128
    %3099 = vxpose.xlu0.b32.end [16/16] 0.0, 128
    %v3100 = vpop.trf.xlu0
    %v3101 = vpop.trf.xlu0
    %v3102 = vpop.trf.xlu0
    %v3103 = vpop.trf.xlu0
    %v3104 = vpop.trf.xlu0
    %v3105 = vpop.trf.xlu0
    %v3106 = vpop.trf.xlu0
    %v3107 = vpop.trf.xlu0
    %v3108 = vpop.trf.xlu0
    %v3109 = vpop.trf.xlu0
    %v3110 = vpop.trf.xlu0
    %v3111 = vpop.trf.xlu0
    %v3112 = vpop.trf.xlu0
    %v3113 = vpop.trf.xlu0
    %v3114 = vpop.trf.xlu0
    %v3115 = vpop.trf.xlu0
    %v3116 = vcombine.low %v3004, %v3068
    %v3117 = vcombine.high %v3004, %v3068
    %v3119 = vunpack.c.l.s4 1983009808
    %v3120 = vunpack.c.0.s8 %v3119
    %v3121 = vlaneseq
    %v3122 = vshrl.u32 %v3121, 7
    %v3123 = vsub.s32 %v3120, %v3122
    %v3124 = vrot.slane %v3116, %v3123
    %v3126 = vunpack.c.l.s4 1983009808
    %v3127 = vunpack.c.0.s8 %v3126
    %v3128 = vlaneseq
    %v3129 = vshrl.u32 %v3128, 7
    %v3130 = vsub.s32 %v3127, %v3129
    %v3131 = vrot.slane %v3117, %v3130
    %v3132 = vcombine.low %v3036, %v3100
    %v3133 = vcombine.high %v3036, %v3100
    %v3135 = vunpack.c.l.s4 1983009808
    %v3136 = vunpack.c.0.s8 %v3135
    %v3137 = vlaneseq
    %v3138 = vshrl.u32 %v3137, 7
    %v3139 = vsub.s32 %v3136, %v3138
    %v3140 = vrot.slane %v3132, %v3139
    %v3142 = vunpack.c.l.s4 1983009808
    %v3143 = vunpack.c.0.s8 %v3142
    %v3144 = vlaneseq
    %v3145 = vshrl.u32 %v3144, 7
    %v3146 = vsub.s32 %v3143, %v3145
    %v3147 = vrot.slane %v3133, %v3146
    %v3148 = vcombine.low %v3124, %v3140
    %v3149 = vcombine.high %v3124, %v3140
    %v3151 = vunpack.c.l.s4 1934713408
    %v3152 = vunpack.c.0.s8 %v3151
    %v3153 = vlaneseq
    %v3154 = vshrl.u32 %v3153, 7
    %v3155 = vsub.s32 %v3152, %v3154
    %v3156 = vrot.slane %v3148, %v3155
    %v3158 = vunpack.c.l.s4 1934713408
    %v3159 = vunpack.c.0.s8 %v3158
    %v3160 = vlaneseq
    %v3161 = vshrl.u32 %v3160, 7
    %v3162 = vsub.s32 %v3159, %v3161
    %v3163 = vrot.slane %v3149, %v3162
    %v3164 = vcombine.low %v3131, %v3147
    %v3165 = vcombine.high %v3131, %v3147
    %v3167 = vunpack.c.l.s4 1934713408
    %v3168 = vunpack.c.0.s8 %v3167
    %v3169 = vlaneseq
    %v3170 = vshrl.u32 %v3169, 7
    %v3171 = vsub.s32 %v3168, %v3170
    %v3172 = vrot.slane %v3164, %v3171
    %v3174 = vunpack.c.l.s4 1934713408
    %v3175 = vunpack.c.0.s8 %v3174
    %v3176 = vlaneseq
    %v3177 = vshrl.u32 %v3176, 7
    %v3178 = vsub.s32 %v3175, %v3177
    %v3179 = vrot.slane %v3165, %v3178
    %v3180 = vcombine.high %v3156, 0.0
    %v3181 = vcombine.high %v3163, 0.0
    %v3182 = vcombine.high %v3172, 0.0
    %v3183 = vcombine.high %v3179, 0.0
    %v3184 = vcombine.low %v3156, %v3163
    %v3186 = vunpack.c.l.s4 1983009808
    %v3187 = vunpack.c.0.s8 %v3186
    %v3188 = vlaneseq
    %v3189 = vshrl.u32 %v3188, 7
    %v3190 = vsub.s32 %v3187, %v3189
    %v3191 = vrot.slane %v3184, %v3190
    %v3192 = vcombine.low %v3180, %v3181
    %v3194 = vunpack.c.l.s4 1983009808
    %v3195 = vunpack.c.0.s8 %v3194
    %v3196 = vlaneseq
    %v3197 = vshrl.u32 %v3196, 7
    %v3198 = vsub.s32 %v3195, %v3197
    %v3199 = vrot.slane %v3192, %v3198
    %v3200 = vcombine.low %v3172, %v3179
    %v3202 = vunpack.c.l.s4 1983009808
    %v3203 = vunpack.c.0.s8 %v3202
    %v3204 = vlaneseq
    %v3205 = vshrl.u32 %v3204, 7
    %v3206 = vsub.s32 %v3203, %v3205
    %v3207 = vrot.slane %v3200, %v3206
    %v3208 = vcombine.low %v3182, %v3183
    %v3210 = vunpack.c.l.s4 1983009808
    %v3211 = vunpack.c.0.s8 %v3210
    %v3212 = vlaneseq
    %v3213 = vshrl.u32 %v3212, 7
    %v3214 = vsub.s32 %v3211, %v3213
    %v3215 = vrot.slane %v3208, %v3214
    %v3216 = vcombine.low %v3191, %v3199
    %v3217 = vcombine.high %v3191, %v3199
    %v3219 = vunpack.c.l.s4 1934713408
    %v3220 = vunpack.c.0.s8 %v3219
    %v3221 = vlaneseq
    %v3222 = vshrl.u32 %v3221, 7
    %v3223 = vsub.s32 %v3220, %v3222
    %v3224 = vrot.slane %v3216, %v3223
    %v3226 = vunpack.c.l.s4 1934713408
    %v3227 = vunpack.c.0.s8 %v3226
    %v3228 = vlaneseq
    %v3229 = vshrl.u32 %v3228, 7
    %v3230 = vsub.s32 %v3227, %v3229
    %v3231 = vrot.slane %v3217, %v3230
    %v3232 = vcombine.low %v3207, %v3215
    %v3233 = vcombine.high %v3207, %v3215
    %v3235 = vunpack.c.l.s4 1934713408
    %v3236 = vunpack.c.0.s8 %v3235
    %v3237 = vlaneseq
    %v3238 = vshrl.u32 %v3237, 7
    %v3239 = vsub.s32 %v3236, %v3238
    %v3240 = vrot.slane %v3232, %v3239
    %v3242 = vunpack.c.l.s4 1934713408
    %v3243 = vunpack.c.0.s8 %v3242
    %v3244 = vlaneseq
    %v3245 = vshrl.u32 %v3244, 7
    %v3246 = vsub.s32 %v3243, %v3245
    %v3247 = vrot.slane %v3233, %v3246
    %v3248 = vcombine.low %v3224, %v3240
    %v3249 = vcombine.high %v3224, %v3240
    %v3250 = vcombine.low %v3231, %v3247
    %v3251 = vcombine.high %v3231, %v3247
    %3253 = vrot.lane.b32.xlu0 %v3249, 8
    %v3254 = vpop.permute.xlu0 %3253
    %3257 = vrot.lane.b32.xlu0 %v3250, 16
    %v3258 = vpop.permute.xlu0 %3257
    %3261 = vrot.lane.b32.xlu0 %v3251, 24
    %v3262 = vpop.permute.xlu0 %3261
    %v3264 = vsel %vm368, %v3248, %v3254
    %v3265 = vsel %vm1147, %v3264, %v3258
    %v3266 = vsel %vm1149, %v3265, %v3262
    %3267 = vst.msk [vmem:[#allocation2] sm:$0xff] %vm172, %v3266
    %v3268 = vrot.slane %v2404, 4
    %v3269 = vrot.slane %v2407, 4
    %v3270 = vrot.slane %v2409, 4
    %v3271 = vrot.slane %v2411, 4
    %3272 = vrot.lane.b32.xlu0 %v3268, 96
    %v3273 = vpop.permute.xlu0 %3272
    %3274 = vrot.lane.b32.xlu0 %v3269, 96
    %v3275 = vpop.permute.xlu0 %3274
    %3276 = vrot.lane.b32.xlu0 %v3270, 96
    %v3277 = vpop.permute.xlu0 %3276
    %3278 = vrot.lane.b32.xlu0 %v3271, 96
    %v3279 = vpop.permute.xlu0 %3278
    %3284 = vxpose.xlu0.c.b16.start [1/8] %v3273, 128
    %3285 = vxpose.xlu0.c.b16.cont [2/8] 0, 128
    %3286 = vxpose.xlu0.c.b16.cont [3/8] 0, 128
    %3287 = vxpose.xlu0.c.b16.cont [4/8] 0, 128
    %3288 = vxpose.xlu0.c.b16.cont [5/8] 0, 128
    %3289 = vxpose.xlu0.c.b16.cont [6/8] 0, 128
    %3290 = vxpose.xlu0.c.b16.cont [7/8] 0, 128
    %3291 = vxpose.xlu0.c.b16.end [8/8] 0, 128
    %v3292 = vpop.trf.xlu0
    %v3293 = vpop.trf.xlu0
    %v3294 = vpop.trf.xlu0
    %v3295 = vpop.trf.xlu0
    %v3296 = vpop.trf.xlu0
    %v3297 = vpop.trf.xlu0
    %v3298 = vpop.trf.xlu0
    %v3299 = vpop.trf.xlu0
    %3300 = vxpose.xlu0.c.b16.start [1/8] %v3275, 128
    %3301 = vxpose.xlu0.c.b16.cont [2/8] 0, 128
    %3302 = vxpose.xlu0.c.b16.cont [3/8] 0, 128
    %3303 = vxpose.xlu0.c.b16.cont [4/8] 0, 128
    %3304 = vxpose.xlu0.c.b16.cont [5/8] 0, 128
    %3305 = vxpose.xlu0.c.b16.cont [6/8] 0, 128
    %3306 = vxpose.xlu0.c.b16.cont [7/8] 0, 128
    %3307 = vxpose.xlu0.c.b16.end [8/8] 0, 128
    %v3308 = vpop.trf.xlu0
    %v3309 = vpop.trf.xlu0
    %v3310 = vpop.trf.xlu0
    %v3311 = vpop.trf.xlu0
    %v3312 = vpop.trf.xlu0
    %v3313 = vpop.trf.xlu0
    %v3314 = vpop.trf.xlu0
    %v3315 = vpop.trf.xlu0
    %3316 = vxpose.xlu0.c.b16.start [1/8] %v3277, 128
    %3317 = vxpose.xlu0.c.b16.cont [2/8] 0, 128
    %3318 = vxpose.xlu0.c.b16.cont [3/8] 0, 128
    %3319 = vxpose.xlu0.c.b16.cont [4/8] 0, 128
    %3320 = vxpose.xlu0.c.b16.cont [5/8] 0, 128
    %3321 = vxpose.xlu0.c.b16.cont [6/8] 0, 128
    %3322 = vxpose.xlu0.c.b16.cont [7/8] 0, 128
    %3323 = vxpose.xlu0.c.b16.end [8/8] 0, 128
    %v3324 = vpop.trf.xlu0
    %v3325 = vpop.trf.xlu0
    %v3326 = vpop.trf.xlu0
    %v3327 = vpop.trf.xlu0
    %v3328 = vpop.trf.xlu0
    %v3329 = vpop.trf.xlu0
    %v3330 = vpop.trf.xlu0
    %v3331 = vpop.trf.xlu0
    %3332 = vxpose.xlu0.c.b16.start [1/8] %v3279, 128
    %3333 = vxpose.xlu0.c.b16.cont [2/8] 0, 128
    %3334 = vxpose.xlu0.c.b16.cont [3/8] 0, 128
    %3335 = vxpose.xlu0.c.b16.cont [4/8] 0, 128
    %3336 = vxpose.xlu0.c.b16.cont [5/8] 0, 128
    %3337 = vxpose.xlu0.c.b16.cont [6/8] 0, 128
    %3338 = vxpose.xlu0.c.b16.cont [7/8] 0, 128
    %3339 = vxpose.xlu0.c.b16.end [8/8] 0, 128
    %v3340 = vpop.trf.xlu0
    %v3341 = vpop.trf.xlu0
    %v3342 = vpop.trf.xlu0
    %v3343 = vpop.trf.xlu0
    %v3344 = vpop.trf.xlu0
    %v3345 = vpop.trf.xlu0
    %v3346 = vpop.trf.xlu0
    %v3347 = vpop.trf.xlu0
    %v3349 = vsel %vm368, %v3268, 0
    %v3352 = vsel %vm372, %v3292, 0
    %3354 = vmatprep.subr.bf16.mxu0 0
    %3355 = vmatpush1.bf16.msra.mxu0 %v3352
    %3356 = vmatprep.subr.bf16.mxu0 0
    %3357 = vmatpush1.bf16.msra.mxu0 0
    %3358 = vmatprep.subr.bf16.mxu0 0
    %3359 = vmatpush1.bf16.msra.mxu0 0
    %3360 = vmatprep.subr.bf16.mxu0 0
    %3361 = vmatpush1.bf16.msra.mxu0 0
    %3362 = vmatprep.subr.bf16.mxu0 0
    %3363 = vmatpush1.bf16.msra.mxu0 0
    %3364 = vmatprep.subr.bf16.mxu0 0
    %3365 = vmatpush1.bf16.msra.mxu0 0
    %3366 = vmatprep.subr.bf16.mxu0 0
    %3367 = vmatpush1.bf16.msra.mxu0 0
    %3368 = vmatprep.subr.bf16.mxu0 0
    %3369 = vmatpush1.bf16.msra.mxu0 0
    %3370 = vmatprep.subr.bf16.mxu0 0
    %3371 = vmatpush1.bf16.msra.mxu0 0
    %3372 = vmatprep.subr.bf16.mxu0 0
    %3373 = vmatpush1.bf16.msra.mxu0 0
    %3374 = vmatprep.subr.bf16.mxu0 0
    %3375 = vmatpush1.bf16.msra.mxu0 0
    %3376 = vmatprep.subr.bf16.mxu0 0
    %3377 = vmatpush1.bf16.msra.mxu0 0
    %3378 = vmatprep.subr.bf16.mxu0 0
    %3379 = vmatpush1.bf16.msra.mxu0 0
    %3380 = vmatprep.subr.bf16.mxu0 0
    %3381 = vmatpush1.bf16.msra.mxu0 0
    %3382 = vmatprep.subr.bf16.mxu0 0
    %3383 = vmatpush1.bf16.msra.mxu0 0
    %3384 = vmatprep.subr.bf16.mxu0 0
    %3385 = vmatpush1.bf16.msra.mxu0 0
    %3386 = vmatprep.mubr.bf16.mxu0 0
    %3387 = vmatmul.mubr.bf16.gmra.mrb[0].mxu0 %v3349
    %v3388 = vpop.f32.mrb[0].mxu0
    %v3389 = vadd.f32 0.0, %v3388
    %v3390 = vpop.f32.mrb[0].mxu0
    %v3391 = vpop.f32.mrb[0].mxu0
    %v3392 = vpop.f32.mrb[0].mxu0
    %3393 = vdwg.mxu0
    %v3395 = vsel %vm368, %v3269, 0
    %v3398 = vsel %vm372, %v3308, 0
    %3400 = vmatprep.subr.bf16.mxu0 0
    %3401 = vmatpush1.bf16.msra.mxu0 %v3398
    %3402 = vmatprep.subr.bf16.mxu0 0
    %3403 = vmatpush1.bf16.msra.mxu0 0
    %3404 = vmatprep.subr.bf16.mxu0 0
    %3405 = vmatpush1.bf16.msra.mxu0 0
    %3406 = vmatprep.subr.bf16.mxu0 0
    %3407 = vmatpush1.bf16.msra.mxu0 0
    %3408 = vmatprep.subr.bf16.mxu0 0
    %3409 = vmatpush1.bf16.msra.mxu0 0
    %3410 = vmatprep.subr.bf16.mxu0 0
    %3411 = vmatpush1.bf16.msra.mxu0 0
    %3412 = vmatprep.subr.bf16.mxu0 0
    %3413 = vmatpush1.bf16.msra.mxu0 0
    %3414 = vmatprep.subr.bf16.mxu0 0
    %3415 = vmatpush1.bf16.msra.mxu0 0
    %3416 = vmatprep.subr.bf16.mxu0 0
    %3417 = vmatpush1.bf16.msra.mxu0 0
    %3418 = vmatprep.subr.bf16.mxu0 0
    %3419 = vmatpush1.bf16.msra.mxu0 0
    %3420 = vmatprep.subr.bf16.mxu0 0
    %3421 = vmatpush1.bf16.msra.mxu0 0
    %3422 = vmatprep.subr.bf16.mxu0 0
    %3423 = vmatpush1.bf16.msra.mxu0 0
    %3424 = vmatprep.subr.bf16.mxu0 0
    %3425 = vmatpush1.bf16.msra.mxu0 0
    %3426 = vmatprep.subr.bf16.mxu0 0
    %3427 = vmatpush1.bf16.msra.mxu0 0
    %3428 = vmatprep.subr.bf16.mxu0 0
    %3429 = vmatpush1.bf16.msra.mxu0 0
    %3430 = vmatprep.subr.bf16.mxu0 0
    %3431 = vmatpush1.bf16.msra.mxu0 0
    %3432 = vmatprep.mubr.bf16.mxu0 0
    %3433 = vmatmul.mubr.bf16.gmra.mrb[0].mxu0 %v3395
    %v3434 = vpop.f32.mrb[0].mxu0
    %v3435 = vadd.f32 0.0, %v3434
    %v3436 = vpop.f32.mrb[0].mxu0
    %v3437 = vpop.f32.mrb[0].mxu0
    %v3438 = vpop.f32.mrb[0].mxu0
    %3439 = vdwg.mxu0
    %v3441 = vsel %vm368, %v3270, 0
    %v3444 = vsel %vm372, %v3324, 0
    %3446 = vmatprep.subr.bf16.mxu0 0
    %3447 = vmatpush1.bf16.msra.mxu0 %v3444
    %3448 = vmatprep.subr.bf16.mxu0 0
    %3449 = vmatpush1.bf16.msra.mxu0 0
    %3450 = vmatprep.subr.bf16.mxu0 0
    %3451 = vmatpush1.bf16.msra.mxu0 0
    %3452 = vmatprep.subr.bf16.mxu0 0
    %3453 = vmatpush1.bf16.msra.mxu0 0
    %3454 = vmatprep.subr.bf16.mxu0 0
    %3455 = vmatpush1.bf16.msra.mxu0 0
    %3456 = vmatprep.subr.bf16.mxu0 0
    %3457 = vmatpush1.bf16.msra.mxu0 0
    %3458 = vmatprep.subr.bf16.mxu0 0
    %3459 = vmatpush1.bf16.msra.mxu0 0
    %3460 = vmatprep.subr.bf16.mxu0 0
    %3461 = vmatpush1.bf16.msra.mxu0 0
    %3462 = vmatprep.subr.bf16.mxu0 0
    %3463 = vmatpush1.bf16.msra.mxu0 0
    %3464 = vmatprep.subr.bf16.mxu0 0
    %3465 = vmatpush1.bf16.msra.mxu0 0
    %3466 = vmatprep.subr.bf16.mxu0 0
    %3467 = vmatpush1.bf16.msra.mxu0 0
    %3468 = vmatprep.subr.bf16.mxu0 0
    %3469 = vmatpush1.bf16.msra.mxu0 0
    %3470 = vmatprep.subr.bf16.mxu0 0
    %3471 = vmatpush1.bf16.msra.mxu0 0
    %3472 = vmatprep.subr.bf16.mxu0 0
    %3473 = vmatpush1.bf16.msra.mxu0 0
    %3474 = vmatprep.subr.bf16.mxu0 0
    %3475 = vmatpush1.bf16.msra.mxu0 0
    %3476 = vmatprep.subr.bf16.mxu0 0
    %3477 = vmatpush1.bf16.msra.mxu0 0
    %3478 = vmatprep.mubr.bf16.mxu0 0
    %3479 = vmatmul.mubr.bf16.gmra.mrb[0].mxu0 %v3441
    %v3480 = vpop.f32.mrb[0].mxu0
    %v3481 = vadd.f32 0.0, %v3480
    %v3482 = vpop.f32.mrb[0].mxu0
    %v3483 = vpop.f32.mrb[0].mxu0
    %v3484 = vpop.f32.mrb[0].mxu0
    %3485 = vdwg.mxu0
    %v3487 = vsel %vm368, %v3271, 0
    %v3490 = vsel %vm372, %v3340, 0
    %3492 = vmatprep.subr.bf16.mxu0 0
    %3493 = vmatpush1.bf16.msra.mxu0 %v3490
    %3494 = vmatprep.subr.bf16.mxu0 0
    %3495 = vmatpush1.bf16.msra.mxu0 0
    %3496 = vmatprep.subr.bf16.mxu0 0
    %3497 = vmatpush1.bf16.msra.mxu0 0
    %3498 = vmatprep.subr.bf16.mxu0 0
    %3499 = vmatpush1.bf16.msra.mxu0 0
    %3500 = vmatprep.subr.bf16.mxu0 0
    %3501 = vmatpush1.bf16.msra.mxu0 0
    %3502 = vmatprep.subr.bf16.mxu0 0
    %3503 = vmatpush1.bf16.msra.mxu0 0
    %3504 = vmatprep.subr.bf16.mxu0 0
    %3505 = vmatpush1.bf16.msra.mxu0 0
    %3506 = vmatprep.subr.bf16.mxu0 0
    %3507 = vmatpush1.bf16.msra.mxu0 0
    %3508 = vmatprep.subr.bf16.mxu0 0
    %3509 = vmatpush1.bf16.msra.mxu0 0
    %3510 = vmatprep.subr.bf16.mxu0 0
    %3511 = vmatpush1.bf16.msra.mxu0 0
    %3512 = vmatprep.subr.bf16.mxu0 0
    %3513 = vmatpush1.bf16.msra.mxu0 0
    %3514 = vmatprep.subr.bf16.mxu0 0
    %3515 = vmatpush1.bf16.msra.mxu0 0
    %3516 = vmatprep.subr.bf16.mxu0 0
    %3517 = vmatpush1.bf16.msra.mxu0 0
    %3518 = vmatprep.subr.bf16.mxu0 0
    %3519 = vmatpush1.bf16.msra.mxu0 0
    %3520 = vmatprep.subr.bf16.mxu0 0
    %3521 = vmatpush1.bf16.msra.mxu0 0
    %3522 = vmatprep.subr.bf16.mxu0 0
    %3523 = vmatpush1.bf16.msra.mxu0 0
    %3524 = vmatprep.mubr.bf16.mxu0 0
    %3525 = vmatmul.mubr.bf16.gmra.mrb[0].mxu0 %v3487
    %v3526 = vpop.f32.mrb[0].mxu0
    %v3527 = vadd.f32 0.0, %v3526
    %v3528 = vpop.f32.mrb[0].mxu0
    %v3529 = vpop.f32.mrb[0].mxu0
    %v3530 = vpop.f32.mrb[0].mxu0
    %3531 = vdwg.mxu0
    %v3532 = vmul.f32 %v3389, 0.35355338
    %v3533 = vmul.f32 %v3435, 0.35355338
    %v3534 = vmul.f32 %v3481, 0.35355338
    %v3535 = vmul.f32 %v3527, 0.35355338
    %v3536 = vadd.f32 %v3532, %v169
    %v3537 = vadd.f32 %v3533, %v169
    %v3538 = vadd.f32 %v3534, %v169
    %v3539 = vadd.f32 %v3535, %v169
    %v3540 = vsel %vm368, %v3536, -inf
    %3541 = vmax.xlane.f32.xlu0 %v3540
    %v3542 = vpop.xlane.xlu0 %3541
    %v3543 = vsel %vm368, %v3537, -inf
    %3544 = vmax.xlane.f32.xlu0 %v3543
    %v3545 = vpop.xlane.xlu0 %3544
    %v3546 = vsel %vm368, %v3538, -inf
    %3547 = vmax.xlane.f32.xlu0 %v3546
    %v3548 = vpop.xlane.xlu0 %3547
    %v3549 = vsel %vm368, %v3539, -inf
    %3550 = vmax.xlane.f32.xlu0 %v3549
    %v3551 = vpop.xlane.xlu0 %3550
    %v3552 = vsub.f32 %v3536, %v3542
    %v3553 = vsub.f32 %v3537, %v3545
    %v3554 = vsub.f32 %v3538, %v3548
    %v3555 = vsub.f32 %v3539, %v3551
    %v3556 = vmul.f32 %v3552, 1.442695
    %v3557 = vpow.pop %v3556
    %v3558 = vmul.f32 %v3553, 1.442695
    %v3559 = vpow.pop %v3558
    %v3560 = vmul.f32 %v3554, 1.442695
    %v3561 = vpow.pop %v3560
    %v3562 = vmul.f32 %v3555, 1.442695
    %v3563 = vpow.pop %v3562
    %v3564 = vsel %vm368, %v3557, 0.0
    %3565 = vadd.xlane.f32.xlu0 %v3564
    %v3566 = vpop.xlane.xlu0 %3565
    %v3567 = vsel %vm368, %v3559, 0.0
    %3568 = vadd.xlane.f32.xlu0 %v3567
    %v3569 = vpop.xlane.xlu0 %3568
    %v3570 = vsel %vm368, %v3561, 0.0
    %3571 = vadd.xlane.f32.xlu0 %v3570
    %v3572 = vpop.xlane.xlu0 %3571
    %v3573 = vsel %vm368, %v3563, 0.0
    %3574 = vadd.xlane.f32.xlu0 %v3573
    %v3575 = vpop.xlane.xlu0 %3574
    %v3576 = vrcp.pop %v3566
    %v3577 = vrcp.pop %v3569
    %v3578 = vrcp.pop %v3572
    %v3579 = vrcp.pop %v3575
    %v3580 = vmul.f32 %v3557, %v3576
    %v3581 = vmul.f32 %v3559, %v3577
    %v3582 = vmul.f32 %v3561, %v3578
    %v3583 = vmul.f32 %v3563, %v3579
    %v3584 = vpack.c.bf16 %v3580, %v3580
    %v3585 = vpack.c.bf16 %v3581, %v3581
    %v3586 = vpack.c.bf16 %v3582, %v3582
    %v3587 = vpack.c.bf16 %v3583, %v3583
    %3588 = vrot.lane.b32.xlu0 %v3268, 64
    %v3589 = vpop.permute.xlu0 %3588
    %3590 = vrot.lane.b32.xlu0 %v3269, 64
    %v3591 = vpop.permute.xlu0 %3590
    %3592 = vrot.lane.b32.xlu0 %v3270, 64
    %v3593 = vpop.permute.xlu0 %3592
    %3594 = vrot.lane.b32.xlu0 %v3271, 64
    %v3595 = vpop.permute.xlu0 %3594
    %3600 = vxpose.xlu0.c.b16.start [1/8] %v3589, 128
    %3601 = vxpose.xlu0.c.b16.cont [2/8] 0, 128
    %3602 = vxpose.xlu0.c.b16.cont [3/8] 0, 128
    %3603 = vxpose.xlu0.c.b16.cont [4/8] 0, 128
    %3604 = vxpose.xlu0.c.b16.cont [5/8] 0, 128
    %3605 = vxpose.xlu0.c.b16.cont [6/8] 0, 128
    %3606 = vxpose.xlu0.c.b16.cont [7/8] 0, 128
    %3607 = vxpose.xlu0.c.b16.end [8/8] 0, 128
    %v3608 = vpop.trf.xlu0
    %v3609 = vpop.trf.xlu0
    %v3610 = vpop.trf.xlu0
    %v3611 = vpop.trf.xlu0
    %v3612 = vpop.trf.xlu0
    %v3613 = vpop.trf.xlu0
    %v3614 = vpop.trf.xlu0
    %v3615 = vpop.trf.xlu0
    %3616 = vxpose.xlu0.c.b16.start [1/8] %v3591, 128
    %3617 = vxpose.xlu0.c.b16.cont [2/8] 0, 128
    %3618 = vxpose.xlu0.c.b16.cont [3/8] 0, 128
    %3619 = vxpose.xlu0.c.b16.cont [4/8] 0, 128
    %3620 = vxpose.xlu0.c.b16.cont [5/8] 0, 128
    %3621 = vxpose.xlu0.c.b16.cont [6/8] 0, 128
    %3622 = vxpose.xlu0.c.b16.cont [7/8] 0, 128
    %3623 = vxpose.xlu0.c.b16.end [8/8] 0, 128
    %v3624 = vpop.trf.xlu0
    %v3625 = vpop.trf.xlu0
    %v3626 = vpop.trf.xlu0
    %v3627 = vpop.trf.xlu0
    %v3628 = vpop.trf.xlu0
    %v3629 = vpop.trf.xlu0
    %v3630 = vpop.trf.xlu0
    %v3631 = vpop.trf.xlu0
    %3632 = vxpose.xlu0.c.b16.start [1/8] %v3593, 128
    %3633 = vxpose.xlu0.c.b16.cont [2/8] 0, 128
    %3634 = vxpose.xlu0.c.b16.cont [3/8] 0, 128
    %3635 = vxpose.xlu0.c.b16.cont [4/8] 0, 128
    %3636 = vxpose.xlu0.c.b16.cont [5/8] 0, 128
    %3637 = vxpose.xlu0.c.b16.cont [6/8] 0, 128
    %3638 = vxpose.xlu0.c.b16.cont [7/8] 0, 128
    %3639 = vxpose.xlu0.c.b16.end [8/8] 0, 128
    %v3640 = vpop.trf.xlu0
    %v3641 = vpop.trf.xlu0
    %v3642 = vpop.trf.xlu0
    %v3643 = vpop.trf.xlu0
    %v3644 = vpop.trf.xlu0
    %v3645 = vpop.trf.xlu0
    %v3646 = vpop.trf.xlu0
    %v3647 = vpop.trf.xlu0
    %3648 = vxpose.xlu0.c.b16.start [1/8] %v3595, 128
    %3649 = vxpose.xlu0.c.b16.cont [2/8] 0, 128
    %3650 = vxpose.xlu0.c.b16.cont [3/8] 0, 128
    %3651 = vxpose.xlu0.c.b16.cont [4/8] 0, 128
    %3652 = vxpose.xlu0.c.b16.cont [5/8] 0, 128
    %3653 = vxpose.xlu0.c.b16.cont [6/8] 0, 128
    %3654 = vxpose.xlu0.c.b16.cont [7/8] 0, 128
    %3655 = vxpose.xlu0.c.b16.end [8/8] 0, 128
    %v3656 = vpop.trf.xlu0
    %v3657 = vpop.trf.xlu0
    %v3658 = vpop.trf.xlu0
    %v3659 = vpop.trf.xlu0
    %v3660 = vpop.trf.xlu0
    %v3661 = vpop.trf.xlu0
    %v3662 = vpop.trf.xlu0
    %v3663 = vpop.trf.xlu0
    %v3665 = vsel %vm368, %v3608, 0
    %v3668 = vsel %vm368, %v3584, 0
    %3670 = vmatprep.subr.bf16.mxu0 0
    %3671 = vmatpush1.bf16.xpose.msra.mxu0 %v3668
    %3672 = vmatprep.subr.bf16.mxu0 0
    %3673 = vmatpush1.bf16.xpose.msra.mxu0 0
    %3674 = vmatprep.subr.bf16.mxu0 0
    %3675 = vmatpush1.bf16.xpose.msra.mxu0 0
    %3676 = vmatprep.subr.bf16.mxu0 0
    %3677 = vmatpush1.bf16.xpose.msra.mxu0 0
    %3678 = vmatprep.subr.bf16.mxu0 0
    %3679 = vmatpush1.bf16.xpose.msra.mxu0 0
    %3680 = vmatprep.subr.bf16.mxu0 0
    %3681 = vmatpush1.bf16.xpose.msra.mxu0 0
    %3682 = vmatprep.subr.bf16.mxu0 0
    %3683 = vmatpush1.bf16.xpose.msra.mxu0 0
    %3684 = vmatprep.subr.bf16.mxu0 0
    %3685 = vmatpush1.bf16.xpose.msra.mxu0 0
    %3686 = vmatprep.subr.bf16.mxu0 0
    %3687 = vmatpush1.bf16.xpose.msra.mxu0 0
    %3688 = vmatprep.subr.bf16.mxu0 0
    %3689 = vmatpush1.bf16.xpose.msra.mxu0 0
    %3690 = vmatprep.subr.bf16.mxu0 0
    %3691 = vmatpush1.bf16.xpose.msra.mxu0 0
    %3692 = vmatprep.subr.bf16.mxu0 0
    %3693 = vmatpush1.bf16.xpose.msra.mxu0 0
    %3694 = vmatprep.subr.bf16.mxu0 0
    %3695 = vmatpush1.bf16.xpose.msra.mxu0 0
    %3696 = vmatprep.subr.bf16.mxu0 0
    %3697 = vmatpush1.bf16.xpose.msra.mxu0 0
    %3698 = vmatprep.subr.bf16.mxu0 0
    %3699 = vmatpush1.bf16.xpose.msra.mxu0 0
    %3700 = vmatprep.subr.bf16.mxu0 0
    %3701 = vmatpush1.bf16.xpose.msra.mxu0 0
    %3702 = vmatprep.mubr.bf16.mxu0 0
    %3703 = vmatmul.mubr.bf16.gmra.mrb[0].mxu0 %v3665
    %v3704 = vpop.f32.mrb[0].mxu0
    %v3705 = vadd.f32 0.0, %v3704
    %v3706 = vpop.f32.mrb[0].mxu0
    %v3707 = vpop.f32.mrb[0].mxu0
    %v3708 = vpop.f32.mrb[0].mxu0
    %3709 = vdwg.mxu0
    %v3711 = vsel %vm368, %v3624, 0
    %v3714 = vsel %vm368, %v3585, 0
    %3716 = vmatprep.subr.bf16.mxu0 0
    %3717 = vmatpush1.bf16.xpose.msra.mxu0 %v3714
    %3718 = vmatprep.subr.bf16.mxu0 0
    %3719 = vmatpush1.bf16.xpose.msra.mxu0 0
    %3720 = vmatprep.subr.bf16.mxu0 0
    %3721 = vmatpush1.bf16.xpose.msra.mxu0 0
    %3722 = vmatprep.subr.bf16.mxu0 0
    %3723 = vmatpush1.bf16.xpose.msra.mxu0 0
    %3724 = vmatprep.subr.bf16.mxu0 0
    %3725 = vmatpush1.bf16.xpose.msra.mxu0 0
    %3726 = vmatprep.subr.bf16.mxu0 0
    %3727 = vmatpush1.bf16.xpose.msra.mxu0 0
    %3728 = vmatprep.subr.bf16.mxu0 0
    %3729 = vmatpush1.bf16.xpose.msra.mxu0 0
    %3730 = vmatprep.subr.bf16.mxu0 0
    %3731 = vmatpush1.bf16.xpose.msra.mxu0 0
    %3732 = vmatprep.subr.bf16.mxu0 0
    %3733 = vmatpush1.bf16.xpose.msra.mxu0 0
    %3734 = vmatprep.subr.bf16.mxu0 0
    %3735 = vmatpush1.bf16.xpose.msra.mxu0 0
    %3736 = vmatprep.subr.bf16.mxu0 0
    %3737 = vmatpush1.bf16.xpose.msra.mxu0 0
    %3738 = vmatprep.subr.bf16.mxu0 0
    %3739 = vmatpush1.bf16.xpose.msra.mxu0 0
    %3740 = vmatprep.subr.bf16.mxu0 0
    %3741 = vmatpush1.bf16.xpose.msra.mxu0 0
    %3742 = vmatprep.subr.bf16.mxu0 0
    %3743 = vmatpush1.bf16.xpose.msra.mxu0 0
    %3744 = vmatprep.subr.bf16.mxu0 0
    %3745 = vmatpush1.bf16.xpose.msra.mxu0 0
    %3746 = vmatprep.subr.bf16.mxu0 0
    %3747 = vmatpush1.bf16.xpose.msra.mxu0 0
    %3748 = vmatprep.mubr.bf16.mxu0 0
    %3749 = vmatmul.mubr.bf16.gmra.mrb[0].mxu0 %v3711
    %v3750 = vpop.f32.mrb[0].mxu0
    %v3751 = vadd.f32 0.0, %v3750
    %v3752 = vpop.f32.mrb[0].mxu0
    %v3753 = vpop.f32.mrb[0].mxu0
    %v3754 = vpop.f32.mrb[0].mxu0
    %3755 = vdwg.mxu0
    %v3757 = vsel %vm368, %v3640, 0
    %v3760 = vsel %vm368, %v3586, 0
    %3762 = vmatprep.subr.bf16.mxu0 0
    %3763 = vmatpush1.bf16.xpose.msra.mxu0 %v3760
    %3764 = vmatprep.subr.bf16.mxu0 0
    %3765 = vmatpush1.bf16.xpose.msra.mxu0 0
    %3766 = vmatprep.subr.bf16.mxu0 0
    %3767 = vmatpush1.bf16.xpose.msra.mxu0 0
    %3768 = vmatprep.subr.bf16.mxu0 0
    %3769 = vmatpush1.bf16.xpose.msra.mxu0 0
    %3770 = vmatprep.subr.bf16.mxu0 0
    %3771 = vmatpush1.bf16.xpose.msra.mxu0 0
    %3772 = vmatprep.subr.bf16.mxu0 0
    %3773 = vmatpush1.bf16.xpose.msra.mxu0 0
    %3774 = vmatprep.subr.bf16.mxu0 0
    %3775 = vmatpush1.bf16.xpose.msra.mxu0 0
    %3776 = vmatprep.subr.bf16.mxu0 0
    %3777 = vmatpush1.bf16.xpose.msra.mxu0 0
    %3778 = vmatprep.subr.bf16.mxu0 0
    %3779 = vmatpush1.bf16.xpose.msra.mxu0 0
    %3780 = vmatprep.subr.bf16.mxu0 0
    %3781 = vmatpush1.bf16.xpose.msra.mxu0 0
    %3782 = vmatprep.subr.bf16.mxu0 0
    %3783 = vmatpush1.bf16.xpose.msra.mxu0 0
    %3784 = vmatprep.subr.bf16.mxu0 0
    %3785 = vmatpush1.bf16.xpose.msra.mxu0 0
    %3786 = vmatprep.subr.bf16.mxu0 0
    %3787 = vmatpush1.bf16.xpose.msra.mxu0 0
    %3788 = vmatprep.subr.bf16.mxu0 0
    %3789 = vmatpush1.bf16.xpose.msra.mxu0 0
    %3790 = vmatprep.subr.bf16.mxu0 0
    %3791 = vmatpush1.bf16.xpose.msra.mxu0 0
    %3792 = vmatprep.subr.bf16.mxu0 0
    %3793 = vmatpush1.bf16.xpose.msra.mxu0 0
    %3794 = vmatprep.mubr.bf16.mxu0 0
    %3795 = vmatmul.mubr.bf16.gmra.mrb[0].mxu0 %v3757
    %v3796 = vpop.f32.mrb[0].mxu0
    %v3797 = vadd.f32 0.0, %v3796
    %v3798 = vpop.f32.mrb[0].mxu0
    %v3799 = vpop.f32.mrb[0].mxu0
    %v3800 = vpop.f32.mrb[0].mxu0
    %3801 = vdwg.mxu0
    %v3803 = vsel %vm368, %v3656, 0
    %v3806 = vsel %vm368, %v3587, 0
    %3808 = vmatprep.subr.bf16.mxu0 0
    %3809 = vmatpush1.bf16.xpose.msra.mxu0 %v3806
    %3810 = vmatprep.subr.bf16.mxu0 0
    %3811 = vmatpush1.bf16.xpose.msra.mxu0 0
    %3812 = vmatprep.subr.bf16.mxu0 0
    %3813 = vmatpush1.bf16.xpose.msra.mxu0 0
    %3814 = vmatprep.subr.bf16.mxu0 0
    %3815 = vmatpush1.bf16.xpose.msra.mxu0 0
    %3816 = vmatprep.subr.bf16.mxu0 0
    %3817 = vmatpush1.bf16.xpose.msra.mxu0 0
    %3818 = vmatprep.subr.bf16.mxu0 0
    %3819 = vmatpush1.bf16.xpose.msra.mxu0 0
    %3820 = vmatprep.subr.bf16.mxu0 0
    %3821 = vmatpush1.bf16.xpose.msra.mxu0 0
    %3822 = vmatprep.subr.bf16.mxu0 0
    %3823 = vmatpush1.bf16.xpose.msra.mxu0 0
    %3824 = vmatprep.subr.bf16.mxu0 0
    %3825 = vmatpush1.bf16.xpose.msra.mxu0 0
    %3826 = vmatprep.subr.bf16.mxu0 0
    %3827 = vmatpush1.bf16.xpose.msra.mxu0 0
    %3828 = vmatprep.subr.bf16.mxu0 0
    %3829 = vmatpush1.bf16.xpose.msra.mxu0 0
    %3830 = vmatprep.subr.bf16.mxu0 0
    %3831 = vmatpush1.bf16.xpose.msra.mxu0 0
    %3832 = vmatprep.subr.bf16.mxu0 0
    %3833 = vmatpush1.bf16.xpose.msra.mxu0 0
    %3834 = vmatprep.subr.bf16.mxu0 0
    %3835 = vmatpush1.bf16.xpose.msra.mxu0 0
    %3836 = vmatprep.subr.bf16.mxu0 0
    %3837 = vmatpush1.bf16.xpose.msra.mxu0 0
    %3838 = vmatprep.subr.bf16.mxu0 0
    %3839 = vmatpush1.bf16.xpose.msra.mxu0 0
    %3840 = vmatprep.mubr.bf16.mxu0 0
    %3841 = vmatmul.mubr.bf16.gmra.mrb[0].mxu0 %v3803
    %v3842 = vpop.f32.mrb[0].mxu0
    %v3843 = vadd.f32 0.0, %v3842
    %v3844 = vpop.f32.mrb[0].mxu0
    %v3845 = vpop.f32.mrb[0].mxu0
    %v3846 = vpop.f32.mrb[0].mxu0
    %3847 = vdwg.mxu0
    %3848 = vxpose.xlu0.b32.start [1/16] %v3705, 128
    %3849 = vxpose.xlu0.b32.cont [2/16] 0.0, 128
    %3850 = vxpose.xlu0.b32.cont [3/16] 0.0, 128
    %3851 = vxpose.xlu0.b32.cont [4/16] 0.0, 128
    %3852 = vxpose.xlu0.b32.cont [5/16] 0.0, 128
    %3853 = vxpose.xlu0.b32.cont [6/16] 0.0, 128
    %3854 = vxpose.xlu0.b32.cont [7/16] 0.0, 128
    %3855 = vxpose.xlu0.b32.cont [8/16] 0.0, 128
    %3856 = vxpose.xlu0.b32.cont [9/16] 0.0, 128
    %3857 = vxpose.xlu0.b32.cont [10/16] 0.0, 128
    %3858 = vxpose.xlu0.b32.cont [11/16] 0.0, 128
    %3859 = vxpose.xlu0.b32.cont [12/16] 0.0, 128
    %3860 = vxpose.xlu0.b32.cont [13/16] 0.0, 128
    %3861 = vxpose.xlu0.b32.cont [14/16] 0.0, 128
    %3862 = vxpose.xlu0.b32.cont [15/16] 0.0, 128
    %3863 = vxpose.xlu0.b32.end [16/16] 0.0, 128
    %v3864 = vpop.trf.xlu0
    %v3865 = vpop.trf.xlu0
    %v3866 = vpop.trf.xlu0
    %v3867 = vpop.trf.xlu0
    %v3868 = vpop.trf.xlu0
    %v3869 = vpop.trf.xlu0
    %v3870 = vpop.trf.xlu0
    %v3871 = vpop.trf.xlu0
    %v3872 = vpop.trf.xlu0
    %v3873 = vpop.trf.xlu0
    %v3874 = vpop.trf.xlu0
    %v3875 = vpop.trf.xlu0
    %v3876 = vpop.trf.xlu0
    %v3877 = vpop.trf.xlu0
    %v3878 = vpop.trf.xlu0
    %v3879 = vpop.trf.xlu0
    %3880 = vxpose.xlu0.b32.start [1/16] %v3751, 128
    %3881 = vxpose.xlu0.b32.cont [2/16] 0.0, 128
    %3882 = vxpose.xlu0.b32.cont [3/16] 0.0, 128
    %3883 = vxpose.xlu0.b32.cont [4/16] 0.0, 128
    %3884 = vxpose.xlu0.b32.cont [5/16] 0.0, 128
    %3885 = vxpose.xlu0.b32.cont [6/16] 0.0, 128
    %3886 = vxpose.xlu0.b32.cont [7/16] 0.0, 128
    %3887 = vxpose.xlu0.b32.cont [8/16] 0.0, 128
    %3888 = vxpose.xlu0.b32.cont [9/16] 0.0, 128
    %3889 = vxpose.xlu0.b32.cont [10/16] 0.0, 128
    %3890 = vxpose.xlu0.b32.cont [11/16] 0.0, 128
    %3891 = vxpose.xlu0.b32.cont [12/16] 0.0, 128
    %3892 = vxpose.xlu0.b32.cont [13/16] 0.0, 128
    %3893 = vxpose.xlu0.b32.cont [14/16] 0.0, 128
    %3894 = vxpose.xlu0.b32.cont [15/16] 0.0, 128
    %3895 = vxpose.xlu0.b32.end [16/16] 0.0, 128
    %v3896 = vpop.trf.xlu0
    %v3897 = vpop.trf.xlu0
    %v3898 = vpop.trf.xlu0
    %v3899 = vpop.trf.xlu0
    %v3900 = vpop.trf.xlu0
    %v3901 = vpop.trf.xlu0
    %v3902 = vpop.trf.xlu0
    %v3903 = vpop.trf.xlu0
    %v3904 = vpop.trf.xlu0
    %v3905 = vpop.trf.xlu0
    %v3906 = vpop.trf.xlu0
    %v3907 = vpop.trf.xlu0
    %v3908 = vpop.trf.xlu0
    %v3909 = vpop.trf.xlu0
    %v3910 = vpop.trf.xlu0
    %v3911 = vpop.trf.xlu0
    %3912 = vxpose.xlu0.b32.start [1/16] %v3797, 128
    %3913 = vxpose.xlu0.b32.cont [2/16] 0.0, 128
    %3914 = vxpose.xlu0.b32.cont [3/16] 0.0, 128
    %3915 = vxpose.xlu0.b32.cont [4/16] 0.0, 128
    %3916 = vxpose.xlu0.b32.cont [5/16] 0.0, 128
    %3917 = vxpose.xlu0.b32.cont [6/16] 0.0, 128
    %3918 = vxpose.xlu0.b32.cont [7/16] 0.0, 128
    %3919 = vxpose.xlu0.b32.cont [8/16] 0.0, 128
    %3920 = vxpose.xlu0.b32.cont [9/16] 0.0, 128
    %3921 = vxpose.xlu0.b32.cont [10/16] 0.0, 128
    %3922 = vxpose.xlu0.b32.cont [11/16] 0.0, 128
    %3923 = vxpose.xlu0.b32.cont [12/16] 0.0, 128
    %3924 = vxpose.xlu0.b32.cont [13/16] 0.0, 128
    %3925 = vxpose.xlu0.b32.cont [14/16] 0.0, 128
    %3926 = vxpose.xlu0.b32.cont [15/16] 0.0, 128
    %3927 = vxpose.xlu0.b32.end [16/16] 0.0, 128
    %v3928 = vpop.trf.xlu0
    %v3929 = vpop.trf.xlu0
    %v3930 = vpop.trf.xlu0
    %v3931 = vpop.trf.xlu0
    %v3932 = vpop.trf.xlu0
    %v3933 = vpop.trf.xlu0
    %v3934 = vpop.trf.xlu0
    %v3935 = vpop.trf.xlu0
    %v3936 = vpop.trf.xlu0
    %v3937 = vpop.trf.xlu0
    %v3938 = vpop.trf.xlu0
    %v3939 = vpop.trf.xlu0
    %v3940 = vpop.trf.xlu0
    %v3941 = vpop.trf.xlu0
    %v3942 = vpop.trf.xlu0
    %v3943 = vpop.trf.xlu0
    %3944 = vxpose.xlu0.b32.start [1/16] %v3843, 128
    %3945 = vxpose.xlu0.b32.cont [2/16] 0.0, 128
    %3946 = vxpose.xlu0.b32.cont [3/16] 0.0, 128
    %3947 = vxpose.xlu0.b32.cont [4/16] 0.0, 128
    %3948 = vxpose.xlu0.b32.cont [5/16] 0.0, 128
    %3949 = vxpose.xlu0.b32.cont [6/16] 0.0, 128
    %3950 = vxpose.xlu0.b32.cont [7/16] 0.0, 128
    %3951 = vxpose.xlu0.b32.cont [8/16] 0.0, 128
    %3952 = vxpose.xlu0.b32.cont [9/16] 0.0, 128
    %3953 = vxpose.xlu0.b32.cont [10/16] 0.0, 128
    %3954 = vxpose.xlu0.b32.cont [11/16] 0.0, 128
    %3955 = vxpose.xlu0.b32.cont [12/16] 0.0, 128
    %3956 = vxpose.xlu0.b32.cont [13/16] 0.0, 128
    %3957 = vxpose.xlu0.b32.cont [14/16] 0.0, 128
    %3958 = vxpose.xlu0.b32.cont [15/16] 0.0, 128
    %3959 = vxpose.xlu0.b32.end [16/16] 0.0, 128
    %v3960 = vpop.trf.xlu0
    %v3961 = vpop.trf.xlu0
    %v3962 = vpop.trf.xlu0
    %v3963 = vpop.trf.xlu0
    %v3964 = vpop.trf.xlu0
    %v3965 = vpop.trf.xlu0
    %v3966 = vpop.trf.xlu0
    %v3967 = vpop.trf.xlu0
    %v3968 = vpop.trf.xlu0
    %v3969 = vpop.trf.xlu0
    %v3970 = vpop.trf.xlu0
    %v3971 = vpop.trf.xlu0
    %v3972 = vpop.trf.xlu0
    %v3973 = vpop.trf.xlu0
    %v3974 = vpop.trf.xlu0
    %v3975 = vpop.trf.xlu0
    %v3976 = vcombine.low %v3864, %v3928
    %v3977 = vcombine.high %v3864, %v3928
    %v3979 = vunpack.c.l.s4 1983009808
    %v3980 = vunpack.c.0.s8 %v3979
    %v3981 = vlaneseq
    %v3982 = vshrl.u32 %v3981, 7
    %v3983 = vsub.s32 %v3980, %v3982
    %v3984 = vrot.slane %v3976, %v3983
    %v3986 = vunpack.c.l.s4 1983009808
    %v3987 = vunpack.c.0.s8 %v3986
    %v3988 = vlaneseq
    %v3989 = vshrl.u32 %v3988, 7
    %v3990 = vsub.s32 %v3987, %v3989
    %v3991 = vrot.slane %v3977, %v3990
    %v3992 = vcombine.low %v3896, %v3960
    %v3993 = vcombine.high %v3896, %v3960
    %v3995 = vunpack.c.l.s4 1983009808
    %v3996 = vunpack.c.0.s8 %v3995
    %v3997 = vlaneseq
    %v3998 = vshrl.u32 %v3997, 7
    %v3999 = vsub.s32 %v3996, %v3998
    %v4000 = vrot.slane %v3992, %v3999
    %v4002 = vunpack.c.l.s4 1983009808
    %v4003 = vunpack.c.0.s8 %v4002
    %v4004 = vlaneseq
    %v4005 = vshrl.u32 %v4004, 7
    %v4006 = vsub.s32 %v4003, %v4005
    %v4007 = vrot.slane %v3993, %v4006
    %v4008 = vcombine.low %v3984, %v4000
    %v4009 = vcombine.high %v3984, %v4000
    %v4011 = vunpack.c.l.s4 1934713408
    %v4012 = vunpack.c.0.s8 %v4011
    %v4013 = vlaneseq
    %v4014 = vshrl.u32 %v4013, 7
    %v4015 = vsub.s32 %v4012, %v4014
    %v4016 = vrot.slane %v4008, %v4015
    %v4018 = vunpack.c.l.s4 1934713408
    %v4019 = vunpack.c.0.s8 %v4018
    %v4020 = vlaneseq
    %v4021 = vshrl.u32 %v4020, 7
    %v4022 = vsub.s32 %v4019, %v4021
    %v4023 = vrot.slane %v4009, %v4022
    %v4024 = vcombine.low %v3991, %v4007
    %v4025 = vcombine.high %v3991, %v4007
    %v4027 = vunpack.c.l.s4 1934713408
    %v4028 = vunpack.c.0.s8 %v4027
    %v4029 = vlaneseq
    %v4030 = vshrl.u32 %v4029, 7
    %v4031 = vsub.s32 %v4028, %v4030
    %v4032 = vrot.slane %v4024, %v4031
    %v4034 = vunpack.c.l.s4 1934713408
    %v4035 = vunpack.c.0.s8 %v4034
    %v4036 = vlaneseq
    %v4037 = vshrl.u32 %v4036, 7
    %v4038 = vsub.s32 %v4035, %v4037
    %v4039 = vrot.slane %v4025, %v4038
    %v4040 = vcombine.high %v4016, 0.0
    %v4041 = vcombine.high %v4023, 0.0
    %v4042 = vcombine.high %v4032, 0.0
    %v4043 = vcombine.high %v4039, 0.0
    %v4044 = vcombine.low %v4016, %v4023
    %v4046 = vunpack.c.l.s4 1983009808
    %v4047 = vunpack.c.0.s8 %v4046
    %v4048 = vlaneseq
    %v4049 = vshrl.u32 %v4048, 7
    %v4050 = vsub.s32 %v4047, %v4049
    %v4051 = vrot.slane %v4044, %v4050
    %v4052 = vcombine.low %v4040, %v4041
    %v4054 = vunpack.c.l.s4 1983009808
    %v4055 = vunpack.c.0.s8 %v4054
    %v4056 = vlaneseq
    %v4057 = vshrl.u32 %v4056, 7
    %v4058 = vsub.s32 %v4055, %v4057
    %v4059 = vrot.slane %v4052, %v4058
    %v4060 = vcombine.low %v4032, %v4039
    %v4062 = vunpack.c.l.s4 1983009808
    %v4063 = vunpack.c.0.s8 %v4062
    %v4064 = vlaneseq
    %v4065 = vshrl.u32 %v4064, 7
    %v4066 = vsub.s32 %v4063, %v4065
    %v4067 = vrot.slane %v4060, %v4066
    %v4068 = vcombine.low %v4042, %v4043
    %v4070 = vunpack.c.l.s4 1983009808
    %v4071 = vunpack.c.0.s8 %v4070
    %v4072 = vlaneseq
    %v4073 = vshrl.u32 %v4072, 7
    %v4074 = vsub.s32 %v4071, %v4073
    %v4075 = vrot.slane %v4068, %v4074
    %v4076 = vcombine.low %v4051, %v4059
    %v4077 = vcombine.high %v4051, %v4059
    %v4079 = vunpack.c.l.s4 1934713408
    %v4080 = vunpack.c.0.s8 %v4079
    %v4081 = vlaneseq
    %v4082 = vshrl.u32 %v4081, 7
    %v4083 = vsub.s32 %v4080, %v4082
    %v4084 = vrot.slane %v4076, %v4083
    %v4086 = vunpack.c.l.s4 1934713408
    %v4087 = vunpack.c.0.s8 %v4086
    %v4088 = vlaneseq
    %v4089 = vshrl.u32 %v4088, 7
    %v4090 = vsub.s32 %v4087, %v4089
    %v4091 = vrot.slane %v4077, %v4090
    %v4092 = vcombine.low %v4067, %v4075
    %v4093 = vcombine.high %v4067, %v4075
    %v4095 = vunpack.c.l.s4 1934713408
    %v4096 = vunpack.c.0.s8 %v4095
    %v4097 = vlaneseq
    %v4098 = vshrl.u32 %v4097, 7
    %v4099 = vsub.s32 %v4096, %v4098
    %v4100 = vrot.slane %v4092, %v4099
    %v4102 = vunpack.c.l.s4 1934713408
    %v4103 = vunpack.c.0.s8 %v4102
    %v4104 = vlaneseq
    %v4105 = vshrl.u32 %v4104, 7
    %v4106 = vsub.s32 %v4103, %v4105
    %v4107 = vrot.slane %v4093, %v4106
    %v4108 = vcombine.low %v4084, %v4100
    %v4109 = vcombine.high %v4084, %v4100
    %v4110 = vcombine.low %v4091, %v4107
    %v4111 = vcombine.high %v4091, %v4107
    %4113 = vrot.lane.b32.xlu0 %v4109, 8
    %v4114 = vpop.permute.xlu0 %4113
    %4117 = vrot.lane.b32.xlu0 %v4110, 16
    %v4118 = vpop.permute.xlu0 %4117
    %4121 = vrot.lane.b32.xlu0 %v4111, 24
    %v4122 = vpop.permute.xlu0 %4121
    %v4124 = vsel %vm368, %v4108, %v4114
    %v4125 = vsel %vm1147, %v4124, %v4118
    %v4126 = vsel %vm1149, %v4125, %v4122
    %4127 = vst.msk [vmem:[#allocation2 + $0x8] sm:$0xff] %vm172, %v4126
    %v4128 = vld [vmem:[#allocation2] sm:$0xff]
    %v4129 = vld [vmem:[#allocation2 + $0x8] sm:$0xff]
    %v4130 = vpack.c.bf16 %v4129, %v4128
    %s4131 = scalar_lea.vmem %s8, 16
    %v4132 = vld [vmem:[%s4131] sm:$0xf]
    %v4133 = vld [vmem:[%s4131 + $0x4] sm:$0xf]
    %v4134 = vld [vmem:[%s4131 + $0x8] sm:$0xf]
    %v4135 = vld [vmem:[%s4131 + $0xc] sm:$0xf]
    %v4140 = vunpack.c.l.b16 %v4132
    %v4141 = vunpack.c.l.b16 %v4133
    %v4142 = vunpack.c.l.b16 %v4134
    %v4143 = vunpack.c.l.b16 %v4135
    %v4144 = vpack.c.b16 %v4141, %v4140
    %v4145 = vpack.c.b16 %v4143, %v4142
    %v4149 = vsel %vm172, %v4130, 0
    %4151 = vmatprep.subr.bf16.mxu0 0
    %4152 = vmatpush1.bf16.msra.mxu0 %v4144
    %4153 = vmatprep.subr.bf16.mxu0 0
    %4154 = vmatpush1.bf16.msra.mxu0 %v4145
    %4155 = vmatprep.subr.bf16.mxu0 0
    %4156 = vmatpush1.bf16.msra.mxu0 0
    %4157 = vmatprep.subr.bf16.mxu0 0
    %4158 = vmatpush1.bf16.msra.mxu0 0
    %4159 = vmatprep.subr.bf16.mxu0 0
    %4160 = vmatpush1.bf16.msra.mxu0 0
    %4161 = vmatprep.subr.bf16.mxu0 0
    %4162 = vmatpush1.bf16.msra.mxu0 0
    %4163 = vmatprep.subr.bf16.mxu0 0
    %4164 = vmatpush1.bf16.msra.mxu0 0
    %4165 = vmatprep.subr.bf16.mxu0 0
    %4166 = vmatpush1.bf16.msra.mxu0 0
    %4167 = vmatprep.subr.bf16.mxu0 0
    %4168 = vmatpush1.bf16.msra.mxu0 0
    %4169 = vmatprep.subr.bf16.mxu0 0
    %4170 = vmatpush1.bf16.msra.mxu0 0
    %4171 = vmatprep.subr.bf16.mxu0 0
    %4172 = vmatpush1.bf16.msra.mxu0 0
    %4173 = vmatprep.subr.bf16.mxu0 0
    %4174 = vmatpush1.bf16.msra.mxu0 0
    %4175 = vmatprep.subr.bf16.mxu0 0
    %4176 = vmatpush1.bf16.msra.mxu0 0
    %4177 = vmatprep.subr.bf16.mxu0 0
    %4178 = vmatpush1.bf16.msra.mxu0 0
    %4179 = vmatprep.subr.bf16.mxu0 0
    %4180 = vmatpush1.bf16.msra.mxu0 0
    %4181 = vmatprep.subr.bf16.mxu0 0
    %4182 = vmatpush1.bf16.msra.mxu0 0
    %4183 = vmatprep.mubr.bf16.mxu0 0
    %4184 = vmatmul.mubr.bf16.gmra.mrb[0].mxu0 %v4149
    %v4185 = vpop.f32.mrb[0].mxu0
    %v4186 = vadd.f32 0.0, %v4185
    %v4187 = vpop.f32.mrb[0].mxu0
    %v4188 = vpop.f32.mrb[0].mxu0
    %v4189 = vadd.f32 0.0, %v4188
    %v4190 = vpop.f32.mrb[0].mxu0
    %4191 = vdwg.mxu0
    %v4192 = vadd.f32 %v2286, %v4186
    %v4193 = vadd.f32 %v2287, %v4189
    %s4194 = scalar_lea.vmem %s9, 1
    %v4195 = vld [vmem:[%s4194] sm:$0x1]
    %v4197 = vlaneseq
    %v4198 = vshrl.u32 %v4197, 7
    %v4199 = vsub.s32 0, %v4198
    %v4200 = vrot.slane %v4195, %v4199
    %v4202 = vadd.f32 %v4192, %v4200
    %v4203 = vadd.f32 %v4193, %v4200
    %s4204 = scalar_lea.vmem %s10, 1
    %v4205 = vld [vmem:[%s4204] sm:$0x1]
    %s4206 = scalar_lea.vmem %s11, 1
    %v4207 = vld [vmem:[%s4206] sm:$0x1]
    %v4208 = vsel %vm172, %v4202, 0.0
    %4209 = vadd.xlane.f32.xlu0 %v4208
    %v4210 = vpop.xlane.xlu0 %4209
    %v4211 = vsel %vm172, %v4203, 0.0
    %4212 = vadd.xlane.f32.xlu0 %v4211
    %v4213 = vpop.xlane.xlu0 %4212
    %v4214 = vmul.f32 %v4210, %v179
    %v4215 = vmul.f32 %v4213, %v179
    %v4216 = vsub.f32 %v4202, %v4214
    %v4217 = vsub.f32 %v4203, %v4215
    %v4218 = vmul.f32 %v4216, %v4216
    %v4219 = vmul.f32 %v4217, %v4217
    %v4220 = vsel %vm172, %v4218, 0.0
    %4221 = vadd.xlane.f32.xlu0 %v4220
    %v4222 = vpop.xlane.xlu0 %4221
    %v4223 = vsel %vm172, %v4219, 0.0
    %4224 = vadd.xlane.f32.xlu0 %v4223
    %v4225 = vpop.xlane.xlu0 %4224
    %v4226 = vmul.f32 %v4222, %v179
    %v4227 = vmul.f32 %v4225, %v179
    %v4228 = vadd.f32 %v4226, 1e-05
    %v4229 = vadd.f32 %v4227, 1e-05
    %v4230 = vrsqrt.pop %v4228
    %v4231 = vrsqrt.pop %v4229
    %v4232 = vmul.f32 %v4216, %v4230
    %v4233 = vmul.f32 %v4217, %v4231
    %v4235 = vlaneseq
    %v4236 = vshrl.u32 %v4235, 7
    %v4237 = vsub.s32 0, %v4236
    %v4238 = vrot.slane %v4205, %v4237
    %v4240 = vmul.f32 %v4232, %v4238
    %v4241 = vmul.f32 %v4233, %v4238
    %v4243 = vlaneseq
    %v4244 = vshrl.u32 %v4243, 7
    %v4245 = vsub.s32 0, %v4244
    %v4246 = vrot.slane %v4207, %v4245
    %v4248 = vadd.f32 %v4240, %v4246
    %v4249 = vadd.f32 %v4241, %v4246
    %v4250 = vpack.c.bf16 %v4249, %v4248
    %s4251 = scalar_lea.vmem %s12, 16
    %v4252 = vld [vmem:[%s4251] sm:$0xf]
    %v4253 = vld [vmem:[%s4251 + $0x4] sm:$0xf]
    %v4254 = vld [vmem:[%s4251 + $0x8] sm:$0xf]
    %v4255 = vld [vmem:[%s4251 + $0xc] sm:$0xf]
    %s4256 = scalar_lea.vmem %s13, 1
    %v4257 = vld [vmem:[%s4256] sm:$0x1]
    %v4259 = vlaneseq
    %v4260 = vshrl.u32 %v4259, 7
    %v4261 = vsub.s32 0, %v4260
    %v4262 = vrot.slane %v4257, %v4261
    %v4268 = vunpack.c.l.b16 %v4252
    %v4269 = vunpack.c.l.b16 %v4253
    %v4270 = vunpack.c.l.b16 %v4254
    %v4271 = vunpack.c.l.b16 %v4255
    %v4272 = vpack.c.b16 %v4269, %v4268
    %v4273 = vpack.c.b16 %v4271, %v4270
    %v4277 = vsel %vm172, %v4250, 0
    %4279 = vmatprep.subr.bf16.mxu0 0
    %4280 = vmatpush1.bf16.msra.mxu0 %v4272
    %4281 = vmatprep.subr.bf16.mxu0 0
    %4282 = vmatpush1.bf16.msra.mxu0 %v4273
    %4283 = vmatprep.subr.bf16.mxu0 0
    %4284 = vmatpush1.bf16.msra.mxu0 0
    %4285 = vmatprep.subr.bf16.mxu0 0
    %4286 = vmatpush1.bf16.msra.mxu0 0
    %4287 = vmatprep.subr.bf16.mxu0 0
    %4288 = vmatpush1.bf16.msra.mxu0 0
    %4289 = vmatprep.subr.bf16.mxu0 0
    %4290 = vmatpush1.bf16.msra.mxu0 0
    %4291 = vmatprep.subr.bf16.mxu0 0
    %4292 = vmatpush1.bf16.msra.mxu0 0
    %4293 = vmatprep.subr.bf16.mxu0 0
    %4294 = vmatpush1.bf16.msra.mxu0 0
    %4295 = vmatprep.subr.bf16.mxu0 0
    %4296 = vmatpush1.bf16.msra.mxu0 0
    %4297 = vmatprep.subr.bf16.mxu0 0
    %4298 = vmatpush1.bf16.msra.mxu0 0
    %4299 = vmatprep.subr.bf16.mxu0 0
    %4300 = vmatpush1.bf16.msra.mxu0 0
    %4301 = vmatprep.subr.bf16.mxu0 0
    %4302 = vmatpush1.bf16.msra.mxu0 0
    %4303 = vmatprep.subr.bf16.mxu0 0
    %4304 = vmatpush1.bf16.msra.mxu0 0
    %4305 = vmatprep.subr.bf16.mxu0 0
    %4306 = vmatpush1.bf16.msra.mxu0 0
    %4307 = vmatprep.subr.bf16.mxu0 0
    %4308 = vmatpush1.bf16.msra.mxu0 0
    %4309 = vmatprep.subr.bf16.mxu0 0
    %4310 = vmatpush1.bf16.msra.mxu0 0
    %4311 = vmatprep.mubr.bf16.mxu0 0
    %4312 = vmatmul.mubr.bf16.gmra.mrb[0].mxu0 %v4277
    %v4313 = vpop.f32.mrb[0].mxu0
    %v4314 = vadd.f32 %v4262, %v4313
    %v4315 = vpop.f32.mrb[0].mxu0
    %v4316 = vpop.f32.mrb[0].mxu0
    %v4317 = vadd.f32 %v4262, %v4316
    %v4318 = vpop.f32.mrb[0].mxu0
    %4319 = vdwg.mxu0
    %v4320 = vmax.f32 %v4314, 0.0
    %v4321 = vmax.f32 %v4317, 0.0
    %v4322 = vpack.c.bf16 %v4321, %v4320
    %s4323 = scalar_lea.vmem %s14, 32
    %v4324 = vld [vmem:[%s4323] sm:$0xf]
    %v4325 = vld [vmem:[%s4323 + $0x4] sm:$0xf]
    %v4326 = vld [vmem:[%s4323 + $0x8] sm:$0xf]
    %v4327 = vld [vmem:[%s4323 + $0xc] sm:$0xf]
    %v4328 = vld [vmem:[%s4323 + $0x10] sm:$0xf]
    %v4329 = vld [vmem:[%s4323 + $0x14] sm:$0xf]
    %v4330 = vld [vmem:[%s4323 + $0x18] sm:$0xf]
    %v4331 = vld [vmem:[%s4323 + $0x1c] sm:$0xf]
    %v4340 = vunpack.c.l.b16 %v4324
    %v4341 = vunpack.c.l.b16 %v4325
    %v4342 = vunpack.c.l.b16 %v4326
    %v4343 = vunpack.c.l.b16 %v4327
    %v4344 = vunpack.c.l.b16 %v4328
    %v4345 = vunpack.c.l.b16 %v4329
    %v4346 = vunpack.c.l.b16 %v4330
    %v4347 = vunpack.c.l.b16 %v4331
    %v4348 = vpack.c.b16 %v4341, %v4340
    %v4349 = vpack.c.b16 %v4343, %v4342
    %v4350 = vpack.c.b16 %v4345, %v4344
    %v4351 = vpack.c.b16 %v4347, %v4346
    %v4357 = vsel %vm116, %v4322, 0
    %4359 = vmatprep.subr.bf16.mxu0 0
    %4360 = vmatpush1.bf16.msra.mxu0 %v4348
    %4361 = vmatprep.subr.bf16.mxu0 0
    %4362 = vmatpush1.bf16.msra.mxu0 %v4349
    %4363 = vmatprep.subr.bf16.mxu0 0
    %4364 = vmatpush1.bf16.msra.mxu0 %v4350
    %4365 = vmatprep.subr.bf16.mxu0 0
    %4366 = vmatpush1.bf16.msra.mxu0 %v4351
    %4367 = vmatprep.subr.bf16.mxu0 0
    %4368 = vmatpush1.bf16.msra.mxu0 0
    %4369 = vmatprep.subr.bf16.mxu0 0
    %4370 = vmatpush1.bf16.msra.mxu0 0
    %4371 = vmatprep.subr.bf16.mxu0 0
    %4372 = vmatpush1.bf16.msra.mxu0 0
    %4373 = vmatprep.subr.bf16.mxu0 0
    %4374 = vmatpush1.bf16.msra.mxu0 0
    %4375 = vmatprep.subr.bf16.mxu0 0
    %4376 = vmatpush1.bf16.msra.mxu0 0
    %4377 = vmatprep.subr.bf16.mxu0 0
    %4378 = vmatpush1.bf16.msra.mxu0 0
    %4379 = vmatprep.subr.bf16.mxu0 0
    %4380 = vmatpush1.bf16.msra.mxu0 0
    %4381 = vmatprep.subr.bf16.mxu0 0
    %4382 = vmatpush1.bf16.msra.mxu0 0
    %4383 = vmatprep.subr.bf16.mxu0 0
    %4384 = vmatpush1.bf16.msra.mxu0 0
    %4385 = vmatprep.subr.bf16.mxu0 0
    %4386 = vmatpush1.bf16.msra.mxu0 0
    %4387 = vmatprep.subr.bf16.mxu0 0
    %4388 = vmatpush1.bf16.msra.mxu0 0
    %4389 = vmatprep.subr.bf16.mxu0 0
    %4390 = vmatpush1.bf16.msra.mxu0 0
    %4391 = vmatprep.mubr.bf16.mxu0 0
    %4392 = vmatmul.mubr.bf16.gmra.mrb[0].mxu0 %v4357
    %v4393 = vpop.f32.mrb[0].mxu0
    %v4394 = vadd.f32 0.0, %v4393
    %v4395 = vpop.f32.mrb[0].mxu0
    %v4396 = vpop.f32.mrb[0].mxu0
    %v4397 = vadd.f32 0.0, %v4396
    %v4398 = vpop.f32.mrb[0].mxu0
    %4399 = vdwg.mxu0
    %v4400 = vadd.f32 %v4202, %v4394
    %v4401 = vadd.f32 %v4203, %v4397
    %s4402 = scalar_lea.vmem %s15, 1
    %v4403 = vld [vmem:[%s4402] sm:$0x1]
    %v4405 = vlaneseq
    %v4406 = vshrl.u32 %v4405, 7
    %v4407 = vsub.s32 0, %v4406
    %v4408 = vrot.slane %v4403, %v4407
    %v4410 = vadd.f32 %v4400, %v4408
    %v4411 = vadd.f32 %v4401, %v4408
    %v4412 = vld [vmem:[%s16] sm:$0x1]
    %v4413 = vld [vmem:[%s17] sm:$0x1]
    %v4414 = vsel %vm172, %v4410, 0.0
    %4415 = vadd.xlane.f32.xlu0 %v4414
    %v4416 = vpop.xlane.xlu0 %4415
    %v4417 = vsel %vm172, %v4411, 0.0
    %4418 = vadd.xlane.f32.xlu0 %v4417
    %v4419 = vpop.xlane.xlu0 %4418
    %v4420 = vmul.f32 %v4416, %v179
    %v4421 = vmul.f32 %v4419, %v179
    %v4422 = vsub.f32 %v4410, %v4420
    %v4423 = vsub.f32 %v4411, %v4421
    %v4424 = vmul.f32 %v4422, %v4422
    %v4425 = vmul.f32 %v4423, %v4423
    %v4426 = vsel %vm172, %v4424, 0.0
    %4427 = vadd.xlane.f32.xlu0 %v4426
    %v4428 = vpop.xlane.xlu0 %4427
    %v4429 = vsel %vm172, %v4425, 0.0
    %4430 = vadd.xlane.f32.xlu0 %v4429
    %v4431 = vpop.xlane.xlu0 %4430
    %v4432 = vmul.f32 %v4428, %v179
    %v4433 = vmul.f32 %v4431, %v179
    %v4434 = vadd.f32 %v4432, 1e-05
    %v4435 = vadd.f32 %v4433, 1e-05
    %v4436 = vrsqrt.pop %v4434
    %v4437 = vrsqrt.pop %v4435
    %v4438 = vmul.f32 %v4422, %v4436
    %v4439 = vmul.f32 %v4423, %v4437
    %v4441 = vlaneseq
    %v4442 = vshrl.u32 %v4441, 7
    %v4443 = vsub.s32 0, %v4442
    %v4444 = vrot.slane %v4412, %v4443
    %v4446 = vmul.f32 %v4438, %v4444
    %v4447 = vmul.f32 %v4439, %v4444
    %v4449 = vlaneseq
    %v4450 = vshrl.u32 %v4449, 7
    %v4451 = vsub.s32 0, %v4450
    %v4452 = vrot.slane %v4413, %v4451
    %v4454 = vadd.f32 %v4446, %v4452
    %v4455 = vadd.f32 %v4447, %v4452
    %v4456 = vpack.c.bf16 %v4455, %v4454
    %v4457 = vld [vmem:[%s18] sm:$0xf]
    %v4458 = vld [vmem:[%s18 + $0x4] sm:$0xf]
    %v4459 = vld [vmem:[%s18 + $0x8] sm:$0xf]
    %v4460 = vld [vmem:[%s18 + $0xc] sm:$0xf]
    %v4461 = vld [vmem:[%s19] sm:$0x1]
    %v4463 = vlaneseq
    %v4464 = vshrl.u32 %v4463, 7
    %v4465 = vsub.s32 0, %v4464
    %v4466 = vrot.slane %v4461, %v4465
    %v4472 = vunpack.c.l.b16 %v4457
    %v4473 = vunpack.c.l.b16 %v4458
    %v4474 = vunpack.c.l.b16 %v4459
    %v4475 = vunpack.c.l.b16 %v4460
    %v4476 = vpack.c.b16 %v4473, %v4472
    %v4477 = vpack.c.b16 %v4475, %v4474
    %v4481 = vsel %vm172, %v4456, 0
    %4483 = vmatprep.subr.bf16.mxu0 0
    %4484 = vmatpush1.bf16.msra.mxu0 %v4476
    %4485 = vmatprep.subr.bf16.mxu0 0
    %4486 = vmatpush1.bf16.msra.mxu0 %v4477
    %4487 = vmatprep.subr.bf16.mxu0 0
    %4488 = vmatpush1.bf16.msra.mxu0 0
    %4489 = vmatprep.subr.bf16.mxu0 0
    %4490 = vmatpush1.bf16.msra.mxu0 0
    %4491 = vmatprep.subr.bf16.mxu0 0
    %4492 = vmatpush1.bf16.msra.mxu0 0
    %4493 = vmatprep.subr.bf16.mxu0 0
    %4494 = vmatpush1.bf16.msra.mxu0 0
    %4495 = vmatprep.subr.bf16.mxu0 0
    %4496 = vmatpush1.bf16.msra.mxu0 0
    %4497 = vmatprep.subr.bf16.mxu0 0
    %4498 = vmatpush1.bf16.msra.mxu0 0
    %4499 = vmatprep.subr.bf16.mxu0 0
    %4500 = vmatpush1.bf16.msra.mxu0 0
    %4501 = vmatprep.subr.bf16.mxu0 0
    %4502 = vmatpush1.bf16.msra.mxu0 0
    %4503 = vmatprep.subr.bf16.mxu0 0
    %4504 = vmatpush1.bf16.msra.mxu0 0
    %4505 = vmatprep.subr.bf16.mxu0 0
    %4506 = vmatpush1.bf16.msra.mxu0 0
    %4507 = vmatprep.subr.bf16.mxu0 0
    %4508 = vmatpush1.bf16.msra.mxu0 0
    %4509 = vmatprep.subr.bf16.mxu0 0
    %4510 = vmatpush1.bf16.msra.mxu0 0
    %4511 = vmatprep.subr.bf16.mxu0 0
    %4512 = vmatpush1.bf16.msra.mxu0 0
    %4513 = vmatprep.subr.bf16.mxu0 0
    %4514 = vmatpush1.bf16.msra.mxu0 0
    %4515 = vmatprep.mubr.bf16.mxu0 0
    %4516 = vmatmul.mubr.bf16.gmra.mrb[0].mxu0 %v4481
    %v4517 = vpop.f32.mrb[0].mxu0
    %v4518 = vadd.f32 %v4466, %v4517
    %v4519 = vpop.f32.mrb[0].mxu0
    %v4520 = vpop.f32.mrb[0].mxu0
    %v4521 = vadd.f32 %v4466, %v4520
    %v4522 = vpop.f32.mrb[0].mxu0
    %4523 = vdwg.mxu0
    %v4524 = vsel %vm116, %v4518, -inf
    %4525 = vmax.xlane.f32.xlu0 %v4524
    %v4526 = vpop.xlane.xlu0 %4525
    %v4527 = vsel %vm116, %v4521, -inf
    %4528 = vmax.xlane.f32.xlu0 %v4527
    %v4529 = vpop.xlane.xlu0 %4528
    %v4530 = vsub.f32 %v4518, %v4526
    %v4531 = vsub.f32 %v4521, %v4529
    %v4532 = vmul.f32 %v4530, 1.442695
    %v4533 = vpow.pop %v4532
    %v4534 = vmul.f32 %v4531, 1.442695
    %v4535 = vpow.pop %v4534
    %v4536 = vsel %vm116, %v4533, 0.0
    %4537 = vadd.xlane.f32.xlu0 %v4536
    %v4538 = vpop.xlane.xlu0 %4537
    %v4539 = vsel %vm116, %v4535, 0.0
    %4540 = vadd.xlane.f32.xlu0 %v4539
    %v4541 = vpop.xlane.xlu0 %4540
    %v4542 = vlog2.pop %v4538
    %v4543 = vmul.f32 %v4542, 0.6931472
    %v4544 = vlog2.pop %v4541
    %v4545 = vmul.f32 %v4544, 0.6931472
    %v4546 = vadd.f32 %v4526, %v4543
    %v4547 = vadd.f32 %v4529, %v4545
    %v4548 = vld [vmem:[%s1] sm:$0xff]
    %v4549 = vld [vmem:[%s1 + $0x8] sm:$0xff]
    %4550 = vset.pattern.permute.xlu0 0
    %4551 = vperm.xlu0 %4550, %v4548
    %v4552 = vpop.permute.xlu0 %4551
    %4553 = vset.pattern.permute.xlu0 0
    %4554 = vperm.xlu0 %4553, %v4549
    %v4555 = vpop.permute.xlu0 %4554
    %vm4556 = vcmp.eq.s32.totalorder %v70, %v4552
    %vm4557 = vcmp.eq.s32.totalorder %v70, %v4555
    %v4558 = vsel %vm4556, 1, 0
    %v4559 = vsel %vm4557, 1, 0
    %v4560 = vcvt.s32.f32 %v4558
    %v4561 = vcvt.s32.f32 %v4559
    %v4562 = vmul.f32 %v4518, %v4560
    %v4563 = vmul.f32 %v4521, %v4561
    %v4564 = vsel %vm116, %v4562, 0.0
    %4565 = vadd.xlane.f32.xlu0 %v4564
    %v4566 = vpop.xlane.xlu0 %4565
    %v4567 = vsel %vm116, %v4563, 0.0
    %4568 = vadd.xlane.f32.xlu0 %v4567
    %v4569 = vpop.xlane.xlu0 %4568
    %v4570 = vsub.f32 %v4546, %v4566
    %v4571 = vsub.f32 %v4547, %v4569
    %v4574 = vlaneseq
    %v4575 = vshrl.u32 %v4574, 7
    %v4576 = vsub.s32 %v70, %v4575
    %v4577 = vrot.slane %v4570, %v4576
    %v4578 = vlaneseq
    %v4579 = vshrl.u32 %v4578, 7
    %v4580 = vsub.s32 %v70, %v4579
    %v4581 = vrot.slane %v4571, %v4580
    %vm4582 = vcmask 1041409
    %v4583 = vsel %vm4582, %v4581, %v4577
    %vm4585 = vcmask 58368
    %4586 = vst.msk [vmem:[#allocation3] sm:$0x3] %vm4585, %v4583
    // Predicated region
    $region82: #{transformer_forward.1} parent=1 // pred_check
      _
    $region83: #{transformer_forward.1} parent=1 // pred_check_branch
      %4588 = sbr.rel (0) target = $region85
    $region84: #{transformer_forward.1} parent=1 // pred_region
      %s4590 = ssub.s32 32, 32
      %4591 = vsyncadd [#allocation4], %s4590
      %s4593 = sshll.u32 [#allocation3], 4
      %s4594 = int_to_ptr.vmem [resolvable:$true] %s4593
      %4596 = dma.vmem_to_hbm [thread:$0]  %s4594, 32, %s20, [#allocation4]
    $region85: #{transformer_forward.1} parent=1 // pred_fallthru
      _
    // Predicated region
    $region86: #{transformer_forward.1} parent=1 // pred_check
      _
    $region87: #{transformer_forward.1} parent=1 // pred_check_branch
      %4598 = sbr.rel (0) target = $region89
    $region88: #{transformer_forward.1} parent=1 // pred_region
      %4599 = dma.done [#allocation4], 32
    $region89: #{transformer_forward.1} parent=1 // pred_fallthru
      _
    %4600 = vsyncpa [#allocation4], 1

</llo_original>
